<compile_context>
chip_gen: v6e
topology: v6e:2x2x1
jax: 0.10.0
libtpu: 0.0.40
codegen_flags: <defaults>
</compile_context>

<pallas_src>
import jax
import jax.numpy as jnp
import numpy as np
from jax import lax
from jax.experimental import pallas as pl
from jax.experimental.pallas import tpu as pltpu


# ----------------------------------------------------------------------------
# Pallas kernel: one chunk of Tc LSTM time-steps per grid iteration.
# Only the h @ W_hh recurrence is on the serial path; xp_ref already holds
# x @ W_ih^T + bias for every step of the chunk.
# ----------------------------------------------------------------------------
def _lstm_chunk_kernel(xp_ref, m_ref, h0_ref, c0_ref, whh_ref,
                       out_ref, hN_ref, cN_ref,
                       h_sc, c_sc):
    chunk = pl.program_id(0)
    Tc = xp_ref.shape[0]
    H = h_sc.shape[-1]

    # Load the initial hidden state on the first chunk only.
    @pl.when(chunk == 0)
    def _():
        h_sc[...] = h0_ref[...]
        c_sc[...] = c0_ref[...]

    w_hh = whh_ref[...]          # (H, 4H) -- loaded once per chunk

    def step(i, carry):
        h, c = carry
        xg = xp_ref[i]           # (B, 4H) precomputed x @ W_ih^T + bias
        v = m_ref[i]             # (B, 1)  validity mask in {0, 1}

        gates = xg + jnp.dot(h, w_hh, preferred_element_type=jnp.float32)

        i_g = jax.nn.sigmoid(gates[:, 0 * H:1 * H])
        f_g = jax.nn.sigmoid(gates[:, 1 * H:2 * H])
        g_g = jnp.tanh(gates[:, 2 * H:3 * H])
        o_g = jax.nn.sigmoid(gates[:, 3 * H:4 * H])

        c_new = f_g * c + i_g * g_g
        h_new = o_g * jnp.tanh(c_new)

        # Packed-sequence semantics: freeze state / zero output when invalid.
        h_next = h + v * (h_new - h)
        c_next = c + v * (c_new - c)
        out_ref[i] = v * h_new
        return h_next, c_next

    h_fin, c_fin = lax.fori_loop(0, Tc, step, (h_sc[...], c_sc[...]),
                                 unroll=True)
    h_sc[...] = h_fin
    c_sc[...] = c_fin

    # Emit the final (last-valid-step) hidden state on the last chunk.
    @pl.when(chunk == pl.num_programs(0) - 1)
    def _():
        hN_ref[...] = h_fin
        cN_ref[...] = c_fin


def _make_lstm_call(T_pad, B_pad, H, Tc, n_chunks, single_buffer_consts):
    # Grid-invariant operands never change block index -> single-buffer them.
    const_kwargs = ({"pipeline_mode": pl.Buffered(1)}
                    if single_buffer_consts else {})

    in_specs = [
        pl.BlockSpec((Tc, B_pad, 4 * H), lambda c: (c, 0, 0)),        # x_proj
        pl.BlockSpec((Tc, B_pad, 1), lambda c: (c, 0, 0)),            # valid mask
        pl.BlockSpec((B_pad, H), lambda c: (0, 0), **const_kwargs),   # h0
        pl.BlockSpec((B_pad, H), lambda c: (0, 0), **const_kwargs),   # c0
        pl.BlockSpec((H, 4 * H), lambda c: (0, 0), **const_kwargs),   # W_hh^T
    ]
    out_specs = [
        pl.BlockSpec((Tc, B_pad, H), lambda c: (c, 0, 0)),            # outputs
        pl.BlockSpec((B_pad, H), lambda c: (0, 0)),                   # h_N
        pl.BlockSpec((B_pad, H), lambda c: (0, 0)),                   # c_N
    ]
    grid_spec = pltpu.PrefetchScalarGridSpec(
        num_scalar_prefetch=0,
        grid=(n_chunks,),
        in_specs=in_specs,
        out_specs=out_specs,
        scratch_shapes=[
            pltpu.VMEM((B_pad, H), jnp.float32),   # h carry
            pltpu.VMEM((B_pad, H), jnp.float32),   # c carry
        ],
    )
    out_shapes = (
        jax.ShapeDtypeStruct((T_pad, B_pad, H), jnp.float32),
        jax.ShapeDtypeStruct((B_pad, H), jnp.float32),
        jax.ShapeDtypeStruct((B_pad, H), jnp.float32),
    )
    return pl.pallas_call(
        _lstm_chunk_kernel,
        out_shape=out_shapes,
        grid_spec=grid_spec,
        compiler_params=pltpu.CompilerParams(
            dimension_semantics=("arbitrary",)),   # serial recurrence over time
    )


def lstm_pallas(x_proj, mask, h0, c0, w_hh_t, *, chunk):
    """x_proj: (T_pad, B_pad, 4H) f32 (= x @ W_ih^T + bias);
    mask: (T_pad, B_pad, 1) f32 {0,1}; h0/c0: (B_pad, H) f32; w_hh_t: (H, 4H)."""
    T_pad, B_pad, G = x_proj.shape
    H = w_hh_t.shape[0]
    assert G == 4 * H and T_pad % chunk == 0
    n_chunks = T_pad // chunk
    args = (x_proj, mask, h0, c0, w_hh_t)
    try:
        fn = _make_lstm_call(T_pad, B_pad, H, chunk, n_chunks, True)
        return jax.block_until_ready(fn(*args))
    except Exception:
        # pl.Buffered(1) single-buffering unavailable on this build: fall back
        # to default double-buffered constant blocks (they are tiny anyway).
        fn = _make_lstm_call(T_pad, B_pad, H, chunk, n_chunks, False)
        return jax.block_until_ready(fn(*args))


# ----------------------------------------------------------------------------
# Encoder wrapper (mirrors Encoder.forward for lstm, n_layers=1, bidir=False).
# ----------------------------------------------------------------------------
def encoder_forward(params, inputs, input_lengths, hidden, *, time_chunk=8):
    """inputs: (B, T) int32 token ids; input_lengths: (B,) list/array;
    hidden: tuple (h, c), each (B, n_layers*n_dir, H).
    Returns (outputs, (h, c)) with PyTorch shapes:
      outputs (B, T, H*n_dir), h/c (B, n_layers, H*n_dir)."""
    emb_table, w_ih_t, w_hh_t, bias = params
    B, T = inputs.shape
    E = emb_table.shape[1]
    H = w_hh_t.shape[0]

    lengths = jnp.asarray(input_lengths, jnp.int32).reshape(B)

    # Pad batch to the f32 sublane minimum (8) and time to a chunk multiple.
    B_pad = max(8, -(-B // 8) * 8)
    Tc = max(1, min(time_chunk, T))
    T_pad = -(-T // Tc) * Tc
    n_pad_b = B_pad - B

    ids_tb = jnp.transpose(inputs.astype(jnp.int32))            # (T, B), tiny
    ids_tb = jnp.pad(ids_tb, ((0, T_pad - T), (0, n_pad_b)))
    lengths_p = jnp.pad(lengths, (0, n_pad_b))                  # padded rows: len 0

    # Embedding lookup (XLA gather glue) + dropout (identity in eval mode).
    emb = jnp.take(emb_table, ids_tb, axis=0).astype(jnp.float32)  # (T_pad,B_pad,E)

    # Hoisted input projection: one big (T*B, E) @ (E, 4H) matmul + bias.
    x_proj = (jnp.dot(emb.reshape(T_pad * B_pad, E), w_ih_t,
                      preferred_element_type=jnp.float32)
              + bias).reshape(T_pad, B_pad, 4 * H)

    # Per-(t, b) validity mask, precomputed once (no per-step length compares).
    mask = (jnp.arange(T_pad, dtype=jnp.int32)[:, None]
            < lengths_p[None, :]).astype(jnp.float32)[:, :, None]  # (T_pad,B_pad,1)

    h0 = jnp.pad(hidden[0].reshape(B, H).astype(jnp.float32), ((0, n_pad_b), (0, 0)))
    c0 = jnp.pad(hidden[1].reshape(B, H).astype(jnp.float32), ((0, n_pad_b), (0, 0)))

    out_tbh, hN, cN = lstm_pallas(x_proj, mask, h0, c0, w_hh_t, chunk=Tc)

    outputs = jnp.transpose(out_tbh[:T, :B, :], (1, 0, 2))      # (B, T, H)
    h_out = hN[:B].reshape(B, 1, H)                             # (B, n_layers, H)
    c_out = cN[:B].reshape(B, 1, H)
    return outputs, (h_out, c_out)


# ----------------------------------------------------------------------------
# Pure-JAX reference (lax.scan) for a correctness check.
# ----------------------------------------------------------------------------
def reference_lstm(x_tbe, lengths, h0, c0, w_ih_t, w_hh_t, bias):
    T = x_tbe.shape[0]
    H = h0.shape[-1]

    def step(carry, inp):
        h, c = carry
        x_t, t = inp
        gates = x_t @ w_ih_t + h @ w_hh_t + bias
        i_g = jax.nn.sigmoid(gates[:, 0 * H:1 * H])
        f_g = jax.nn.sigmoid(gates[:, 1 * H:2 * H])
        g_g = jnp.tanh(gates[:, 2 * H:3 * H])
        o_g = jax.nn.sigmoid(gates[:, 3 * H:4 * H])
        c_new = f_g * c + i_g * g_g
        h_new = o_g * jnp.tanh(c_new)
        valid = (t < lengths.reshape(-1))[:, None]
        h2 = jnp.where(valid, h_new, h)
        c2 = jnp.where(valid, c_new, c)
        out_t = jnp.where(valid, h_new, 0.0)
        return (h2, c2), out_t

    (hN, cN), outs = lax.scan(step, (h0, c0),
                              (x_tbe, jnp.arange(T, dtype=jnp.int32)))
    return outs, hN, cN


if __name__ == "__main__":
    # Small shapes consistent with the module.
    vocab_size = 50
    embedding_dim = 16
    hidden_dim = 32
    n_layers = 1
    n_dir = 1
    batch = 4
    seq_len = 10          # exercises both chunking (Tc=8) and time padding

    key = jax.random.PRNGKey(0)
    k_emb, k_wih, k_whh, k_b, k_inp = jax.random.split(key, 5)

    # Deterministic parameter init (nn.Embedding + nn.LSTM single layer).
    emb_table = jax.random.normal(k_emb, (vocab_size, embedding_dim), jnp.float32)
    w_ih = jax.random.normal(k_wih, (4 * hidden_dim, embedding_dim), jnp.float32) * 0.1
    w_hh = jax.random.normal(k_whh, (4 * hidden_dim, hidden_dim), jnp.float32) * 0.1
    b_ih_hh = jax.random.normal(k_b, (4 * hidden_dim,), jnp.float32) * 0.1  # b_ih + b_hh

    params = (
        emb_table,
        jnp.transpose(w_ih),                      # (E, 4H)
        jnp.transpose(w_hh),                      # (H, 4H)
        b_ih_hh.reshape(1, 4 * hidden_dim),       # (1, 4H)
    )

    # Inputs: token ids, descending lengths (pack_padded_sequence convention),
    # and zero-initialized hidden state (init_hidden).
    inputs = jax.random.randint(k_inp, (batch, seq_len), 0, vocab_size, jnp.int32)
    input_lengths = [10, 7, 5, 3]
    hidden = (jnp.zeros((batch, n_layers * n_dir, hidden_dim), jnp.float32),
              jnp.zeros((batch, n_layers * n_dir, hidden_dim), jnp.float32))

    outputs, (h_out, c_out) = jax.block_until_ready(
        encoder_forward(params, inputs, input_lengths, hidden))

    # Shape contract from Encoder.forward.
    assert outputs.shape == (batch, seq_len, hidden_dim * n_dir)
    assert h_out.shape == (batch, n_layers, hidden_dim * n_dir)
    assert c_out.shape == (batch, n_layers, hidden_dim * n_dir)

    # Numerical check against a pure-JAX lax.scan reference (unpadded).
    x_tbe = jnp.transpose(jnp.take(emb_table, inputs, axis=0), (1, 0, 2))
    lengths_arr = jnp.asarray(input_lengths, jnp.int32).reshape(batch, 1)
    ref_outs, ref_h, ref_c = reference_lstm(
        x_tbe, lengths_arr,
        hidden[0].reshape(batch, hidden_dim), hidden[1].reshape(batch, hidden_dim),
        params[1], params[2], params[3])
    np.testing.assert_allclose(np.asarray(outputs),
                               np.asarray(jnp.transpose(ref_outs, (1, 0, 2))),
                               rtol=1e-5, atol=1e-5)
    np.testing.assert_allclose(np.asarray(h_out.reshape(batch, hidden_dim)),
                               np.asarray(ref_h), rtol=1e-5, atol=1e-5)
    np.testing.assert_allclose(np.asarray(c_out.reshape(batch, hidden_dim)),
                               np.asarray(ref_c), rtol=1e-5, atol=1e-5)

    print("KERNEL_OK")
</pallas_src>

<mosaic_0001>
module attributes {stable_mosaic.version = 11 : i64} {
  func.func @_lstm_chunk_kernel(%arg0: i32, %arg1: memref<8x8x128xf32, #tpu.memory_space<vmem>>, %arg2: memref<8x8x1xf32, #tpu.memory_space<vmem>>, %arg3: memref<8x32xf32, #tpu.memory_space<vmem>>, %arg4: memref<8x32xf32, #tpu.memory_space<vmem>>, %arg5: memref<32x128xf32, #tpu.memory_space<vmem>>, %arg6: memref<8x8x32xf32, #tpu.memory_space<vmem>>, %arg7: memref<8x32xf32, #tpu.memory_space<vmem>>, %arg8: memref<8x32xf32, #tpu.memory_space<vmem>>, %arg9: memref<8x32xf32, #tpu.memory_space<vmem>>, %arg10: memref<8x32xf32, #tpu.memory_space<vmem>>) attributes {dimension_semantics = [#tpu.dimension_semantics<arbitrary>], iteration_bounds = array<i64: 2>, scalar_prefetch = 0 : i64, scratch_operands = 2 : i64, tpu.core_type = #tpu.core_type<tc>, window_params = [{transform_indices = @transform_0, window_bounds = array<i64: 8, 8, 128>}, {transform_indices = @transform_1, window_bounds = array<i64: 8, 8, 1>}, {pipeline_mode = #tpu.pipeline_mode<synchronous>, transform_indices = @transform_2, window_bounds = array<i64: 8, 32>}, {pipeline_mode = #tpu.pipeline_mode<synchronous>, transform_indices = @transform_3, window_bounds = array<i64: 8, 32>}, {pipeline_mode = #tpu.pipeline_mode<synchronous>, transform_indices = @transform_4, window_bounds = array<i64: 32, 128>}, {transform_indices = @transform_5, window_bounds = array<i64: 8, 8, 32>}, {pipeline_mode = #tpu.pipeline_mode<synchronous>, transform_indices = @transform_6, window_bounds = array<i64: 8, 32>}, {pipeline_mode = #tpu.pipeline_mode<synchronous>, transform_indices = @transform_7, window_bounds = array<i64: 8, 32>}]} {
    %c0_i32 = arith.constant 0 : i32
    %0 = arith.cmpi eq, %arg0, %c0_i32 : i32
    %1 = arith.extui %0 : i1 to i32
    %c0_i32_0 = arith.constant 0 : i32
    %2 = arith.cmpi ne, %1, %c0_i32_0 : i32
    scf.if %2 {
      %c0_92 = arith.constant 0 : index
      %c0_93 = arith.constant 0 : index
      %387 = vector.load %arg3[%c0_92, %c0_93] : memref<8x32xf32, #tpu.memory_space<vmem>>, vector<8x32xf32>
      %c0_94 = arith.constant 0 : index
      %c0_95 = arith.constant 0 : index
      %388 = vector.load %arg9[%c0_94, %c0_95] : memref<8x32xf32, #tpu.memory_space<vmem>>, vector<8x32xf32>
      tpu.vector_store %arg9[%c0_94, %c0_95], %387 {strides = array<i32>} : memref<8x32xf32, #tpu.memory_space<vmem>>, vector<8x32xf32>,
      %c0_96 = arith.constant 0 : index
      %c0_97 = arith.constant 0 : index
      %389 = vector.load %arg4[%c0_96, %c0_97] : memref<8x32xf32, #tpu.memory_space<vmem>>, vector<8x32xf32>
      %c0_98 = arith.constant 0 : index
      %c0_99 = arith.constant 0 : index
      %390 = vector.load %arg10[%c0_98, %c0_99] : memref<8x32xf32, #tpu.memory_space<vmem>>, vector<8x32xf32>
      tpu.vector_store %arg10[%c0_98, %c0_99], %389 {strides = array<i32>} : memref<8x32xf32, #tpu.memory_space<vmem>>, vector<8x32xf32>,
    } else {
    }
    %c0 = arith.constant 0 : index
    %c0_1 = arith.constant 0 : index
    %3 = vector.load %arg5[%c0, %c0_1] : memref<32x128xf32, #tpu.memory_space<vmem>>, vector<32x128xf32>
    %c0_2 = arith.constant 0 : index
    %c0_3 = arith.constant 0 : index
    %4 = vector.load %arg9[%c0_2, %c0_3] : memref<8x32xf32, #tpu.memory_space<vmem>>, vector<8x32xf32>
    %c0_4 = arith.constant 0 : index
    %c0_5 = arith.constant 0 : index
    %5 = vector.load %arg10[%c0_4, %c0_5] : memref<8x32xf32, #tpu.memory_space<vmem>>, vector<8x32xf32>
    %c0_i32_6 = arith.constant 0 : i32
    %6 = arith.index_cast %c0_i32_6 : i32 to index
    %c0_7 = arith.constant 0 : index
    %c0_8 = arith.constant 0 : index
    %7 = vector.load %arg1[%6, %c0_7, %c0_8] : memref<8x8x128xf32, #tpu.memory_space<vmem>>, vector<1x8x128xf32>
    %8 = vector.shape_cast %7 : vector<1x8x128xf32> to vector<8x128xf32>
    %9 = arith.index_cast %c0_i32_6 : i32 to index
    %c0_9 = arith.constant 0 : index
    %c0_10 = arith.constant 0 : index
    %10 = vector.load %arg2[%9, %c0_9, %c0_10] : memref<8x8x1xf32, #tpu.memory_space<vmem>>, vector<1x8x1xf32>
    %11 = vector.shape_cast %10 : vector<1x8x1xf32> to vector<8x1xf32>
    %cst = arith.constant dense<0.000000e+00> : vector<8x128xf32>
    %12 = tpu.matmul %4, %3, %cst {dimension_numbers = #tpu.dot_dimension_numbers<[1], [0], [0], [1], [0, 0, 1, 1], [], []>} : vector<8x32xf32>, vector<32x128xf32>, vector<8x128xf32> -> vector<8x128xf32>
    %13 = arith.addf %8, %12 : vector<8x128xf32>
    %14 = vector.extract_strided_slice %13 {offsets = [0, 0], sizes = [8, 32], strides = [1, 1]} : vector<8x128xf32> to vector<8x32xf32>
    %15 = arith.negf %14 : vector<8x32xf32>
    %16 = math.exp %15 : vector<8x32xf32>
    %cst_11 = arith.constant 1.000000e+00 : f32
    %17 = vector.broadcast %cst_11 : f32 to vector<8x32xf32>
    %18 = arith.addf %17, %16 : vector<8x32xf32>
    %19 = arith.divf %17, %18 : vector<8x32xf32>
    %20 = vector.extract_strided_slice %13 {offsets = [0, 32], sizes = [8, 32], strides = [1, 1]} : vector<8x128xf32> to vector<8x32xf32>
    %21 = arith.negf %20 : vector<8x32xf32>
    %22 = math.exp %21 : vector<8x32xf32>
    %cst_12 = arith.constant 1.000000e+00 : f32
    %23 = vector.broadcast %cst_12 : f32 to vector<8x32xf32>
    %24 = arith.addf %23, %22 : vector<8x32xf32>
    %25 = arith.divf %23, %24 : vector<8x32xf32>
    %26 = vector.extract_strided_slice %13 {offsets = [0, 64], sizes = [8, 32], strides = [1, 1]} : vector<8x128xf32> to vector<8x32xf32>
    %27 = math.tanh %26 : vector<8x32xf32>
    %28 = vector.extract_strided_slice %13 {offsets = [0, 96], sizes = [8, 32], strides = [1, 1]} : vector<8x128xf32> to vector<8x32xf32>
    %29 = arith.negf %28 : vector<8x32xf32>
    %30 = math.exp %29 : vector<8x32xf32>
    %cst_13 = arith.constant 1.000000e+00 : f32
    %31 = vector.broadcast %cst_13 : f32 to vector<8x32xf32>
    %32 = arith.addf %31, %30 : vector<8x32xf32>
    %33 = arith.divf %31, %32 : vector<8x32xf32>
    %34 = arith.mulf %25, %5 : vector<8x32xf32>
    %35 = arith.mulf %19, %27 : vector<8x32xf32>
    %36 = arith.addf %34, %35 : vector<8x32xf32>
    %37 = math.tanh %36 : vector<8x32xf32>
    %38 = arith.mulf %33, %37 : vector<8x32xf32>
    %39 = arith.subf %38, %4 : vector<8x32xf32>
    %40 = vector.broadcast %11 : vector<8x1xf32> to vector<8x32xf32>
    %41 = arith.mulf %40, %39 : vector<8x32xf32>
    %42 = arith.addf %4, %41 : vector<8x32xf32>
    %43 = arith.subf %36, %5 : vector<8x32xf32>
    %44 = vector.broadcast %11 : vector<8x1xf32> to vector<8x32xf32>
    %45 = arith.mulf %44, %43 : vector<8x32xf32>
    %46 = arith.addf %5, %45 : vector<8x32xf32>
    %47 = vector.broadcast %11 : vector<8x1xf32> to vector<8x32xf32>
    %48 = arith.mulf %47, %38 : vector<8x32xf32>
    %49 = arith.index_cast %c0_i32_6 : i32 to index
    %c0_14 = arith.constant 0 : index
    %c0_15 = arith.constant 0 : index
    %50 = vector.load %arg6[%49, %c0_14, %c0_15] : memref<8x8x32xf32, #tpu.memory_space<vmem>>, vector<1x8x32xf32>
    %51 = vector.shape_cast %50 : vector<1x8x32xf32> to vector<8x32xf32>
    %52 = vector.shape_cast %48 : vector<8x32xf32> to vector<1x8x32xf32>
    tpu.vector_store %arg6[%49, %c0_14, %c0_15], %52 {strides = array<i32>} : memref<8x8x32xf32, #tpu.memory_space<vmem>>, vector<1x8x32xf32>,
    %c1_i32 = arith.constant 1 : i32
    %53 = arith.index_cast %c1_i32 : i32 to index
    %c0_16 = arith.constant 0 : index
    %c0_17 = arith.constant 0 : index
    %54 = vector.load %arg1[%53, %c0_16, %c0_17] : memref<8x8x128xf32, #tpu.memory_space<vmem>>, vector<1x8x128xf32>
    %55 = vector.shape_cast %54 : vector<1x8x128xf32> to vector<8x128xf32>
    %56 = arith.index_cast %c1_i32 : i32 to index
    %c0_18 = arith.constant 0 : index
    %c0_19 = arith.constant 0 : index
    %57 = vector.load %arg2[%56, %c0_18, %c0_19] : memref<8x8x1xf32, #tpu.memory_space<vmem>>, vector<1x8x1xf32>
    %58 = vector.shape_cast %57 : vector<1x8x1xf32> to vector<8x1xf32>
    %cst_20 = arith.constant dense<0.000000e+00> : vector<8x128xf32>
    %59 = tpu.matmul %42, %3, %cst_20 {dimension_numbers = #tpu.dot_dimension_numbers<[1], [0], [0], [1], [0, 0, 1, 1], [], []>} : vector<8x32xf32>, vector<32x128xf32>, vector<8x128xf32> -> vector<8x128xf32>
    %60 = arith.addf %55, %59 : vector<8x128xf32>
    %61 = vector.extract_strided_slice %60 {offsets = [0, 0], sizes = [8, 32], strides = [1, 1]} : vector<8x128xf32> to vector<8x32xf32>
    %62 = arith.negf %61 : vector<8x32xf32>
    %63 = math.exp %62 : vector<8x32xf32>
    %cst_21 = arith.constant 1.000000e+00 : f32
    %64 = vector.broadcast %cst_21 : f32 to vector<8x32xf32>
    %65 = arith.addf %64, %63 : vector<8x32xf32>
    %66 = arith.divf %64, %65 : vector<8x32xf32>
    %67 = vector.extract_strided_slice %60 {offsets = [0, 32], sizes = [8, 32], strides = [1, 1]} : vector<8x128xf32> to vector<8x32xf32>
    %68 = arith.negf %67 : vector<8x32xf32>
    %69 = math.exp %68 : vector<8x32xf32>
    %cst_22 = arith.constant 1.000000e+00 : f32
    %70 = vector.broadcast %cst_22 : f32 to vector<8x32xf32>
    %71 = arith.addf %70, %69 : vector<8x32xf32>
    %72 = arith.divf %70, %71 : vector<8x32xf32>
    %73 = vector.extract_strided_slice %60 {offsets = [0, 64], sizes = [8, 32], strides = [1, 1]} : vector<8x128xf32> to vector<8x32xf32>
    %74 = math.tanh %73 : vector<8x32xf32>
    %75 = vector.extract_strided_slice %60 {offsets = [0, 96], sizes = [8, 32], strides = [1, 1]} : vector<8x128xf32> to vector<8x32xf32>
    %76 = arith.negf %75 : vector<8x32xf32>
    %77 = math.exp %76 : vector<8x32xf32>
    %cst_23 = arith.constant 1.000000e+00 : f32
    %78 = vector.broadcast %cst_23 : f32 to vector<8x32xf32>
    %79 = arith.addf %78, %77 : vector<8x32xf32>
    %80 = arith.divf %78, %79 : vector<8x32xf32>
    %81 = arith.mulf %72, %46 : vector<8x32xf32>
    %82 = arith.mulf %66, %74 : vector<8x32xf32>
    %83 = arith.addf %81, %82 : vector<8x32xf32>
    %84 = math.tanh %83 : vector<8x32xf32>
    %85 = arith.mulf %80, %84 : vector<8x32xf32>
    %86 = arith.subf %85, %42 : vector<8x32xf32>
    %87 = vector.broadcast %58 : vector<8x1xf32> to vector<8x32xf32>
    %88 = arith.mulf %87, %86 : vector<8x32xf32>
    %89 = arith.addf %42, %88 : vector<8x32xf32>
    %90 = arith.subf %83, %46 : vector<8x32xf32>
    %91 = vector.broadcast %58 : vector<8x1xf32> to vector<8x32xf32>
    %92 = arith.mulf %91, %90 : vector<8x32xf32>
    %93 = arith.addf %46, %92 : vector<8x32xf32>
    %94 = vector.broadcast %58 : vector<8x1xf32> to vector<8x32xf32>
    %95 = arith.mulf %94, %85 : vector<8x32xf32>
    %96 = arith.index_cast %c1_i32 : i32 to index
    %c0_24 = arith.constant 0 : index
    %c0_25 = arith.constant 0 : index
    %97 = vector.load %arg6[%96, %c0_24, %c0_25] : memref<8x8x32xf32, #tpu.memory_space<vmem>>, vector<1x8x32xf32>
    %98 = vector.shape_cast %97 : vector<1x8x32xf32> to vector<8x32xf32>
    %99 = vector.shape_cast %95 : vector<8x32xf32> to vector<1x8x32xf32>
    tpu.vector_store %arg6[%96, %c0_24, %c0_25], %99 {strides = array<i32>} : memref<8x8x32xf32, #tpu.memory_space<vmem>>, vector<1x8x32xf32>,
    %c2_i32 = arith.constant 2 : i32
    %100 = arith.index_cast %c2_i32 : i32 to index
    %c0_26 = arith.constant 0 : index
    %c0_27 = arith.constant 0 : index
    %101 = vector.load %arg1[%100, %c0_26, %c0_27] : memref<8x8x128xf32, #tpu.memory_space<vmem>>, vector<1x8x128xf32>
    %102 = vector.shape_cast %101 : vector<1x8x128xf32> to vector<8x128xf32>
    %103 = arith.index_cast %c2_i32 : i32 to index
    %c0_28 = arith.constant 0 : index
    %c0_29 = arith.constant 0 : index
    %104 = vector.load %arg2[%103, %c0_28, %c0_29] : memref<8x8x1xf32, #tpu.memory_space<vmem>>, vector<1x8x1xf32>
    %105 = vector.shape_cast %104 : vector<1x8x1xf32> to vector<8x1xf32>
    %cst_30 = arith.constant dense<0.000000e+00> : vector<8x128xf32>
    %106 = tpu.matmul %89, %3, %cst_30 {dimension_numbers = #tpu.dot_dimension_numbers<[1], [0], [0], [1], [0, 0, 1, 1], [], []>} : vector<8x32xf32>, vector<32x128xf32>, vector<8x128xf32> -> vector<8x128xf32>
    %107 = arith.addf %102, %106 : vector<8x128xf32>
    %108 = vector.extract_strided_slice %107 {offsets = [0, 0], sizes = [8, 32], strides = [1, 1]} : vector<8x128xf32> to vector<8x32xf32>
    %109 = arith.negf %108 : vector<8x32xf32>
    %110 = math.exp %109 : vector<8x32xf32>
    %cst_31 = arith.constant 1.000000e+00 : f32
    %111 = vector.broadcast %cst_31 : f32 to vector<8x32xf32>
    %112 = arith.addf %111, %110 : vector<8x32xf32>
    %113 = arith.divf %111, %112 : vector<8x32xf32>
    %114 = vector.extract_strided_slice %107 {offsets = [0, 32], sizes = [8, 32], strides = [1, 1]} : vector<8x128xf32> to vector<8x32xf32>
    %115 = arith.negf %114 : vector<8x32xf32>
    %116 = math.exp %115 : vector<8x32xf32>
    %cst_32 = arith.constant 1.000000e+00 : f32
    %117 = vector.broadcast %cst_32 : f32 to vector<8x32xf32>
    %118 = arith.addf %117, %116 : vector<8x32xf32>
    %119 = arith.divf %117, %118 : vector<8x32xf32>
    %120 = vector.extract_strided_slice %107 {offsets = [0, 64], sizes = [8, 32], strides = [1, 1]} : vector<8x128xf32> to vector<8x32xf32>
    %121 = math.tanh %120 : vector<8x32xf32>
    %122 = vector.extract_strided_slice %107 {offsets = [0, 96], sizes = [8, 32], strides = [1, 1]} : vector<8x128xf32> to vector<8x32xf32>
    %123 = arith.negf %122 : vector<8x32xf32>
    %124 = math.exp %123 : vector<8x32xf32>
    %cst_33 = arith.constant 1.000000e+00 : f32
    %125 = vector.broadcast %cst_33 : f32 to vector<8x32xf32>
    %126 = arith.addf %125, %124 : vector<8x32xf32>
    %127 = arith.divf %125, %126 : vector<8x32xf32>
    %128 = arith.mulf %119, %93 : vector<8x32xf32>
    %129 = arith.mulf %113, %121 : vector<8x32xf32>
    %130 = arith.addf %128, %129 : vector<8x32xf32>
    %131 = math.tanh %130 : vector<8x32xf32>
    %132 = arith.mulf %127, %131 : vector<8x32xf32>
    %133 = arith.subf %132, %89 : vector<8x32xf32>
    %134 = vector.broadcast %105 : vector<8x1xf32> to vector<8x32xf32>
    %135 = arith.mulf %134, %133 : vector<8x32xf32>
    %136 = arith.addf %89, %135 : vector<8x32xf32>
    %137 = arith.subf %130, %93 : vector<8x32xf32>
    %138 = vector.broadcast %105 : vector<8x1xf32> to vector<8x32xf32>
    %139 = arith.mulf %138, %137 : vector<8x32xf32>
    %140 = arith.addf %93, %139 : vector<8x32xf32>
    %141 = vector.broadcast %105 : vector<8x1xf32> to vector<8x32xf32>
    %142 = arith.mulf %141, %132 : vector<8x32xf32>
    %143 = arith.index_cast %c2_i32 : i32 to index
    %c0_34 = arith.constant 0 : index
    %c0_35 = arith.constant 0 : index
    %144 = vector.load %arg6[%143, %c0_34, %c0_35] : memref<8x8x32xf32, #tpu.memory_space<vmem>>, vector<1x8x32xf32>
    %145 = vector.shape_cast %144 : vector<1x8x32xf32> to vector<8x32xf32>
    %146 = vector.shape_cast %142 : vector<8x32xf32> to vector<1x8x32xf32>
    tpu.vector_store %arg6[%143, %c0_34, %c0_35], %146 {strides = array<i32>} : memref<8x8x32xf32, #tpu.memory_space<vmem>>, vector<1x8x32xf32>,
    %c3_i32 = arith.constant 3 : i32
    %147 = arith.index_cast %c3_i32 : i32 to index
    %c0_36 = arith.constant 0 : index
    %c0_37 = arith.constant 0 : index
    %148 = vector.load %arg1[%147, %c0_36, %c0_37] : memref<8x8x128xf32, #tpu.memory_space<vmem>>, vector<1x8x128xf32>
    %149 = vector.shape_cast %148 : vector<1x8x128xf32> to vector<8x128xf32>
    %150 = arith.index_cast %c3_i32 : i32 to index
    %c0_38 = arith.constant 0 : index
    %c0_39 = arith.constant 0 : index
    %151 = vector.load %arg2[%150, %c0_38, %c0_39] : memref<8x8x1xf32, #tpu.memory_space<vmem>>, vector<1x8x1xf32>
    %152 = vector.shape_cast %151 : vector<1x8x1xf32> to vector<8x1xf32>
    %cst_40 = arith.constant dense<0.000000e+00> : vector<8x128xf32>
    %153 = tpu.matmul %136, %3, %cst_40 {dimension_numbers = #tpu.dot_dimension_numbers<[1], [0], [0], [1], [0, 0, 1, 1], [], []>} : vector<8x32xf32>, vector<32x128xf32>, vector<8x128xf32> -> vector<8x128xf32>
    %154 = arith.addf %149, %153 : vector<8x128xf32>
    %155 = vector.extract_strided_slice %154 {offsets = [0, 0], sizes = [8, 32], strides = [1, 1]} : vector<8x128xf32> to vector<8x32xf32>
    %156 = arith.negf %155 : vector<8x32xf32>
    %157 = math.exp %156 : vector<8x32xf32>
    %cst_41 = arith.constant 1.000000e+00 : f32
    %158 = vector.broadcast %cst_41 : f32 to vector<8x32xf32>
    %159 = arith.addf %158, %157 : vector<8x32xf32>
    %160 = arith.divf %158, %159 : vector<8x32xf32>
    %161 = vector.extract_strided_slice %154 {offsets = [0, 32], sizes = [8, 32], strides = [1, 1]} : vector<8x128xf32> to vector<8x32xf32>
    %162 = arith.negf %161 : vector<8x32xf32>
    %163 = math.exp %162 : vector<8x32xf32>
    %cst_42 = arith.constant 1.000000e+00 : f32
    %164 = vector.broadcast %cst_42 : f32 to vector<8x32xf32>
    %165 = arith.addf %164, %163 : vector<8x32xf32>
    %166 = arith.divf %164, %165 : vector<8x32xf32>
    %167 = vector.extract_strided_slice %154 {offsets = [0, 64], sizes = [8, 32], strides = [1, 1]} : vector<8x128xf32> to vector<8x32xf32>
    %168 = math.tanh %167 : vector<8x32xf32>
    %169 = vector.extract_strided_slice %154 {offsets = [0, 96], sizes = [8, 32], strides = [1, 1]} : vector<8x128xf32> to vector<8x32xf32>
    %170 = arith.negf %169 : vector<8x32xf32>
    %171 = math.exp %170 : vector<8x32xf32>
    %cst_43 = arith.constant 1.000000e+00 : f32
    %172 = vector.broadcast %cst_43 : f32 to vector<8x32xf32>
    %173 = arith.addf %172, %171 : vector<8x32xf32>
    %174 = arith.divf %172, %173 : vector<8x32xf32>
    %175 = arith.mulf %166, %140 : vector<8x32xf32>
    %176 = arith.mulf %160, %168 : vector<8x32xf32>
    %177 = arith.addf %175, %176 : vector<8x32xf32>
    %178 = math.tanh %177 : vector<8x32xf32>
    %179 = arith.mulf %174, %178 : vector<8x32xf32>
    %180 = arith.subf %179, %136 : vector<8x32xf32>
    %181 = vector.broadcast %152 : vector<8x1xf32> to vector<8x32xf32>
    %182 = arith.mulf %181, %180 : vector<8x32xf32>
    %183 = arith.addf %136, %182 : vector<8x32xf32>
    %184 = arith.subf %177, %140 : vector<8x32xf32>
    %185 = vector.broadcast %152 : vector<8x1xf32> to vector<8x32xf32>
    %186 = arith.mulf %185, %184 : vector<8x32xf32>
    %187 = arith.addf %140, %186 : vector<8x32xf32>
    %188 = vector.broadcast %152 : vector<8x1xf32> to vector<8x32xf32>
    %189 = arith.mulf %188, %179 : vector<8x32xf32>
    %190 = arith.index_cast %c3_i32 : i32 to index
    %c0_44 = arith.constant 0 : index
    %c0_45 = arith.constant 0 : index
    %191 = vector.load %arg6[%190, %c0_44, %c0_45] : memref<8x8x32xf32, #tpu.memory_space<vmem>>, vector<1x8x32xf32>
    %192 = vector.shape_cast %191 : vector<1x8x32xf32> to vector<8x32xf32>
    %193 = vector.shape_cast %189 : vector<8x32xf32> to vector<1x8x32xf32>
    tpu.vector_store %arg6[%190, %c0_44, %c0_45], %193 {strides = array<i32>} : memref<8x8x32xf32, #tpu.memory_space<vmem>>, vector<1x8x32xf32>,
    %c4_i32 = arith.constant 4 : i32
    %194 = arith.index_cast %c4_i32 : i32 to index
    %c0_46 = arith.constant 0 : index
    %c0_47 = arith.constant 0 : index
    %195 = vector.load %arg1[%194, %c0_46, %c0_47] : memref<8x8x128xf32, #tpu.memory_space<vmem>>, vector<1x8x128xf32>
    %196 = vector.shape_cast %195 : vector<1x8x128xf32> to vector<8x128xf32>
    %197 = arith.index_cast %c4_i32 : i32 to index
    %c0_48 = arith.constant 0 : index
    %c0_49 = arith.constant 0 : index
    %198 = vector.load %arg2[%197, %c0_48, %c0_49] : memref<8x8x1xf32, #tpu.memory_space<vmem>>, vector<1x8x1xf32>
    %199 = vector.shape_cast %198 : vector<1x8x1xf32> to vector<8x1xf32>
    %cst_50 = arith.constant dense<0.000000e+00> : vector<8x128xf32>
    %200 = tpu.matmul %183, %3, %cst_50 {dimension_numbers = #tpu.dot_dimension_numbers<[1], [0], [0], [1], [0, 0, 1, 1], [], []>} : vector<8x32xf32>, vector<32x128xf32>, vector<8x128xf32> -> vector<8x128xf32>
    %201 = arith.addf %196, %200 : vector<8x128xf32>
    %202 = vector.extract_strided_slice %201 {offsets = [0, 0], sizes = [8, 32], strides = [1, 1]} : vector<8x128xf32> to vector<8x32xf32>
    %203 = arith.negf %202 : vector<8x32xf32>
    %204 = math.exp %203 : vector<8x32xf32>
    %cst_51 = arith.constant 1.000000e+00 : f32
    %205 = vector.broadcast %cst_51 : f32 to vector<8x32xf32>
    %206 = arith.addf %205, %204 : vector<8x32xf32>
    %207 = arith.divf %205, %206 : vector<8x32xf32>
    %208 = vector.extract_strided_slice %201 {offsets = [0, 32], sizes = [8, 32], strides = [1, 1]} : vector<8x128xf32> to vector<8x32xf32>
    %209 = arith.negf %208 : vector<8x32xf32>
    %210 = math.exp %209 : vector<8x32xf32>
    %cst_52 = arith.constant 1.000000e+00 : f32
    %211 = vector.broadcast %cst_52 : f32 to vector<8x32xf32>
    %212 = arith.addf %211, %210 : vector<8x32xf32>
    %213 = arith.divf %211, %212 : vector<8x32xf32>
    %214 = vector.extract_strided_slice %201 {offsets = [0, 64], sizes = [8, 32], strides = [1, 1]} : vector<8x128xf32> to vector<8x32xf32>
    %215 = math.tanh %214 : vector<8x32xf32>
    %216 = vector.extract_strided_slice %201 {offsets = [0, 96], sizes = [8, 32], strides = [1, 1]} : vector<8x128xf32> to vector<8x32xf32>
    %217 = arith.negf %216 : vector<8x32xf32>
    %218 = math.exp %217 : vector<8x32xf32>
    %cst_53 = arith.constant 1.000000e+00 : f32
    %219 = vector.broadcast %cst_53 : f32 to vector<8x32xf32>
    %220 = arith.addf %219, %218 : vector<8x32xf32>
    %221 = arith.divf %219, %220 : vector<8x32xf32>
    %222 = arith.mulf %213, %187 : vector<8x32xf32>
    %223 = arith.mulf %207, %215 : vector<8x32xf32>
    %224 = arith.addf %222, %223 : vector<8x32xf32>
    %225 = math.tanh %224 : vector<8x32xf32>
    %226 = arith.mulf %221, %225 : vector<8x32xf32>
    %227 = arith.subf %226, %183 : vector<8x32xf32>
    %228 = vector.broadcast %199 : vector<8x1xf32> to vector<8x32xf32>
    %229 = arith.mulf %228, %227 : vector<8x32xf32>
    %230 = arith.addf %183, %229 : vector<8x32xf32>
    %231 = arith.subf %224, %187 : vector<8x32xf32>
    %232 = vector.broadcast %199 : vector<8x1xf32> to vector<8x32xf32>
    %233 = arith.mulf %232, %231 : vector<8x32xf32>
    %234 = arith.addf %187, %233 : vector<8x32xf32>
    %235 = vector.broadcast %199 : vector<8x1xf32> to vector<8x32xf32>
    %236 = arith.mulf %235, %226 : vector<8x32xf32>
    %237 = arith.index_cast %c4_i32 : i32 to index
    %c0_54 = arith.constant 0 : index
    %c0_55 = arith.constant 0 : index
    %238 = vector.load %arg6[%237, %c0_54, %c0_55] : memref<8x8x32xf32, #tpu.memory_space<vmem>>, vector<1x8x32xf32>
    %239 = vector.shape_cast %238 : vector<1x8x32xf32> to vector<8x32xf32>
    %240 = vector.shape_cast %236 : vector<8x32xf32> to vector<1x8x32xf32>
    tpu.vector_store %arg6[%237, %c0_54, %c0_55], %240 {strides = array<i32>} : memref<8x8x32xf32, #tpu.memory_space<vmem>>, vector<1x8x32xf32>,
    %c5_i32 = arith.constant 5 : i32
    %241 = arith.index_cast %c5_i32 : i32 to index
    %c0_56 = arith.constant 0 : index
    %c0_57 = arith.constant 0 : index
    %242 = vector.load %arg1[%241, %c0_56, %c0_57] : memref<8x8x128xf32, #tpu.memory_space<vmem>>, vector<1x8x128xf32>
    %243 = vector.shape_cast %242 : vector<1x8x128xf32> to vector<8x128xf32>
    %244 = arith.index_cast %c5_i32 : i32 to index
    %c0_58 = arith.constant 0 : index
    %c0_59 = arith.constant 0 : index
    %245 = vector.load %arg2[%244, %c0_58, %c0_59] : memref<8x8x1xf32, #tpu.memory_space<vmem>>, vector<1x8x1xf32>
    %246 = vector.shape_cast %245 : vector<1x8x1xf32> to vector<8x1xf32>
    %cst_60 = arith.constant dense<0.000000e+00> : vector<8x128xf32>
    %247 = tpu.matmul %230, %3, %cst_60 {dimension_numbers = #tpu.dot_dimension_numbers<[1], [0], [0], [1], [0, 0, 1, 1], [], []>} : vector<8x32xf32>, vector<32x128xf32>, vector<8x128xf32> -> vector<8x128xf32>
    %248 = arith.addf %243, %247 : vector<8x128xf32>
    %249 = vector.extract_strided_slice %248 {offsets = [0, 0], sizes = [8, 32], strides = [1, 1]} : vector<8x128xf32> to vector<8x32xf32>
    %250 = arith.negf %249 : vector<8x32xf32>
    %251 = math.exp %250 : vector<8x32xf32>
    %cst_61 = arith.constant 1.000000e+00 : f32
    %252 = vector.broadcast %cst_61 : f32 to vector<8x32xf32>
    %253 = arith.addf %252, %251 : vector<8x32xf32>
    %254 = arith.divf %252, %253 : vector<8x32xf32>
    %255 = vector.extract_strided_slice %248 {offsets = [0, 32], sizes = [8, 32], strides = [1, 1]} : vector<8x128xf32> to vector<8x32xf32>
    %256 = arith.negf %255 : vector<8x32xf32>
    %257 = math.exp %256 : vector<8x32xf32>
    %cst_62 = arith.constant 1.000000e+00 : f32
    %258 = vector.broadcast %cst_62 : f32 to vector<8x32xf32>
    %259 = arith.addf %258, %257 : vector<8x32xf32>
    %260 = arith.divf %258, %259 : vector<8x32xf32>
    %261 = vector.extract_strided_slice %248 {offsets = [0, 64], sizes = [8, 32], strides = [1, 1]} : vector<8x128xf32> to vector<8x32xf32>
    %262 = math.tanh %261 : vector<8x32xf32>
    %263 = vector.extract_strided_slice %248 {offsets = [0, 96], sizes = [8, 32], strides = [1, 1]} : vector<8x128xf32> to vector<8x32xf32>
    %264 = arith.negf %263 : vector<8x32xf32>
    %265 = math.exp %264 : vector<8x32xf32>
    %cst_63 = arith.constant 1.000000e+00 : f32
    %266 = vector.broadcast %cst_63 : f32 to vector<8x32xf32>
    %267 = arith.addf %266, %265 : vector<8x32xf32>
    %268 = arith.divf %266, %267 : vector<8x32xf32>
    %269 = arith.mulf %260, %234 : vector<8x32xf32>
    %270 = arith.mulf %254, %262 : vector<8x32xf32>
    %271 = arith.addf %269, %270 : vector<8x32xf32>
    %272 = math.tanh %271 : vector<8x32xf32>
    %273 = arith.mulf %268, %272 : vector<8x32xf32>
    %274 = arith.subf %273, %230 : vector<8x32xf32>
    %275 = vector.broadcast %246 : vector<8x1xf32> to vector<8x32xf32>
    %276 = arith.mulf %275, %274 : vector<8x32xf32>
    %277 = arith.addf %230, %276 : vector<8x32xf32>
    %278 = arith.subf %271, %234 : vector<8x32xf32>
    %279 = vector.broadcast %246 : vector<8x1xf32> to vector<8x32xf32>
    %280 = arith.mulf %279, %278 : vector<8x32xf32>
    %281 = arith.addf %234, %280 : vector<8x32xf32>
    %282 = vector.broadcast %246 : vector<8x1xf32> to vector<8x32xf32>
    %283 = arith.mulf %282, %273 : vector<8x32xf32>
    %284 = arith.index_cast %c5_i32 : i32 to index
    %c0_64 = arith.constant 0 : index
    %c0_65 = arith.constant 0 : index
    %285 = vector.load %arg6[%284, %c0_64, %c0_65] : memref<8x8x32xf32, #tpu.memory_space<vmem>>, vector<1x8x32xf32>
    %286 = vector.shape_cast %285 : vector<1x8x32xf32> to vector<8x32xf32>
    %287 = vector.shape_cast %283 : vector<8x32xf32> to vector<1x8x32xf32>
    tpu.vector_store %arg6[%284, %c0_64, %c0_65], %287 {strides = array<i32>} : memref<8x8x32xf32, #tpu.memory_space<vmem>>, vector<1x8x32xf32>,
    %c6_i32 = arith.constant 6 : i32
    %288 = arith.index_cast %c6_i32 : i32 to index
    %c0_66 = arith.constant 0 : index
    %c0_67 = arith.constant 0 : index
    %289 = vector.load %arg1[%288, %c0_66, %c0_67] : memref<8x8x128xf32, #tpu.memory_space<vmem>>, vector<1x8x128xf32>
    %290 = vector.shape_cast %289 : vector<1x8x128xf32> to vector<8x128xf32>
    %291 = arith.index_cast %c6_i32 : i32 to index
    %c0_68 = arith.constant 0 : index
    %c0_69 = arith.constant 0 : index
    %292 = vector.load %arg2[%291, %c0_68, %c0_69] : memref<8x8x1xf32, #tpu.memory_space<vmem>>, vector<1x8x1xf32>
    %293 = vector.shape_cast %292 : vector<1x8x1xf32> to vector<8x1xf32>
    %cst_70 = arith.constant dense<0.000000e+00> : vector<8x128xf32>
    %294 = tpu.matmul %277, %3, %cst_70 {dimension_numbers = #tpu.dot_dimension_numbers<[1], [0], [0], [1], [0, 0, 1, 1], [], []>} : vector<8x32xf32>, vector<32x128xf32>, vector<8x128xf32> -> vector<8x128xf32>
    %295 = arith.addf %290, %294 : vector<8x128xf32>
    %296 = vector.extract_strided_slice %295 {offsets = [0, 0], sizes = [8, 32], strides = [1, 1]} : vector<8x128xf32> to vector<8x32xf32>
    %297 = arith.negf %296 : vector<8x32xf32>
    %298 = math.exp %297 : vector<8x32xf32>
    %cst_71 = arith.constant 1.000000e+00 : f32
    %299 = vector.broadcast %cst_71 : f32 to vector<8x32xf32>
    %300 = arith.addf %299, %298 : vector<8x32xf32>
    %301 = arith.divf %299, %300 : vector<8x32xf32>
    %302 = vector.extract_strided_slice %295 {offsets = [0, 32], sizes = [8, 32], strides = [1, 1]} : vector<8x128xf32> to vector<8x32xf32>
    %303 = arith.negf %302 : vector<8x32xf32>
    %304 = math.exp %303 : vector<8x32xf32>
    %cst_72 = arith.constant 1.000000e+00 : f32
    %305 = vector.broadcast %cst_72 : f32 to vector<8x32xf32>
    %306 = arith.addf %305, %304 : vector<8x32xf32>
    %307 = arith.divf %305, %306 : vector<8x32xf32>
    %308 = vector.extract_strided_slice %295 {offsets = [0, 64], sizes = [8, 32], strides = [1, 1]} : vector<8x128xf32> to vector<8x32xf32>
    %309 = math.tanh %308 : vector<8x32xf32>
    %310 = vector.extract_strided_slice %295 {offsets = [0, 96], sizes = [8, 32], strides = [1, 1]} : vector<8x128xf32> to vector<8x32xf32>
    %311 = arith.negf %310 : vector<8x32xf32>
    %312 = math.exp %311 : vector<8x32xf32>
    %cst_73 = arith.constant 1.000000e+00 : f32
    %313 = vector.broadcast %cst_73 : f32 to vector<8x32xf32>
    %314 = arith.addf %313, %312 : vector<8x32xf32>
    %315 = arith.divf %313, %314 : vector<8x32xf32>
    %316 = arith.mulf %307, %281 : vector<8x32xf32>
    %317 = arith.mulf %301, %309 : vector<8x32xf32>
    %318 = arith.addf %316, %317 : vector<8x32xf32>
    %319 = math.tanh %318 : vector<8x32xf32>
    %320 = arith.mulf %315, %319 : vector<8x32xf32>
    %321 = arith.subf %320, %277 : vector<8x32xf32>
    %322 = vector.broadcast %293 : vector<8x1xf32> to vector<8x32xf32>
    %323 = arith.mulf %322, %321 : vector<8x32xf32>
    %324 = arith.addf %277, %323 : vector<8x32xf32>
    %325 = arith.subf %318, %281 : vector<8x32xf32>
    %326 = vector.broadcast %293 : vector<8x1xf32> to vector<8x32xf32>
    %327 = arith.mulf %326, %325 : vector<8x32xf32>
    %328 = arith.addf %281, %327 : vector<8x32xf32>
    %329 = vector.broadcast %293 : vector<8x1xf32> to vector<8x32xf32>
    %330 = arith.mulf %329, %320 : vector<8x32xf32>
    %331 = arith.index_cast %c6_i32 : i32 to index
    %c0_74 = arith.constant 0 : index
    %c0_75 = arith.constant 0 : index
    %332 = vector.load %arg6[%331, %c0_74, %c0_75] : memref<8x8x32xf32, #tpu.memory_space<vmem>>, vector<1x8x32xf32>
    %333 = vector.shape_cast %332 : vector<1x8x32xf32> to vector<8x32xf32>
    %334 = vector.shape_cast %330 : vector<8x32xf32> to vector<1x8x32xf32>
    tpu.vector_store %arg6[%331, %c0_74, %c0_75], %334 {strides = array<i32>} : memref<8x8x32xf32, #tpu.memory_space<vmem>>, vector<1x8x32xf32>,
    %c7_i32 = arith.constant 7 : i32
    %335 = arith.index_cast %c7_i32 : i32 to index
    %c0_76 = arith.constant 0 : index
    %c0_77 = arith.constant 0 : index
    %336 = vector.load %arg1[%335, %c0_76, %c0_77] : memref<8x8x128xf32, #tpu.memory_space<vmem>>, vector<1x8x128xf32>
    %337 = vector.shape_cast %336 : vector<1x8x128xf32> to vector<8x128xf32>
    %338 = arith.index_cast %c7_i32 : i32 to index
    %c0_78 = arith.constant 0 : index
    %c0_79 = arith.constant 0 : index
    %339 = vector.load %arg2[%338, %c0_78, %c0_79] : memref<8x8x1xf32, #tpu.memory_space<vmem>>, vector<1x8x1xf32>
    %340 = vector.shape_cast %339 : vector<1x8x1xf32> to vector<8x1xf32>
    %cst_80 = arith.constant dense<0.000000e+00> : vector<8x128xf32>
    %341 = tpu.matmul %324, %3, %cst_80 {dimension_numbers = #tpu.dot_dimension_numbers<[1], [0], [0], [1], [0, 0, 1, 1], [], []>} : vector<8x32xf32>, vector<32x128xf32>, vector<8x128xf32> -> vector<8x128xf32>
    %342 = arith.addf %337, %341 : vector<8x128xf32>
    %343 = vector.extract_strided_slice %342 {offsets = [0, 0], sizes = [8, 32], strides = [1, 1]} : vector<8x128xf32> to vector<8x32xf32>
    %344 = arith.negf %343 : vector<8x32xf32>
    %345 = math.exp %344 : vector<8x32xf32>
    %cst_81 = arith.constant 1.000000e+00 : f32
    %346 = vector.broadcast %cst_81 : f32 to vector<8x32xf32>
    %347 = arith.addf %346, %345 : vector<8x32xf32>
    %348 = arith.divf %346, %347 : vector<8x32xf32>
    %349 = vector.extract_strided_slice %342 {offsets = [0, 32], sizes = [8, 32], strides = [1, 1]} : vector<8x128xf32> to vector<8x32xf32>
    %350 = arith.negf %349 : vector<8x32xf32>
    %351 = math.exp %350 : vector<8x32xf32>
    %cst_82 = arith.constant 1.000000e+00 : f32
    %352 = vector.broadcast %cst_82 : f32 to vector<8x32xf32>
    %353 = arith.addf %352, %351 : vector<8x32xf32>
    %354 = arith.divf %352, %353 : vector<8x32xf32>
    %355 = vector.extract_strided_slice %342 {offsets = [0, 64], sizes = [8, 32], strides = [1, 1]} : vector<8x128xf32> to vector<8x32xf32>
    %356 = math.tanh %355 : vector<8x32xf32>
    %357 = vector.extract_strided_slice %342 {offsets = [0, 96], sizes = [8, 32], strides = [1, 1]} : vector<8x128xf32> to vector<8x32xf32>
    %358 = arith.negf %357 : vector<8x32xf32>
    %359 = math.exp %358 : vector<8x32xf32>
    %cst_83 = arith.constant 1.000000e+00 : f32
    %360 = vector.broadcast %cst_83 : f32 to vector<8x32xf32>
    %361 = arith.addf %360, %359 : vector<8x32xf32>
    %362 = arith.divf %360, %361 : vector<8x32xf32>
    %363 = arith.mulf %354, %328 : vector<8x32xf32>
    %364 = arith.mulf %348, %356 : vector<8x32xf32>
    %365 = arith.addf %363, %364 : vector<8x32xf32>
    %366 = math.tanh %365 : vector<8x32xf32>
    %367 = arith.mulf %362, %366 : vector<8x32xf32>
    %368 = arith.subf %367, %324 : vector<8x32xf32>
    %369 = vector.broadcast %340 : vector<8x1xf32> to vector<8x32xf32>
    %370 = arith.mulf %369, %368 : vector<8x32xf32>
    %371 = arith.addf %324, %370 : vector<8x32xf32>
    %372 = arith.subf %365, %328 : vector<8x32xf32>
    %373 = vector.broadcast %340 : vector<8x1xf32> to vector<8x32xf32>
    %374 = arith.mulf %373, %372 : vector<8x32xf32>
    %375 = arith.addf %328, %374 : vector<8x32xf32>
    %376 = vector.broadcast %340 : vector<8x1xf32> to vector<8x32xf32>
    %377 = arith.mulf %376, %367 : vector<8x32xf32>
    %378 = arith.index_cast %c7_i32 : i32 to index
    %c0_84 = arith.constant 0 : index
    %c0_85 = arith.constant 0 : index
    %379 = vector.load %arg6[%378, %c0_84, %c0_85] : memref<8x8x32xf32, #tpu.memory_space<vmem>>, vector<1x8x32xf32>
    %380 = vector.shape_cast %379 : vector<1x8x32xf32> to vector<8x32xf32>
    %381 = vector.shape_cast %377 : vector<8x32xf32> to vector<1x8x32xf32>
    tpu.vector_store %arg6[%378, %c0_84, %c0_85], %381 {strides = array<i32>} : memref<8x8x32xf32, #tpu.memory_space<vmem>>, vector<1x8x32xf32>,
    %c8_i32 = arith.constant 8 : i32
    %c0_86 = arith.constant 0 : index
    %c0_87 = arith.constant 0 : index
    %382 = vector.load %arg9[%c0_86, %c0_87] : memref<8x32xf32, #tpu.memory_space<vmem>>, vector<8x32xf32>
    tpu.vector_store %arg9[%c0_86, %c0_87], %371 {strides = array<i32>} : memref<8x32xf32, #tpu.memory_space<vmem>>, vector<8x32xf32>,
    %c0_88 = arith.constant 0 : index
    %c0_89 = arith.constant 0 : index
    %383 = vector.load %arg10[%c0_88, %c0_89] : memref<8x32xf32, #tpu.memory_space<vmem>>, vector<8x32xf32>
    tpu.vector_store %arg10[%c0_88, %c0_89], %375 {strides = array<i32>} : memref<8x32xf32, #tpu.memory_space<vmem>>, vector<8x32xf32>,
    %c1_i32_90 = arith.constant 1 : i32
    %384 = arith.cmpi eq, %arg0, %c1_i32_90 : i32
    %385 = arith.extui %384 : i1 to i32
    %c0_i32_91 = arith.constant 0 : i32
    %386 = arith.cmpi ne, %385, %c0_i32_91 : i32
    scf.if %386 {
      %c0_92 = arith.constant 0 : index
      %c0_93 = arith.constant 0 : index
      %387 = vector.load %arg7[%c0_92, %c0_93] : memref<8x32xf32, #tpu.memory_space<vmem>>, vector<8x32xf32>
      tpu.vector_store %arg7[%c0_92, %c0_93], %371 {strides = array<i32>} : memref<8x32xf32, #tpu.memory_space<vmem>>, vector<8x32xf32>,
      %c0_94 = arith.constant 0 : index
      %c0_95 = arith.constant 0 : index
      %388 = vector.load %arg8[%c0_94, %c0_95] : memref<8x32xf32, #tpu.memory_space<vmem>>, vector<8x32xf32>
      tpu.vector_store %arg8[%c0_94, %c0_95], %375 {strides = array<i32>} : memref<8x32xf32, #tpu.memory_space<vmem>>, vector<8x32xf32>,
    } else {
    }
    return
  }
  func.func @transform_0(%arg0: i32) -> (i32, i32, i32) {
    %c0_i32 = arith.constant 0 : i32
    %c0_i32_0 = arith.constant 0 : i32
    %c0_i32_1 = arith.constant 0 : i32
    return %arg0, %c0_i32, %c0_i32_0 : i32, i32, i32
  }
  func.func @transform_1(%arg0: i32) -> (i32, i32, i32) {
    %c0_i32 = arith.constant 0 : i32
    %c0_i32_0 = arith.constant 0 : i32
    %c0_i32_1 = arith.constant 0 : i32
    return %arg0, %c0_i32, %c0_i32_0 : i32, i32, i32
  }
  func.func @transform_2(%arg0: i32) -> (i32, i32) {
    %c0_i32 = arith.constant 0 : i32
    %c0_i32_0 = arith.constant 0 : i32
    %c0_i32_1 = arith.constant 0 : i32
    return %c0_i32, %c0_i32_0 : i32, i32
  }
  func.func @transform_3(%arg0: i32) -> (i32, i32) {
    %c0_i32 = arith.constant 0 : i32
    %c0_i32_0 = arith.constant 0 : i32
    %c0_i32_1 = arith.constant 0 : i32
    return %c0_i32, %c0_i32_0 : i32, i32
  }
  func.func @transform_4(%arg0: i32) -> (i32, i32) {
    %c0_i32 = arith.constant 0 : i32
    %c0_i32_0 = arith.constant 0 : i32
    %c0_i32_1 = arith.constant 0 : i32
    return %c0_i32, %c0_i32_0 : i32, i32
  }
  func.func @transform_5(%arg0: i32) -> (i32, i32, i32) {
    %c0_i32 = arith.constant 0 : i32
    %c0_i32_0 = arith.constant 0 : i32
    %c0_i32_1 = arith.constant 0 : i32
    return %arg0, %c0_i32, %c0_i32_0 : i32, i32, i32
  }
  func.func @transform_6(%arg0: i32) -> (i32, i32) {
    %c0_i32 = arith.constant 0 : i32
    %c0_i32_0 = arith.constant 0 : i32
    %c0_i32_1 = arith.constant 0 : i32
    return %c0_i32, %c0_i32_0 : i32, i32
  }
  func.func @transform_7(%arg0: i32) -> (i32, i32) {
    %c0_i32 = arith.constant 0 : i32
    %c0_i32_0 = arith.constant 0 : i32
    %c0_i32_1 = arith.constant 0 : i32
    return %c0_i32, %c0_i32_0 : i32, i32
  }
}

module attributes {stable_mosaic.version = 11 : i64} {
  func.func @_lstm_chunk_kernel(%arg0: i32, %arg1: memref<8x8x128xf32, #tpu.memory_space<vmem>>, %arg2: memref<8x8x1xf32, #tpu.memory_space<vmem>>, %arg3: memref<8x32xf32, #tpu.memory_space<vmem>>, %arg4: memref<8x32xf32, #tpu.memory_space<vmem>>, %arg5: memref<32x128xf32, #tpu.memory_space<vmem>>, %arg6: memref<8x8x32xf32, #tpu.memory_space<vmem>>, %arg7: memref<8x32xf32, #tpu.memory_space<vmem>>, %arg8: memref<8x32xf32, #tpu.memory_space<vmem>>, %arg9: memref<8x32xf32, #tpu.memory_space<vmem>>, %arg10: memref<8x32xf32, #tpu.memory_space<vmem>>) attributes {dimension_semantics = [#tpu.dimension_semantics<arbitrary>], iteration_bounds = array<i64: 2>, scalar_prefetch = 0 : i64, scratch_operands = 2 : i64, tpu.core_type = #tpu.core_type<tc>, window_params = [{transform_indices = @transform_0, window_bounds = array<i64: 8, 8, 128>}, {transform_indices = @transform_1, window_bounds = array<i64: 8, 8, 1>}, {pipeline_mode = #tpu.pipeline_mode<synchronous>, transform_indices = @transform_2, window_bounds = array<i64: 8, 32>}, {pipeline_mode = #tpu.pipeline_mode<synchronous>, transform_indices = @transform_3, window_bounds = array<i64: 8, 32>}, {pipeline_mode = #tpu.pipeline_mode<synchronous>, transform_indices = @transform_4, window_bounds = array<i64: 32, 128>}, {transform_indices = @transform_5, window_bounds = array<i64: 8, 8, 32>}, {pipeline_mode = #tpu.pipeline_mode<synchronous>, transform_indices = @transform_6, window_bounds = array<i64: 8, 32>}, {pipeline_mode = #tpu.pipeline_mode<synchronous>, transform_indices = @transform_7, window_bounds = array<i64: 8, 32>}]} {
    %c0_i32 = arith.constant 0 : i32
    %0 = arith.cmpi eq, %arg0, %c0_i32 : i32
    %1 = arith.extui %0 : i1 to i32
    %c0_i32_0 = arith.constant 0 : i32
    %2 = arith.cmpi ne, %1, %c0_i32_0 : i32
    scf.if %2 {
      %c0_92 = arith.constant 0 : index
      %c0_93 = arith.constant 0 : index
      %387 = vector.load %arg3[%c0_92, %c0_93] : memref<8x32xf32, #tpu.memory_space<vmem>>, vector<8x32xf32>
      %c0_94 = arith.constant 0 : index
      %c0_95 = arith.constant 0 : index
      %388 = vector.load %arg9[%c0_94, %c0_95] : memref<8x32xf32, #tpu.memory_space<vmem>>, vector<8x32xf32>
      tpu.vector_store %arg9[%c0_94, %c0_95], %387 {strides = array<i32>} : memref<8x32xf32, #tpu.memory_space<vmem>>, vector<8x32xf32>,
      %c0_96 = arith.constant 0 : index
      %c0_97 = arith.constant 0 : index
      %389 = vector.load %arg4[%c0_96, %c0_97] : memref<8x32xf32, #tpu.memory_space<vmem>>, vector<8x32xf32>
      %c0_98 = arith.constant 0 : index
      %c0_99 = arith.constant 0 : index
      %390 = vector.load %arg10[%c0_98, %c0_99] : memref<8x32xf32, #tpu.memory_space<vmem>>, vector<8x32xf32>
      tpu.vector_store %arg10[%c0_98, %c0_99], %389 {strides = array<i32>} : memref<8x32xf32, #tpu.memory_space<vmem>>, vector<8x32xf32>,
    } else {
    }
    %c0 = arith.constant 0 : index
    %c0_1 = arith.constant 0 : index
    %3 = vector.load %arg5[%c0, %c0_1] : memref<32x128xf32, #tpu.memory_space<vmem>>, vector<32x128xf32>
    %c0_2 = arith.constant 0 : index
    %c0_3 = arith.constant 0 : index
    %4 = vector.load %arg9[%c0_2, %c0_3] : memref<8x32xf32, #tpu.memory_space<vmem>>, vector<8x32xf32>
    %c0_4 = arith.constant 0 : index
    %c0_5 = arith.constant 0 : index
    %5 = vector.load %arg10[%c0_4, %c0_5] : memref<8x32xf32, #tpu.memory_space<vmem>>, vector<8x32xf32>
    %c0_i32_6 = arith.constant 0 : i32
    %6 = arith.index_cast %c0_i32_6 : i32 to index
    %c0_7 = arith.constant 0 : index
    %c0_8 = arith.constant 0 : index
    %7 = vector.load %arg1[%6, %c0_7, %c0_8] : memref<8x8x128xf32, #tpu.memory_space<vmem>>, vector<1x8x128xf32>
    %8 = vector.shape_cast %7 : vector<1x8x128xf32> to vector<8x128xf32>
    %9 = arith.index_cast %c0_i32_6 : i32 to index
    %c0_9 = arith.constant 0 : index
    %c0_10 = arith.constant 0 : index
    %10 = vector.load %arg2[%9, %c0_9, %c0_10] : memref<8x8x1xf32, #tpu.memory_space<vmem>>, vector<1x8x1xf32>
    %11 = vector.shape_cast %10 : vector<1x8x1xf32> to vector<8x1xf32>
    %cst = arith.constant dense<0.000000e+00> : vector<8x128xf32>
    %12 = tpu.matmul %4, %3, %cst {dimension_numbers = #tpu.dot_dimension_numbers<[1], [0], [0], [1], [0, 0, 1, 1], [], []>} : vector<8x32xf32>, vector<32x128xf32>, vector<8x128xf32> -> vector<8x128xf32>
    %13 = arith.addf %8, %12 : vector<8x128xf32>
    %14 = vector.extract_strided_slice %13 {offsets = [0, 0], sizes = [8, 32], strides = [1, 1]} : vector<8x128xf32> to vector<8x32xf32>
    %15 = arith.negf %14 : vector<8x32xf32>
    %16 = math.exp %15 : vector<8x32xf32>
    %cst_11 = arith.constant 1.000000e+00 : f32
    %17 = vector.broadcast %cst_11 : f32 to vector<8x32xf32>
    %18 = arith.addf %17, %16 : vector<8x32xf32>
    %19 = arith.divf %17, %18 : vector<8x32xf32>
    %20 = vector.extract_strided_slice %13 {offsets = [0, 32], sizes = [8, 32], strides = [1, 1]} : vector<8x128xf32> to vector<8x32xf32>
    %21 = arith.negf %20 : vector<8x32xf32>
    %22 = math.exp %21 : vector<8x32xf32>
    %cst_12 = arith.constant 1.000000e+00 : f32
    %23 = vector.broadcast %cst_12 : f32 to vector<8x32xf32>
    %24 = arith.addf %23, %22 : vector<8x32xf32>
    %25 = arith.divf %23, %24 : vector<8x32xf32>
    %26 = vector.extract_strided_slice %13 {offsets = [0, 64], sizes = [8, 32], strides = [1, 1]} : vector<8x128xf32> to vector<8x32xf32>
    %27 = math.tanh %26 : vector<8x32xf32>
    %28 = vector.extract_strided_slice %13 {offsets = [0, 96], sizes = [8, 32], strides = [1, 1]} : vector<8x128xf32> to vector<8x32xf32>
    %29 = arith.negf %28 : vector<8x32xf32>
    %30 = math.exp %29 : vector<8x32xf32>
    %cst_13 = arith.constant 1.000000e+00 : f32
    %31 = vector.broadcast %cst_13 : f32 to vector<8x32xf32>
    %32 = arith.addf %31, %30 : vector<8x32xf32>
    %33 = arith.divf %31, %32 : vector<8x32xf32>
    %34 = arith.mulf %25, %5 : vector<8x32xf32>
    %35 = arith.mulf %19, %27 : vector<8x32xf32>
    %36 = arith.addf %34, %35 : vector<8x32xf32>
    %37 = math.tanh %36 : vector<8x32xf32>
    %38 = arith.mulf %33, %37 : vector<8x32xf32>
    %39 = arith.subf %38, %4 : vector<8x32xf32>
    %40 = vector.broadcast %11 : vector<8x1xf32> to vector<8x32xf32>
    %41 = arith.mulf %40, %39 : vector<8x32xf32>
    %42 = arith.addf %4, %41 : vector<8x32xf32>
    %43 = arith.subf %36, %5 : vector<8x32xf32>
    %44 = vector.broadcast %11 : vector<8x1xf32> to vector<8x32xf32>
    %45 = arith.mulf %44, %43 : vector<8x32xf32>
    %46 = arith.addf %5, %45 : vector<8x32xf32>
    %47 = vector.broadcast %11 : vector<8x1xf32> to vector<8x32xf32>
    %48 = arith.mulf %47, %38 : vector<8x32xf32>
    %49 = arith.index_cast %c0_i32_6 : i32 to index
    %c0_14 = arith.constant 0 : index
    %c0_15 = arith.constant 0 : index
    %50 = vector.load %arg6[%49, %c0_14, %c0_15] : memref<8x8x32xf32, #tpu.memory_space<vmem>>, vector<1x8x32xf32>
    %51 = vector.shape_cast %50 : vector<1x8x32xf32> to vector<8x32xf32>
    %52 = vector.shape_cast %48 : vector<8x32xf32> to vector<1x8x32xf32>
    tpu.vector_store %arg6[%49, %c0_14, %c0_15], %52 {strides = array<i32>} : memref<8x8x32xf32, #tpu.memory_space<vmem>>, vector<1x8x32xf32>,
    %c1_i32 = arith.constant 1 : i32
    %53 = arith.index_cast %c1_i32 : i32 to index
    %c0_16 = arith.constant 0 : index
    %c0_17 = arith.constant 0 : index
    %54 = vector.load %arg1[%53, %c0_16, %c0_17] : memref<8x8x128xf32, #tpu.memory_space<vmem>>, vector<1x8x128xf32>
    %55 = vector.shape_cast %54 : vector<1x8x128xf32> to vector<8x128xf32>
    %56 = arith.index_cast %c1_i32 : i32 to index
    %c0_18 = arith.constant 0 : index
    %c0_19 = arith.constant 0 : index
    %57 = vector.load %arg2[%56, %c0_18, %c0_19] : memref<8x8x1xf32, #tpu.memory_space<vmem>>, vector<1x8x1xf32>
    %58 = vector.shape_cast %57 : vector<1x8x1xf32> to vector<8x1xf32>
    %cst_20 = arith.constant dense<0.000000e+00> : vector<8x128xf32>
    %59 = tpu.matmul %42, %3, %cst_20 {dimension_numbers = #tpu.dot_dimension_numbers<[1], [0], [0], [1], [0, 0, 1, 1], [], []>} : vector<8x32xf32>, vector<32x128xf32>, vector<8x128xf32> -> vector<8x128xf32>
    %60 = arith.addf %55, %59 : vector<8x128xf32>
    %61 = vector.extract_strided_slice %60 {offsets = [0, 0], sizes = [8, 32], strides = [1, 1]} : vector<8x128xf32> to vector<8x32xf32>
    %62 = arith.negf %61 : vector<8x32xf32>
    %63 = math.exp %62 : vector<8x32xf32>
    %cst_21 = arith.constant 1.000000e+00 : f32
    %64 = vector.broadcast %cst_21 : f32 to vector<8x32xf32>
    %65 = arith.addf %64, %63 : vector<8x32xf32>
    %66 = arith.divf %64, %65 : vector<8x32xf32>
    %67 = vector.extract_strided_slice %60 {offsets = [0, 32], sizes = [8, 32], strides = [1, 1]} : vector<8x128xf32> to vector<8x32xf32>
    %68 = arith.negf %67 : vector<8x32xf32>
    %69 = math.exp %68 : vector<8x32xf32>
    %cst_22 = arith.constant 1.000000e+00 : f32
    %70 = vector.broadcast %cst_22 : f32 to vector<8x32xf32>
    %71 = arith.addf %70, %69 : vector<8x32xf32>
    %72 = arith.divf %70, %71 : vector<8x32xf32>
    %73 = vector.extract_strided_slice %60 {offsets = [0, 64], sizes = [8, 32], strides = [1, 1]} : vector<8x128xf32> to vector<8x32xf32>
    %74 = math.tanh %73 : vector<8x32xf32>
    %75 = vector.extract_strided_slice %60 {offsets = [0, 96], sizes = [8, 32], strides = [1, 1]} : vector<8x128xf32> to vector<8x32xf32>
    %76 = arith.negf %75 : vector<8x32xf32>
    %77 = math.exp %76 : vector<8x32xf32>
    %cst_23 = arith.constant 1.000000e+00 : f32
    %78 = vector.broadcast %cst_23 : f32 to vector<8x32xf32>
    %79 = arith.addf %78, %77 : vector<8x32xf32>
    %80 = arith.divf %78, %79 : vector<8x32xf32>
    %81 = arith.mulf %72, %46 : vector<8x32xf32>
    %82 = arith.mulf %66, %74 : vector<8x32xf32>
    %83 = arith.addf %81, %82 : vector<8x32xf32>
    %84 = math.tanh %83 : vector<8x32xf32>
    %85 = arith.mulf %80, %84 : vector<8x32xf32>
    %86 = arith.subf %85, %42 : vector<8x32xf32>
    %87 = vector.broadcast %58 : vector<8x1xf32> to vector<8x32xf32>
    %88 = arith.mulf %87, %86 : vector<8x32xf32>
    %89 = arith.addf %42, %88 : vector<8x32xf32>
    %90 = arith.subf %83, %46 : vector<8x32xf32>
    %91 = vector.broadcast %58 : vector<8x1xf32> to vector<8x32xf32>
    %92 = arith.mulf %91, %90 : vector<8x32xf32>
    %93 = arith.addf %46, %92 : vector<8x32xf32>
    %94 = vector.broadcast %58 : vector<8x1xf32> to vector<8x32xf32>
    %95 = arith.mulf %94, %85 : vector<8x32xf32>
    %96 = arith.index_cast %c1_i32 : i32 to index
    %c0_24 = arith.constant 0 : index
    %c0_25 = arith.constant 0 : index
    %97 = vector.load %arg6[%96, %c0_24, %c0_25] : memref<8x8x32xf32, #tpu.memory_space<vmem>>, vector<1x8x32xf32>
    %98 = vector.shape_cast %97 : vector<1x8x32xf32> to vector<8x32xf32>
    %99 = vector.shape_cast %95 : vector<8x32xf32> to vector<1x8x32xf32>
    tpu.vector_store %arg6[%96, %c0_24, %c0_25], %99 {strides = array<i32>} : memref<8x8x32xf32, #tpu.memory_space<vmem>>, vector<1x8x32xf32>,
    %c2_i32 = arith.constant 2 : i32
    %100 = arith.index_cast %c2_i32 : i32 to index
    %c0_26 = arith.constant 0 : index
    %c0_27 = arith.constant 0 : index
    %101 = vector.load %arg1[%100, %c0_26, %c0_27] : memref<8x8x128xf32, #tpu.memory_space<vmem>>, vector<1x8x128xf32>
    %102 = vector.shape_cast %101 : vector<1x8x128xf32> to vector<8x128xf32>
    %103 = arith.index_cast %c2_i32 : i32 to index
    %c0_28 = arith.constant 0 : index
    %c0_29 = arith.constant 0 : index
    %104 = vector.load %arg2[%103, %c0_28, %c0_29] : memref<8x8x1xf32, #tpu.memory_space<vmem>>, vector<1x8x1xf32>
    %105 = vector.shape_cast %104 : vector<1x8x1xf32> to vector<8x1xf32>
    %cst_30 = arith.constant dense<0.000000e+00> : vector<8x128xf32>
    %106 = tpu.matmul %89, %3, %cst_30 {dimension_numbers = #tpu.dot_dimension_numbers<[1], [0], [0], [1], [0, 0, 1, 1], [], []>} : vector<8x32xf32>, vector<32x128xf32>, vector<8x128xf32> -> vector<8x128xf32>
    %107 = arith.addf %102, %106 : vector<8x128xf32>
    %108 = vector.extract_strided_slice %107 {offsets = [0, 0], sizes = [8, 32], strides = [1, 1]} : vector<8x128xf32> to vector<8x32xf32>
    %109 = arith.negf %108 : vector<8x32xf32>
    %110 = math.exp %109 : vector<8x32xf32>
    %cst_31 = arith.constant 1.000000e+00 : f32
    %111 = vector.broadcast %cst_31 : f32 to vector<8x32xf32>
    %112 = arith.addf %111, %110 : vector<8x32xf32>
    %113 = arith.divf %111, %112 : vector<8x32xf32>
    %114 = vector.extract_strided_slice %107 {offsets = [0, 32], sizes = [8, 32], strides = [1, 1]} : vector<8x128xf32> to vector<8x32xf32>
    %115 = arith.negf %114 : vector<8x32xf32>
    %116 = math.exp %115 : vector<8x32xf32>
    %cst_32 = arith.constant 1.000000e+00 : f32
    %117 = vector.broadcast %cst_32 : f32 to vector<8x32xf32>
    %118 = arith.addf %117, %116 : vector<8x32xf32>
    %119 = arith.divf %117, %118 : vector<8x32xf32>
    %120 = vector.extract_strided_slice %107 {offsets = [0, 64], sizes = [8, 32], strides = [1, 1]} : vector<8x128xf32> to vector<8x32xf32>
    %121 = math.tanh %120 : vector<8x32xf32>
    %122 = vector.extract_strided_slice %107 {offsets = [0, 96], sizes = [8, 32], strides = [1, 1]} : vector<8x128xf32> to vector<8x32xf32>
    %123 = arith.negf %122 : vector<8x32xf32>
    %124 = math.exp %123 : vector<8x32xf32>
    %cst_33 = arith.constant 1.000000e+00 : f32
    %125 = vector.broadcast %cst_33 : f32 to vector<8x32xf32>
    %126 = arith.addf %125, %124 : vector<8x32xf32>
    %127 = arith.divf %125, %126 : vector<8x32xf32>
    %128 = arith.mulf %119, %93 : vector<8x32xf32>
    %129 = arith.mulf %113, %121 : vector<8x32xf32>
    %130 = arith.addf %128, %129 : vector<8x32xf32>
    %131 = math.tanh %130 : vector<8x32xf32>
    %132 = arith.mulf %127, %131 : vector<8x32xf32>
    %133 = arith.subf %132, %89 : vector<8x32xf32>
    %134 = vector.broadcast %105 : vector<8x1xf32> to vector<8x32xf32>
    %135 = arith.mulf %134, %133 : vector<8x32xf32>
    %136 = arith.addf %89, %135 : vector<8x32xf32>
    %137 = arith.subf %130, %93 : vector<8x32xf32>
    %138 = vector.broadcast %105 : vector<8x1xf32> to vector<8x32xf32>
    %139 = arith.mulf %138, %137 : vector<8x32xf32>
    %140 = arith.addf %93, %139 : vector<8x32xf32>
    %141 = vector.broadcast %105 : vector<8x1xf32> to vector<8x32xf32>
    %142 = arith.mulf %141, %132 : vector<8x32xf32>
    %143 = arith.index_cast %c2_i32 : i32 to index
    %c0_34 = arith.constant 0 : index
    %c0_35 = arith.constant 0 : index
    %144 = vector.load %arg6[%143, %c0_34, %c0_35] : memref<8x8x32xf32, #tpu.memory_space<vmem>>, vector<1x8x32xf32>
    %145 = vector.shape_cast %144 : vector<1x8x32xf32> to vector<8x32xf32>
    %146 = vector.shape_cast %142 : vector<8x32xf32> to vector<1x8x32xf32>
    tpu.vector_store %arg6[%143, %c0_34, %c0_35], %146 {strides = array<i32>} : memref<8x8x32xf32, #tpu.memory_space<vmem>>, vector<1x8x32xf32>,
    %c3_i32 = arith.constant 3 : i32
    %147 = arith.index_cast %c3_i32 : i32 to index
    %c0_36 = arith.constant 0 : index
    %c0_37 = arith.constant 0 : index
    %148 = vector.load %arg1[%147, %c0_36, %c0_37] : memref<8x8x128xf32, #tpu.memory_space<vmem>>, vector<1x8x128xf32>
    %149 = vector.shape_cast %148 : vector<1x8x128xf32> to vector<8x128xf32>
    %150 = arith.index_cast %c3_i32 : i32 to index
    %c0_38 = arith.constant 0 : index
    %c0_39 = arith.constant 0 : index
    %151 = vector.load %arg2[%150, %c0_38, %c0_39] : memref<8x8x1xf32, #tpu.memory_space<vmem>>, vector<1x8x1xf32>
    %152 = vector.shape_cast %151 : vector<1x8x1xf32> to vector<8x1xf32>
    %cst_40 = arith.constant dense<0.000000e+00> : vector<8x128xf32>
    %153 = tpu.matmul %136, %3, %cst_40 {dimension_numbers = #tpu.dot_dimension_numbers<[1], [0], [0], [1], [0, 0, 1, 1], [], []>} : vector<8x32xf32>, vector<32x128xf32>, vector<8x128xf32> -> vector<8x128xf32>
    %154 = arith.addf %149, %153 : vector<8x128xf32>
    %155 = vector.extract_strided_slice %154 {offsets = [0, 0], sizes = [8, 32], strides = [1, 1]} : vector<8x128xf32> to vector<8x32xf32>
    %156 = arith.negf %155 : vector<8x32xf32>
    %157 = math.exp %156 : vector<8x32xf32>
    %cst_41 = arith.constant 1.000000e+00 : f32
    %158 = vector.broadcast %cst_41 : f32 to vector<8x32xf32>
    %159 = arith.addf %158, %157 : vector<8x32xf32>
    %160 = arith.divf %158, %159 : vector<8x32xf32>
    %161 = vector.extract_strided_slice %154 {offsets = [0, 32], sizes = [8, 32], strides = [1, 1]} : vector<8x128xf32> to vector<8x32xf32>
    %162 = arith.negf %161 : vector<8x32xf32>
    %163 = math.exp %162 : vector<8x32xf32>
    %cst_42 = arith.constant 1.000000e+00 : f32
    %164 = vector.broadcast %cst_42 : f32 to vector<8x32xf32>
    %165 = arith.addf %164, %163 : vector<8x32xf32>
    %166 = arith.divf %164, %165 : vector<8x32xf32>
    %167 = vector.extract_strided_slice %154 {offsets = [0, 64], sizes = [8, 32], strides = [1, 1]} : vector<8x128xf32> to vector<8x32xf32>
    %168 = math.tanh %167 : vector<8x32xf32>
    %169 = vector.extract_strided_slice %154 {offsets = [0, 96], sizes = [8, 32], strides = [1, 1]} : vector<8x128xf32> to vector<8x32xf32>
    %170 = arith.negf %169 : vector<8x32xf32>
    %171 = math.exp %170 : vector<8x32xf32>
    %cst_43 = arith.constant 1.000000e+00 : f32
    %172 = vector.broadcast %cst_43 : f32 to vector<8x32xf32>
    %173 = arith.addf %172, %171 : vector<8x32xf32>
    %174 = arith.divf %172, %173 : vector<8x32xf32>
    %175 = arith.mulf %166, %140 : vector<8x32xf32>
    %176 = arith.mulf %160, %168 : vector<8x32xf32>
    %177 = arith.addf %175, %176 : vector<8x32xf32>
    %178 = math.tanh %177 : vector<8x32xf32>
    %179 = arith.mulf %174, %178 : vector<8x32xf32>
    %180 = arith.subf %179, %136 : vector<8x32xf32>
    %181 = vector.broadcast %152 : vector<8x1xf32> to vector<8x32xf32>
    %182 = arith.mulf %181, %180 : vector<8x32xf32>
    %183 = arith.addf %136, %182 : vector<8x32xf32>
    %184 = arith.subf %177, %140 : vector<8x32xf32>
    %185 = vector.broadcast %152 : vector<8x1xf32> to vector<8x32xf32>
    %186 = arith.mulf %185, %184 : vector<8x32xf32>
    %187 = arith.addf %140, %186 : vector<8x32xf32>
    %188 = vector.broadcast %152 : vector<8x1xf32> to vector<8x32xf32>
    %189 = arith.mulf %188, %179 : vector<8x32xf32>
    %190 = arith.index_cast %c3_i32 : i32 to index
    %c0_44 = arith.constant 0 : index
    %c0_45 = arith.constant 0 : index
    %191 = vector.load %arg6[%190, %c0_44, %c0_45] : memref<8x8x32xf32, #tpu.memory_space<vmem>>, vector<1x8x32xf32>
    %192 = vector.shape_cast %191 : vector<1x8x32xf32> to vector<8x32xf32>
    %193 = vector.shape_cast %189 : vector<8x32xf32> to vector<1x8x32xf32>
    tpu.vector_store %arg6[%190, %c0_44, %c0_45], %193 {strides = array<i32>} : memref<8x8x32xf32, #tpu.memory_space<vmem>>, vector<1x8x32xf32>,
    %c4_i32 = arith.constant 4 : i32
    %194 = arith.index_cast %c4_i32 : i32 to index
    %c0_46 = arith.constant 0 : index
    %c0_47 = arith.constant 0 : index
    %195 = vector.load %arg1[%194, %c0_46, %c0_47] : memref<8x8x128xf32, #tpu.memory_space<vmem>>, vector<1x8x128xf32>
    %196 = vector.shape_cast %195 : vector<1x8x128xf32> to vector<8x128xf32>
    %197 = arith.index_cast %c4_i32 : i32 to index
    %c0_48 = arith.constant 0 : index
    %c0_49 = arith.constant 0 : index
    %198 = vector.load %arg2[%197, %c0_48, %c0_49] : memref<8x8x1xf32, #tpu.memory_space<vmem>>, vector<1x8x1xf32>
    %199 = vector.shape_cast %198 : vector<1x8x1xf32> to vector<8x1xf32>
    %cst_50 = arith.constant dense<0.000000e+00> : vector<8x128xf32>
    %200 = tpu.matmul %183, %3, %cst_50 {dimension_numbers = #tpu.dot_dimension_numbers<[1], [0], [0], [1], [0, 0, 1, 1], [], []>} : vector<8x32xf32>, vector<32x128xf32>, vector<8x128xf32> -> vector<8x128xf32>
    %201 = arith.addf %196, %200 : vector<8x128xf32>
    %202 = vector.extract_strided_slice %201 {offsets = [0, 0], sizes = [8, 32], strides = [1, 1]} : vector<8x128xf32> to vector<8x32xf32>
    %203 = arith.negf %202 : vector<8x32xf32>
    %204 = math.exp %203 : vector<8x32xf32>
    %cst_51 = arith.constant 1.000000e+00 : f32
    %205 = vector.broadcast %cst_51 : f32 to vector<8x32xf32>
    %206 = arith.addf %205, %204 : vector<8x32xf32>
    %207 = arith.divf %205, %206 : vector<8x32xf32>
    %208 = vector.extract_strided_slice %201 {offsets = [0, 32], sizes = [8, 32], strides = [1, 1]} : vector<8x128xf32> to vector<8x32xf32>
    %209 = arith.negf %208 : vector<8x32xf32>
    %210 = math.exp %209 : vector<8x32xf32>
    %cst_52 = arith.constant 1.000000e+00 : f32
    %211 = vector.broadcast %cst_52 : f32 to vector<8x32xf32>
    %212 = arith.addf %211, %210 : vector<8x32xf32>
    %213 = arith.divf %211, %212 : vector<8x32xf32>
    %214 = vector.extract_strided_slice %201 {offsets = [0, 64], sizes = [8, 32], strides = [1, 1]} : vector<8x128xf32> to vector<8x32xf32>
    %215 = math.tanh %214 : vector<8x32xf32>
    %216 = vector.extract_strided_slice %201 {offsets = [0, 96], sizes = [8, 32], strides = [1, 1]} : vector<8x128xf32> to vector<8x32xf32>
    %217 = arith.negf %216 : vector<8x32xf32>
    %218 = math.exp %217 : vector<8x32xf32>
    %cst_53 = arith.constant 1.000000e+00 : f32
    %219 = vector.broadcast %cst_53 : f32 to vector<8x32xf32>
    %220 = arith.addf %219, %218 : vector<8x32xf32>
    %221 = arith.divf %219, %220 : vector<8x32xf32>
    %222 = arith.mulf %213, %187 : vector<8x32xf32>
    %223 = arith.mulf %207, %215 : vector<8x32xf32>
    %224 = arith.addf %222, %223 : vector<8x32xf32>
    %225 = math.tanh %224 : vector<8x32xf32>
    %226 = arith.mulf %221, %225 : vector<8x32xf32>
    %227 = arith.subf %226, %183 : vector<8x32xf32>
    %228 = vector.broadcast %199 : vector<8x1xf32> to vector<8x32xf32>
    %229 = arith.mulf %228, %227 : vector<8x32xf32>
    %230 = arith.addf %183, %229 : vector<8x32xf32>
    %231 = arith.subf %224, %187 : vector<8x32xf32>
    %232 = vector.broadcast %199 : vector<8x1xf32> to vector<8x32xf32>
    %233 = arith.mulf %232, %231 : vector<8x32xf32>
    %234 = arith.addf %187, %233 : vector<8x32xf32>
    %235 = vector.broadcast %199 : vector<8x1xf32> to vector<8x32xf32>
    %236 = arith.mulf %235, %226 : vector<8x32xf32>
    %237 = arith.index_cast %c4_i32 : i32 to index
    %c0_54 = arith.constant 0 : index
    %c0_55 = arith.constant 0 : index
    %238 = vector.load %arg6[%237, %c0_54, %c0_55] : memref<8x8x32xf32, #tpu.memory_space<vmem>>, vector<1x8x32xf32>
    %239 = vector.shape_cast %238 : vector<1x8x32xf32> to vector<8x32xf32>
    %240 = vector.shape_cast %236 : vector<8x32xf32> to vector<1x8x32xf32>
    tpu.vector_store %arg6[%237, %c0_54, %c0_55], %240 {strides = array<i32>} : memref<8x8x32xf32, #tpu.memory_space<vmem>>, vector<1x8x32xf32>,
    %c5_i32 = arith.constant 5 : i32
    %241 = arith.index_cast %c5_i32 : i32 to index
    %c0_56 = arith.constant 0 : index
    %c0_57 = arith.constant 0 : index
    %242 = vector.load %arg1[%241, %c0_56, %c0_57] : memref<8x8x128xf32, #tpu.memory_space<vmem>>, vector<1x8x128xf32>
    %243 = vector.shape_cast %242 : vector<1x8x128xf32> to vector<8x128xf32>
    %244 = arith.index_cast %c5_i32 : i32 to index
    %c0_58 = arith.constant 0 : index
    %c0_59 = arith.constant 0 : index
    %245 = vector.load %arg2[%244, %c0_58, %c0_59] : memref<8x8x1xf32, #tpu.memory_space<vmem>>, vector<1x8x1xf32>
    %246 = vector.shape_cast %245 : vector<1x8x1xf32> to vector<8x1xf32>
    %cst_60 = arith.constant dense<0.000000e+00> : vector<8x128xf32>
    %247 = tpu.matmul %230, %3, %cst_60 {dimension_numbers = #tpu.dot_dimension_numbers<[1], [0], [0], [1], [0, 0, 1, 1], [], []>} : vector<8x32xf32>, vector<32x128xf32>, vector<8x128xf32> -> vector<8x128xf32>
    %248 = arith.addf %243, %247 : vector<8x128xf32>
    %249 = vector.extract_strided_slice %248 {offsets = [0, 0], sizes = [8, 32], strides = [1, 1]} : vector<8x128xf32> to vector<8x32xf32>
    %250 = arith.negf %249 : vector<8x32xf32>
    %251 = math.exp %250 : vector<8x32xf32>
    %cst_61 = arith.constant 1.000000e+00 : f32
    %252 = vector.broadcast %cst_61 : f32 to vector<8x32xf32>
    %253 = arith.addf %252, %251 : vector<8x32xf32>
    %254 = arith.divf %252, %253 : vector<8x32xf32>
    %255 = vector.extract_strided_slice %248 {offsets = [0, 32], sizes = [8, 32], strides = [1, 1]} : vector<8x128xf32> to vector<8x32xf32>
    %256 = arith.negf %255 : vector<8x32xf32>
    %257 = math.exp %256 : vector<8x32xf32>
    %cst_62 = arith.constant 1.000000e+00 : f32
    %258 = vector.broadcast %cst_62 : f32 to vector<8x32xf32>
    %259 = arith.addf %258, %257 : vector<8x32xf32>
    %260 = arith.divf %258, %259 : vector<8x32xf32>
    %261 = vector.extract_strided_slice %248 {offsets = [0, 64], sizes = [8, 32], strides = [1, 1]} : vector<8x128xf32> to vector<8x32xf32>
    %262 = math.tanh %261 : vector<8x32xf32>
    %263 = vector.extract_strided_slice %248 {offsets = [0, 96], sizes = [8, 32], strides = [1, 1]} : vector<8x128xf32> to vector<8x32xf32>
    %264 = arith.negf %263 : vector<8x32xf32>
    %265 = math.exp %264 : vector<8x32xf32>
    %cst_63 = arith.constant 1.000000e+00 : f32
    %266 = vector.broadcast %cst_63 : f32 to vector<8x32xf32>
    %267 = arith.addf %266, %265 : vector<8x32xf32>
    %268 = arith.divf %266, %267 : vector<8x32xf32>
    %269 = arith.mulf %260, %234 : vector<8x32xf32>
    %270 = arith.mulf %254, %262 : vector<8x32xf32>
    %271 = arith.addf %269, %270 : vector<8x32xf32>
    %272 = math.tanh %271 : vector<8x32xf32>
    %273 = arith.mulf %268, %272 : vector<8x32xf32>
    %274 = arith.subf %273, %230 : vector<8x32xf32>
    %275 = vector.broadcast %246 : vector<8x1xf32> to vector<8x32xf32>
    %276 = arith.mulf %275, %274 : vector<8x32xf32>
    %277 = arith.addf %230, %276 : vector<8x32xf32>
    %278 = arith.subf %271, %234 : vector<8x32xf32>
    %279 = vector.broadcast %246 : vector<8x1xf32> to vector<8x32xf32>
    %280 = arith.mulf %279, %278 : vector<8x32xf32>
    %281 = arith.addf %234, %280 : vector<8x32xf32>
    %282 = vector.broadcast %246 : vector<8x1xf32> to vector<8x32xf32>
    %283 = arith.mulf %282, %273 : vector<8x32xf32>
    %284 = arith.index_cast %c5_i32 : i32 to index
    %c0_64 = arith.constant 0 : index
    %c0_65 = arith.constant 0 : index
    %285 = vector.load %arg6[%284, %c0_64, %c0_65] : memref<8x8x32xf32, #tpu.memory_space<vmem>>, vector<1x8x32xf32>
    %286 = vector.shape_cast %285 : vector<1x8x32xf32> to vector<8x32xf32>
    %287 = vector.shape_cast %283 : vector<8x32xf32> to vector<1x8x32xf32>
    tpu.vector_store %arg6[%284, %c0_64, %c0_65], %287 {strides = array<i32>} : memref<8x8x32xf32, #tpu.memory_space<vmem>>, vector<1x8x32xf32>,
    %c6_i32 = arith.constant 6 : i32
    %288 = arith.index_cast %c6_i32 : i32 to index
    %c0_66 = arith.constant 0 : index
    %c0_67 = arith.constant 0 : index
    %289 = vector.load %arg1[%288, %c0_66, %c0_67] : memref<8x8x128xf32, #tpu.memory_space<vmem>>, vector<1x8x128xf32>
    %290 = vector.shape_cast %289 : vector<1x8x128xf32> to vector<8x128xf32>
    %291 = arith.index_cast %c6_i32 : i32 to index
    %c0_68 = arith.constant 0 : index
    %c0_69 = arith.constant 0 : index
    %292 = vector.load %arg2[%291, %c0_68, %c0_69] : memref<8x8x1xf32, #tpu.memory_space<vmem>>, vector<1x8x1xf32>
    %293 = vector.shape_cast %292 : vector<1x8x1xf32> to vector<8x1xf32>
    %cst_70 = arith.constant dense<0.000000e+00> : vector<8x128xf32>
    %294 = tpu.matmul %277, %3, %cst_70 {dimension_numbers = #tpu.dot_dimension_numbers<[1], [0], [0], [1], [0, 0, 1, 1], [], []>} : vector<8x32xf32>, vector<32x128xf32>, vector<8x128xf32> -> vector<8x128xf32>
    %295 = arith.addf %290, %294 : vector<8x128xf32>
    %296 = vector.extract_strided_slice %295 {offsets = [0, 0], sizes = [8, 32], strides = [1, 1]} : vector<8x128xf32> to vector<8x32xf32>
    %297 = arith.negf %296 : vector<8x32xf32>
    %298 = math.exp %297 : vector<8x32xf32>
    %cst_71 = arith.constant 1.000000e+00 : f32
    %299 = vector.broadcast %cst_71 : f32 to vector<8x32xf32>
    %300 = arith.addf %299, %298 : vector<8x32xf32>
    %301 = arith.divf %299, %300 : vector<8x32xf32>
    %302 = vector.extract_strided_slice %295 {offsets = [0, 32], sizes = [8, 32], strides = [1, 1]} : vector<8x128xf32> to vector<8x32xf32>
    %303 = arith.negf %302 : vector<8x32xf32>
    %304 = math.exp %303 : vector<8x32xf32>
    %cst_72 = arith.constant 1.000000e+00 : f32
    %305 = vector.broadcast %cst_72 : f32 to vector<8x32xf32>
    %306 = arith.addf %305, %304 : vector<8x32xf32>
    %307 = arith.divf %305, %306 : vector<8x32xf32>
    %308 = vector.extract_strided_slice %295 {offsets = [0, 64], sizes = [8, 32], strides = [1, 1]} : vector<8x128xf32> to vector<8x32xf32>
    %309 = math.tanh %308 : vector<8x32xf32>
    %310 = vector.extract_strided_slice %295 {offsets = [0, 96], sizes = [8, 32], strides = [1, 1]} : vector<8x128xf32> to vector<8x32xf32>
    %311 = arith.negf %310 : vector<8x32xf32>
    %312 = math.exp %311 : vector<8x32xf32>
    %cst_73 = arith.constant 1.000000e+00 : f32
    %313 = vector.broadcast %cst_73 : f32 to vector<8x32xf32>
    %314 = arith.addf %313, %312 : vector<8x32xf32>
    %315 = arith.divf %313, %314 : vector<8x32xf32>
    %316 = arith.mulf %307, %281 : vector<8x32xf32>
    %317 = arith.mulf %301, %309 : vector<8x32xf32>
    %318 = arith.addf %316, %317 : vector<8x32xf32>
    %319 = math.tanh %318 : vector<8x32xf32>
    %320 = arith.mulf %315, %319 : vector<8x32xf32>
    %321 = arith.subf %320, %277 : vector<8x32xf32>
    %322 = vector.broadcast %293 : vector<8x1xf32> to vector<8x32xf32>
    %323 = arith.mulf %322, %321 : vector<8x32xf32>
    %324 = arith.addf %277, %323 : vector<8x32xf32>
    %325 = arith.subf %318, %281 : vector<8x32xf32>
    %326 = vector.broadcast %293 : vector<8x1xf32> to vector<8x32xf32>
    %327 = arith.mulf %326, %325 : vector<8x32xf32>
    %328 = arith.addf %281, %327 : vector<8x32xf32>
    %329 = vector.broadcast %293 : vector<8x1xf32> to vector<8x32xf32>
    %330 = arith.mulf %329, %320 : vector<8x32xf32>
    %331 = arith.index_cast %c6_i32 : i32 to index
    %c0_74 = arith.constant 0 : index
    %c0_75 = arith.constant 0 : index
    %332 = vector.load %arg6[%331, %c0_74, %c0_75] : memref<8x8x32xf32, #tpu.memory_space<vmem>>, vector<1x8x32xf32>
    %333 = vector.shape_cast %332 : vector<1x8x32xf32> to vector<8x32xf32>
    %334 = vector.shape_cast %330 : vector<8x32xf32> to vector<1x8x32xf32>
    tpu.vector_store %arg6[%331, %c0_74, %c0_75], %334 {strides = array<i32>} : memref<8x8x32xf32, #tpu.memory_space<vmem>>, vector<1x8x32xf32>,
    %c7_i32 = arith.constant 7 : i32
    %335 = arith.index_cast %c7_i32 : i32 to index
    %c0_76 = arith.constant 0 : index
    %c0_77 = arith.constant 0 : index
    %336 = vector.load %arg1[%335, %c0_76, %c0_77] : memref<8x8x128xf32, #tpu.memory_space<vmem>>, vector<1x8x128xf32>
    %337 = vector.shape_cast %336 : vector<1x8x128xf32> to vector<8x128xf32>
    %338 = arith.index_cast %c7_i32 : i32 to index
    %c0_78 = arith.constant 0 : index
    %c0_79 = arith.constant 0 : index
    %339 = vector.load %arg2[%338, %c0_78, %c0_79] : memref<8x8x1xf32, #tpu.memory_space<vmem>>, vector<1x8x1xf32>
    %340 = vector.shape_cast %339 : vector<1x8x1xf32> to vector<8x1xf32>
    %cst_80 = arith.constant dense<0.000000e+00> : vector<8x128xf32>
    %341 = tpu.matmul %324, %3, %cst_80 {dimension_numbers = #tpu.dot_dimension_numbers<[1], [0], [0], [1], [0, 0, 1, 1], [], []>} : vector<8x32xf32>, vector<32x128xf32>, vector<8x128xf32> -> vector<8x128xf32>
    %342 = arith.addf %337, %341 : vector<8x128xf32>
    %343 = vector.extract_strided_slice %342 {offsets = [0, 0], sizes = [8, 32], strides = [1, 1]} : vector<8x128xf32> to vector<8x32xf32>
    %344 = arith.negf %343 : vector<8x32xf32>
    %345 = math.exp %344 : vector<8x32xf32>
    %cst_81 = arith.constant 1.000000e+00 : f32
    %346 = vector.broadcast %cst_81 : f32 to vector<8x32xf32>
    %347 = arith.addf %346, %345 : vector<8x32xf32>
    %348 = arith.divf %346, %347 : vector<8x32xf32>
    %349 = vector.extract_strided_slice %342 {offsets = [0, 32], sizes = [8, 32], strides = [1, 1]} : vector<8x128xf32> to vector<8x32xf32>
    %350 = arith.negf %349 : vector<8x32xf32>
    %351 = math.exp %350 : vector<8x32xf32>
    %cst_82 = arith.constant 1.000000e+00 : f32
    %352 = vector.broadcast %cst_82 : f32 to vector<8x32xf32>
    %353 = arith.addf %352, %351 : vector<8x32xf32>
    %354 = arith.divf %352, %353 : vector<8x32xf32>
    %355 = vector.extract_strided_slice %342 {offsets = [0, 64], sizes = [8, 32], strides = [1, 1]} : vector<8x128xf32> to vector<8x32xf32>
    %356 = math.tanh %355 : vector<8x32xf32>
    %357 = vector.extract_strided_slice %342 {offsets = [0, 96], sizes = [8, 32], strides = [1, 1]} : vector<8x128xf32> to vector<8x32xf32>
    %358 = arith.negf %357 : vector<8x32xf32>
    %359 = math.exp %358 : vector<8x32xf32>
    %cst_83 = arith.constant 1.000000e+00 : f32
    %360 = vector.broadcast %cst_83 : f32 to vector<8x32xf32>
    %361 = arith.addf %360, %359 : vector<8x32xf32>
    %362 = arith.divf %360, %361 : vector<8x32xf32>
    %363 = arith.mulf %354, %328 : vector<8x32xf32>
    %364 = arith.mulf %348, %356 : vector<8x32xf32>
    %365 = arith.addf %363, %364 : vector<8x32xf32>
    %366 = math.tanh %365 : vector<8x32xf32>
    %367 = arith.mulf %362, %366 : vector<8x32xf32>
    %368 = arith.subf %367, %324 : vector<8x32xf32>
    %369 = vector.broadcast %340 : vector<8x1xf32> to vector<8x32xf32>
    %370 = arith.mulf %369, %368 : vector<8x32xf32>
    %371 = arith.addf %324, %370 : vector<8x32xf32>
    %372 = arith.subf %365, %328 : vector<8x32xf32>
    %373 = vector.broadcast %340 : vector<8x1xf32> to vector<8x32xf32>
    %374 = arith.mulf %373, %372 : vector<8x32xf32>
    %375 = arith.addf %328, %374 : vector<8x32xf32>
    %376 = vector.broadcast %340 : vector<8x1xf32> to vector<8x32xf32>
    %377 = arith.mulf %376, %367 : vector<8x32xf32>
    %378 = arith.index_cast %c7_i32 : i32 to index
    %c0_84 = arith.constant 0 : index
    %c0_85 = arith.constant 0 : index
    %379 = vector.load %arg6[%378, %c0_84, %c0_85] : memref<8x8x32xf32, #tpu.memory_space<vmem>>, vector<1x8x32xf32>
    %380 = vector.shape_cast %379 : vector<1x8x32xf32> to vector<8x32xf32>
    %381 = vector.shape_cast %377 : vector<8x32xf32> to vector<1x8x32xf32>
    tpu.vector_store %arg6[%378, %c0_84, %c0_85], %381 {strides = array<i32>} : memref<8x8x32xf32, #tpu.memory_space<vmem>>, vector<1x8x32xf32>,
    %c8_i32 = arith.constant 8 : i32
    %c0_86 = arith.constant 0 : index
    %c0_87 = arith.constant 0 : index
    %382 = vector.load %arg9[%c0_86, %c0_87] : memref<8x32xf32, #tpu.memory_space<vmem>>, vector<8x32xf32>
    tpu.vector_store %arg9[%c0_86, %c0_87], %371 {strides = array<i32>} : memref<8x32xf32, #tpu.memory_space<vmem>>, vector<8x32xf32>,
    %c0_88 = arith.constant 0 : index
    %c0_89 = arith.constant 0 : index
    %383 = vector.load %arg10[%c0_88, %c0_89] : memref<8x32xf32, #tpu.memory_space<vmem>>, vector<8x32xf32>
    tpu.vector_store %arg10[%c0_88, %c0_89], %375 {strides = array<i32>} : memref<8x32xf32, #tpu.memory_space<vmem>>, vector<8x32xf32>,
    %c1_i32_90 = arith.constant 1 : i32
    %384 = arith.cmpi eq, %arg0, %c1_i32_90 : i32
    %385 = arith.extui %384 : i1 to i32
    %c0_i32_91 = arith.constant 0 : i32
    %386 = arith.cmpi ne, %385, %c0_i32_91 : i32
    scf.if %386 {
      %c0_92 = arith.constant 0 : index
      %c0_93 = arith.constant 0 : index
      %387 = vector.load %arg7[%c0_92, %c0_93] : memref<8x32xf32, #tpu.memory_space<vmem>>, vector<8x32xf32>
      tpu.vector_store %arg7[%c0_92, %c0_93], %371 {strides = array<i32>} : memref<8x32xf32, #tpu.memory_space<vmem>>, vector<8x32xf32>,
      %c0_94 = arith.constant 0 : index
      %c0_95 = arith.constant 0 : index
      %388 = vector.load %arg8[%c0_94, %c0_95] : memref<8x32xf32, #tpu.memory_space<vmem>>, vector<8x32xf32>
      tpu.vector_store %arg8[%c0_94, %c0_95], %375 {strides = array<i32>} : memref<8x32xf32, #tpu.memory_space<vmem>>, vector<8x32xf32>,
    } else {
    }
    return
  }
  func.func @transform_0(%arg0: i32) -> (i32, i32, i32) {
    %c0_i32 = arith.constant 0 : i32
    %c0_i32_0 = arith.constant 0 : i32
    %c0_i32_1 = arith.constant 0 : i32
    return %arg0, %c0_i32, %c0_i32_0 : i32, i32, i32
  }
  func.func @transform_1(%arg0: i32) -> (i32, i32, i32) {
    %c0_i32 = arith.constant 0 : i32
    %c0_i32_0 = arith.constant 0 : i32
    %c0_i32_1 = arith.constant 0 : i32
    return %arg0, %c0_i32, %c0_i32_0 : i32, i32, i32
  }
  func.func @transform_2(%arg0: i32) -> (i32, i32) {
    %c0_i32 = arith.constant 0 : i32
    %c0_i32_0 = arith.constant 0 : i32
    %c0_i32_1 = arith.constant 0 : i32
    return %c0_i32, %c0_i32_0 : i32, i32
  }
  func.func @transform_3(%arg0: i32) -> (i32, i32) {
    %c0_i32 = arith.constant 0 : i32
    %c0_i32_0 = arith.constant 0 : i32
    %c0_i32_1 = arith.constant 0 : i32
    return %c0_i32, %c0_i32_0 : i32, i32
  }
  func.func @transform_4(%arg0: i32) -> (i32, i32) {
    %c0_i32 = arith.constant 0 : i32
    %c0_i32_0 = arith.constant 0 : i32
    %c0_i32_1 = arith.constant 0 : i32
    return %c0_i32, %c0_i32_0 : i32, i32
  }
  func.func @transform_5(%arg0: i32) -> (i32, i32, i32) {
    %c0_i32 = arith.constant 0 : i32
    %c0_i32_0 = arith.constant 0 : i32
    %c0_i32_1 = arith.constant 0 : i32
    return %arg0, %c0_i32, %c0_i32_0 : i32, i32, i32
  }
  func.func @transform_6(%arg0: i32) -> (i32, i32) {
    %c0_i32 = arith.constant 0 : i32
    %c0_i32_0 = arith.constant 0 : i32
    %c0_i32_1 = arith.constant 0 : i32
    return %c0_i32, %c0_i32_0 : i32, i32
  }
  func.func @transform_7(%arg0: i32) -> (i32, i32) {
    %c0_i32 = arith.constant 0 : i32
    %c0_i32_0 = arith.constant 0 : i32
    %c0_i32_1 = arith.constant 0 : i32
    return %c0_i32, %c0_i32_0 : i32, i32
  }
}

</mosaic_0001>

<llo_original>
// kernel: tpu_custom_call.1
$region0: #{tpu_custom_call.1}
  #allocation0 [shape = 'u32[]', space=smem, size = 0x4, offset = 0x4, fixed_abs, tag = 'smem constant byte address 0x4 - core index']
  #allocation1 [shape = 'u32[144,128]{1,0:T(1,128)}', space=vmem, size = 0x12000, scoped, tag = 'internal scratch']
  #allocation2 [shape = 'f32[8,32]{1,0:T(8,128)}', space=vmem, size = 0x1000, scoped, tag = 'scratch operand']
  #allocation3 [shape = 'f32[8,32]{1,0:T(8,128)}', space=vmem, size = 0x1000, scoped, tag = 'scratch operand']
  %s0 = inlined_call_operand.vmem [shape: f32[16,8,128], index: 0, kind: input, shape index: {}]
  %s1 = inlined_call_operand.vmem [shape: f32[16,8,1], index: 1, kind: input, shape index: {}]
  %s2 = inlined_call_operand.vmem [shape: f32[8,32], index: 2, kind: input, shape index: {}]
  %s3 = inlined_call_operand.hbm [shape: f32[8,32], index: 3, kind: input, shape index: {}]
  %s4 = inlined_call_operand.hbm [shape: f32[32,128], index: 4, kind: input, shape index: {}]
  %s5 = inlined_call_operand.hbm [shape: f32[16,8,32], index: 5, kind: output, shape index: {0}]
  %s6 = inlined_call_operand.hbm [shape: f32[8,32], index: 6, kind: output, shape index: {1}]
  %s7 = inlined_call_operand.hbm [shape: f32[8,32], index: 7, kind: output, shape index: {2}]
  %8 = xla_tuple %s5, %s6, %s7
  %s9 = sld [smem:[#allocation0]]
  $region85: #{tpu_custom_call.1} parent=0
    _
  %s11 = ssub.s32 1, %s9
  %s12 = scalar_select 0, %s11, %s9
  $region1: #{tpu_custom_call.1} parent=0
    #allocation4 [shape = 'u8[4096]{0}', space=vmem, size = 0x1000, scoped, tag = 'input window, operand 3, single buffered']
    #allocation5 [shape = 's32[2]{0}', space=sflag, size = 0x8, scoped, tag = 'scoped memory for tpu_custom_call.1']
    #allocation6 [shape = 's32[2]{0}', space=sflag, size = 0x8, scoped, tag = 'scoped memory for tpu_custom_call.1']
    #allocation7 [shape = 'u8[16384]{0}', space=vmem, size = 0x4000, scoped, tag = 'input window, operand 4, single buffered']
    #allocation8 [shape = 's32[1]{0}', space=sflag, size = 0x4, scoped, tag = 'scoped memory for tpu_custom_call.1']
    #allocation9 [shape = 'u8[65536]{0}', space=vmem, size = 0x10000, scoped, tag = 'output window, operand 0']
    #allocation10 [shape = 'u8[4096]{0}', space=vmem, size = 0x1000, scoped, tag = 'output window, operand 1, single buffered']
    #allocation11 [shape = 's32[1]{0}', space=sflag, size = 0x4, scoped, tag = 'scoped memory for tpu_custom_call.1']
    #allocation12 [shape = 'u8[4096]{0}', space=vmem, size = 0x1000, scoped, tag = 'output window, operand 2, single buffered']
    %13 = vsyncpa [#allocation5], 0
    %14 = vsyncpa [#allocation8], 0
    %15 = vsyncpa [#allocation6], 0
    %s16 = scalar_lea.sflag [#allocation6], 1
    %17 = vsyncpa %s16, 0
    %18 = vsyncpa [#allocation11], 0
    loop: start=0, step=1, limit=4
    $region2: #{tpu_custom_call.1} parent=1 // loop_pre_header
      _
    $region3: #{tpu_custom_call.1} parent=1 // loop_header
      %s20 = sphi 0, %s24
      %p21 = scmp.ge.s32.totalorder %s20, 4
      %s30 = sphi 0, %s32
      %s33 = sphi 0, %s30
      %s34 = sphi 0, %s33
      %s50 = sphi 0, %s34
      %s56 = sphi 0, %s58
      %s59 = sphi 0, %s56
      %s60 = sphi 0, %s59
      %s76 = sphi 0, %s60
      %s80 = sphi 0, %s80
      %s82 = sphi 0, %s80
      %s83 = sphi 0, %s82
      %s97 = sphi 0, %s83
      %s101 = sphi 0, %s101
      %s103 = sphi 0, %s101
      %s104 = sphi 0, %s103
      %s118 = sphi 0, %s104
      %s122 = sphi 0, %s122
      %s124 = sphi 0, %s122
      %s125 = sphi 0, %s124
      %s139 = sphi 0, %s125
      %s145 = sphi 0, %s147
      %s148 = sphi 0, %s145
      %s149 = sphi 0, %s148
      %s165 = sphi 0, %s149
      %s169 = sphi 0, %s169
      %s171 = sphi 0, %s169
      %s172 = sphi 0, %s171
      %s186 = sphi 0, %s172
      %s190 = sphi 0, %s190
      %s192 = sphi 0, %s190
      %s193 = sphi 0, %s192
      %s207 = sphi 0, %s193
    $region4: #{tpu_custom_call.1} parent=1 // loop_header_branch
      %23 = sbr.rel (%p21) target = $region8
    $region5: #{tpu_custom_call.1} parent=1 // loop_body
      %s25 = ssub.s32 %s20, 1
      %s26 = ssub.s32 %s20, 2
      %s27 = sadd.s32 %s20, 1
      %s28 = ssub.s32 %s20, %s27
      %p29 = scmp.eq.s32.totalorder %s28, 0
      %s31 = sadd.s32 %s30, 1
      %s32 = scalar_select %p29, %s30, %s31
      %p35 = pneg %p29
      %p36 = scmp.eq.s32.totalorder %s20, 1
      %p37 = por %p35, %p36
      %p38 = scmp.ne.s32.totalorder %s30, %s33
      %p39 = scmp.eq.s32.totalorder %s20, 0
      %p40 = por %p38, %p39
      %p41 = scmp.ne.s32.totalorder %s30, %s33
      %p42 = scmp.eq.s32.totalorder %s25, 1
      %p43 = por %p41, %p42
      %p44 = scmp.ne.s32.totalorder %s33, %s34
      %p45 = scmp.eq.s32.totalorder %s25, 0
      %p46 = por %p44, %p45
      %p47 = scmp.ne.s32.totalorder %s33, %s34
      %p48 = scmp.eq.s32.totalorder %s26, 1
      %p49 = por %p47, %p48
      %p51 = scmp.ne.s32.totalorder %s34, %s50
      %p52 = scmp.eq.s32.totalorder %s26, 0
      %p53 = por %p51, %p52
      %s54 = ssub.s32 %s20, %s27
      %p55 = scmp.eq.s32.totalorder %s54, 0
      %s57 = sadd.s32 %s56, 1
      %s58 = scalar_select %p55, %s56, %s57
      %p61 = pneg %p55
      %p62 = scmp.eq.s32.totalorder %s20, 1
      %p63 = por %p61, %p62
      %p64 = scmp.ne.s32.totalorder %s56, %s59
      %p65 = scmp.eq.s32.totalorder %s20, 0
      %p66 = por %p64, %p65
      %p67 = scmp.ne.s32.totalorder %s56, %s59
      %p68 = scmp.eq.s32.totalorder %s25, 1
      %p69 = por %p67, %p68
      %p70 = scmp.ne.s32.totalorder %s59, %s60
      %p71 = scmp.eq.s32.totalorder %s25, 0
      %p72 = por %p70, %p71
      %p73 = scmp.ne.s32.totalorder %s59, %s60
      %p74 = scmp.eq.s32.totalorder %s26, 1
      %p75 = por %p73, %p74
      %p77 = scmp.ne.s32.totalorder %s60, %s76
      %p78 = scmp.eq.s32.totalorder %s26, 0
      %p79 = por %p77, %p78
      %s81 = sadd.s32 %s80, 1
      %p84 = scmp.eq.s32.totalorder %s20, 1
      %p85 = scmp.ne.s32.totalorder %s80, %s82
      %p86 = scmp.eq.s32.totalorder %s20, 0
      %p87 = por %p85, %p86
      %p88 = scmp.ne.s32.totalorder %s80, %s82
      %p89 = scmp.eq.s32.totalorder %s25, 1
      %p90 = por %p88, %p89
      %p91 = scmp.ne.s32.totalorder %s82, %s83
      %p92 = scmp.eq.s32.totalorder %s25, 0
      %p93 = por %p91, %p92
      %p94 = scmp.ne.s32.totalorder %s82, %s83
      %p95 = scmp.eq.s32.totalorder %s26, 1
      %p96 = por %p94, %p95
      %p98 = scmp.ne.s32.totalorder %s83, %s97
      %p99 = scmp.eq.s32.totalorder %s26, 0
      %p100 = por %p98, %p99
      %s102 = sadd.s32 %s101, 1
      %p105 = scmp.eq.s32.totalorder %s20, 1
      %p106 = scmp.ne.s32.totalorder %s101, %s103
      %p107 = scmp.eq.s32.totalorder %s20, 0
      %p108 = por %p106, %p107
      %p109 = scmp.ne.s32.totalorder %s101, %s103
      %p110 = scmp.eq.s32.totalorder %s25, 1
      %p111 = por %p109, %p110
      %p112 = scmp.ne.s32.totalorder %s103, %s104
      %p113 = scmp.eq.s32.totalorder %s25, 0
      %p114 = por %p112, %p113
      %p115 = scmp.ne.s32.totalorder %s103, %s104
      %p116 = scmp.eq.s32.totalorder %s26, 1
      %p117 = por %p115, %p116
      %p119 = scmp.ne.s32.totalorder %s104, %s118
      %p120 = scmp.eq.s32.totalorder %s26, 0
      %p121 = por %p119, %p120
      %s123 = sadd.s32 %s122, 1
      %p126 = scmp.eq.s32.totalorder %s20, 1
      %p127 = scmp.ne.s32.totalorder %s122, %s124
      %p128 = scmp.eq.s32.totalorder %s20, 0
      %p129 = por %p127, %p128
      %p130 = scmp.ne.s32.totalorder %s122, %s124
      %p131 = scmp.eq.s32.totalorder %s25, 1
      %p132 = por %p130, %p131
      %p133 = scmp.ne.s32.totalorder %s124, %s125
      %p134 = scmp.eq.s32.totalorder %s25, 0
      %p135 = por %p133, %p134
      %p136 = scmp.ne.s32.totalorder %s124, %s125
      %p137 = scmp.eq.s32.totalorder %s26, 1
      %p138 = por %p136, %p137
      %p140 = scmp.ne.s32.totalorder %s125, %s139
      %p141 = scmp.eq.s32.totalorder %s26, 0
      %p142 = por %p140, %p141
      %s143 = ssub.s32 %s20, %s27
      %p144 = scmp.eq.s32.totalorder %s143, 0
      %s146 = sadd.s32 %s145, 1
      %s147 = scalar_select %p144, %s145, %s146
      %p150 = pneg %p144
      %p151 = scmp.eq.s32.totalorder %s20, 1
      %p152 = por %p150, %p151
      %p153 = scmp.ne.s32.totalorder %s145, %s148
      %p154 = scmp.eq.s32.totalorder %s20, 0
      %p155 = por %p153, %p154
      %p156 = scmp.ne.s32.totalorder %s145, %s148
      %p157 = scmp.eq.s32.totalorder %s25, 1
      %p158 = por %p156, %p157
      %p159 = scmp.ne.s32.totalorder %s148, %s149
      %p160 = scmp.eq.s32.totalorder %s25, 0
      %p161 = por %p159, %p160
      %p162 = scmp.ne.s32.totalorder %s148, %s149
      %p163 = scmp.eq.s32.totalorder %s26, 1
      %p164 = por %p162, %p163
      %p166 = scmp.ne.s32.totalorder %s149, %s165
      %p167 = scmp.eq.s32.totalorder %s26, 0
      %p168 = por %p166, %p167
      %s170 = sadd.s32 %s169, 1
      %p173 = scmp.eq.s32.totalorder %s20, 1
      %p174 = scmp.ne.s32.totalorder %s169, %s171
      %p175 = scmp.eq.s32.totalorder %s20, 0
      %p176 = por %p174, %p175
      %p177 = scmp.ne.s32.totalorder %s169, %s171
      %p178 = scmp.eq.s32.totalorder %s25, 1
      %p179 = por %p177, %p178
      %p180 = scmp.ne.s32.totalorder %s171, %s172
      %p181 = scmp.eq.s32.totalorder %s25, 0
      %p182 = por %p180, %p181
      %p183 = scmp.ne.s32.totalorder %s171, %s172
      %p184 = scmp.eq.s32.totalorder %s26, 1
      %p185 = por %p183, %p184
      %p187 = scmp.ne.s32.totalorder %s172, %s186
      %p188 = scmp.eq.s32.totalorder %s26, 0
      %p189 = por %p187, %p188
      %s191 = sadd.s32 %s190, 1
      %p194 = scmp.eq.s32.totalorder %s20, 1
      %p195 = scmp.ne.s32.totalorder %s190, %s192
      %p196 = scmp.eq.s32.totalorder %s20, 0
      %p197 = por %p195, %p196
      %p198 = scmp.ne.s32.totalorder %s190, %s192
      %p199 = scmp.eq.s32.totalorder %s25, 1
      %p200 = por %p198, %p199
      %p201 = scmp.ne.s32.totalorder %s192, %s193
      %p202 = scmp.eq.s32.totalorder %s25, 0
      %p203 = por %p201, %p202
      %p204 = scmp.ne.s32.totalorder %s192, %s193
      %p205 = scmp.eq.s32.totalorder %s26, 1
      %p206 = por %p204, %p205
      %p208 = scmp.ne.s32.totalorder %s193, %s207
      %p209 = scmp.eq.s32.totalorder %s26, 0
      %p210 = por %p208, %p209
      %p211 = scmp.le.s32.totalorder 1, %s20
      %p212 = scmp.lt.s32.totalorder %s20, 3
      %p213 = pnand %p211, %p212
      %p214 = pneg %p213
      // Predicated region
      $region9: #{tpu_custom_call.1} parent=5 // pred_check
        _
      $region10: #{tpu_custom_call.1} parent=5 // pred_check_branch
        %216 = sbr.rel (%p213) target = $region12
      $region11: #{tpu_custom_call.1} parent=5 // pred_region
        %s217 = ssub.s32 %s20, 1
        // Predicated region
        $region13: #{tpu_custom_call.1} parent=11 // pred_check
          %p218 = pneg %p93
        $region14: #{tpu_custom_call.1} parent=11 // pred_check_branch
          %220 = sbr.rel (%p218) target = $region16
        $region15: #{tpu_custom_call.1} parent=11 // pred_region
          _
        $region16: #{tpu_custom_call.1} parent=11 // pred_fallthru
          _
        // Predicated region
        $region17: #{tpu_custom_call.1} parent=11 // pred_check
          %p221 = pneg %p114
        $region18: #{tpu_custom_call.1} parent=11 // pred_check_branch
          %223 = sbr.rel (%p221) target = $region20
        $region19: #{tpu_custom_call.1} parent=11 // pred_region
          %s225 = ssub.s32 128, 128
          %226 = vsyncadd [#allocation5], %s225
          %s228 = sshll.u32 [#allocation4], 4
          %s229 = int_to_ptr.vmem [resolvable:$true] %s228
          %231 = dma.hbm_to_vmem [thread:$0]  %s3, 128, %s229, [#allocation5]
        $region20: #{tpu_custom_call.1} parent=11 // pred_fallthru
          _
        // Predicated region
        $region21: #{tpu_custom_call.1} parent=11 // pred_check
          %p232 = pneg %p135
        $region22: #{tpu_custom_call.1} parent=11 // pred_check_branch
          %234 = sbr.rel (%p232) target = $region24
        $region23: #{tpu_custom_call.1} parent=11 // pred_region
          %s236 = ssub.s32 512, 512
          %237 = vsyncadd [#allocation8], %s236
          %s238 = sshll.u32 [#allocation7], 4
          %s239 = int_to_ptr.vmem [resolvable:$true] %s238
          %244 = dma.hbm_to_vmem [thread:$0]  %s4, 512, %s239, [#allocation8], 128, 128, 8
        $region24: #{tpu_custom_call.1} parent=11 // pred_fallthru
          _
      $region12: #{tpu_custom_call.1} parent=5 // pred_fallthru
        _
      %p245 = scmp.lt.s32.totalorder %s20, 2
      // Predicated region
      $region25: #{tpu_custom_call.1} parent=5 // pred_check
        %p246 = pneg %p245
      $region26: #{tpu_custom_call.1} parent=5 // pred_check_branch
        %248 = sbr.rel (%p246) target = $region28
      $region27: #{tpu_custom_call.1} parent=5 // pred_region
        // Predicated region
        $region29: #{tpu_custom_call.1} parent=27 // pred_check
          %p249 = pneg %p40
        $region30: #{tpu_custom_call.1} parent=27 // pred_check_branch
          %251 = sbr.rel (%p249) target = $region32
        $region31: #{tpu_custom_call.1} parent=27 // pred_region
          %s252 = smul.u32 8, %s20
          %p253 = scmp.lt.s32.totalorder %s252, 15
          %s254 = scalar_select %p253, %s252, 15
          %s255 = smul.addr %s254, 8
          %s256 = scalar_lea.vmem %s0, %s255
          %s257 = smul.u32 8, %s20
        $region32: #{tpu_custom_call.1} parent=27 // pred_fallthru
          _
        // Predicated region
        $region33: #{tpu_custom_call.1} parent=27 // pred_check
          %p258 = pneg %p66
        $region34: #{tpu_custom_call.1} parent=27 // pred_check_branch
          %260 = sbr.rel (%p258) target = $region36
        $region35: #{tpu_custom_call.1} parent=27 // pred_region
          %s261 = smul.u32 8, %s20
          %p262 = scmp.lt.s32.totalorder %s261, 15
          %s263 = scalar_select %p262, %s261, 15
          %s264 = smul.addr %s263, 8
          %s265 = scalar_lea.vmem %s1, %s264
          %s266 = smul.u32 8, %s20
        $region36: #{tpu_custom_call.1} parent=27 // pred_fallthru
          _
      $region28: #{tpu_custom_call.1} parent=5 // pred_fallthru
        _
      %p267 = scmp.le.s32.totalorder 1, %s20
      %p268 = scmp.lt.s32.totalorder %s20, 3
      %p269 = pnand %p267, %p268
      %p270 = pneg %p269
      // Predicated region
      $region37: #{tpu_custom_call.1} parent=5 // pred_check
        _
      $region38: #{tpu_custom_call.1} parent=5 // pred_check_branch
        %272 = sbr.rel (%p269) target = $region40
      $region39: #{tpu_custom_call.1} parent=5 // pred_region
        %s273 = ssub.s32 %s20, 1
        // Predicated region
        $region41: #{tpu_custom_call.1} parent=39 // pred_check
          %p274 = pneg %p114
        $region42: #{tpu_custom_call.1} parent=39 // pred_check_branch
          %276 = sbr.rel (%p274) target = $region44
        $region43: #{tpu_custom_call.1} parent=39 // pred_region
          %277 = dma.done [#allocation5], 128
        $region44: #{tpu_custom_call.1} parent=39 // pred_fallthru
          _
        // Predicated region
        $region45: #{tpu_custom_call.1} parent=39 // pred_check
          %p278 = pneg %p135
        $region46: #{tpu_custom_call.1} parent=39 // pred_check_branch
          %280 = sbr.rel (%p278) target = $region48
        $region47: #{tpu_custom_call.1} parent=39 // pred_region
          %281 = dma.done [#allocation8], 512
        $region48: #{tpu_custom_call.1} parent=39 // pred_fallthru
          _
        %s282 = smul.u32 8, %s25
        %p283 = scmp.lt.s32.totalorder %s282, 15
        %s284 = scalar_select %p283, %s282, 15
        %s285 = smul.addr %s284, 8
        %s286 = scalar_lea.vmem %s0, %s285
        %p287 = pneg %p46
        %p288 = pneg %p43
        %s289 = smul.u32 8, %s25
        %p290 = scmp.lt.s32.totalorder %s289, 15
        %s291 = scalar_select %p290, %s289, 15
        %s292 = smul.addr %s291, 8
        %s293 = scalar_lea.vmem %s1, %s292
        %p294 = pneg %p72
        %p295 = pneg %p69
        %p296 = pneg %p93
        %p297 = pneg %p90
        %p298 = pneg %p114
        %p299 = pneg %p111
        %p300 = pneg %p135
        %p301 = pneg %p132
        %p302 = pneg %p161
        %p303 = pneg %p158
        %s304 = sand.u32 %s148, 1
        %s305 = scalar_lea.sflag [#allocation6], %s304
        %s306 = sand.u32 %s148, 1
        %s307 = smul.addr %s306, 64
        %s308 = scalar_lea.vmem [#allocation9], %s307
        %p309 = pneg %p182
        %p310 = pneg %p179
        %p311 = pneg %p203
        %p312 = pneg %p200
        %s313 = smul.u32 8, %s25
        %p314 = scmp.lt.s32.totalorder %s313, 15
        %s315 = scalar_select %p314, %s313, 15
        %s316 = smul.addr %s315, 8
        %s317 = scalar_lea.vmem %s0, %s316
        %s318 = smul.u32 8, %s25
        %s319 = smul.u32 8, %s25
        %p320 = scmp.lt.s32.totalorder %s319, 15
        %s321 = scalar_select %p320, %s319, 15
        %s322 = smul.addr %s321, 8
        %s323 = scalar_lea.vmem %s1, %s322
        %s324 = smul.u32 8, %s25
        %s325 = smul.u32 8, %s25
        %p326 = scmp.eq.s32.totalorder %s25, 0
        // Predicated region
        $region49: #{tpu_custom_call.1} parent=39 // pred_check
          %p327 = pneg %p326
        $region50: #{tpu_custom_call.1} parent=39 // pred_check_branch
          %329 = sbr.rel (%p327) target = $region52
        $region51: #{tpu_custom_call.1} parent=39 // pred_region
          %v330 = vld [vmem:[%s2] sm:$0xff]
          %vm331 = vcmask 261120
          %332 = vst.msk [vmem:[#allocation2] sm:$0xff] %vm331, %v330
          %v333 = vld [vmem:[#allocation4] sm:$0xff]
          %334 = vst.msk [vmem:[#allocation3] sm:$0xff] %vm331, %v333
        $region52: #{tpu_custom_call.1} parent=39 // pred_fallthru
          _
        %v335 = vld [vmem:[#allocation7] sm:$0xff]
        %v336 = vld [vmem:[#allocation7 + $0x8] sm:$0xff]
        %v337 = vld [vmem:[#allocation7 + $0x10] sm:$0xff]
        %v338 = vld [vmem:[#allocation7 + $0x18] sm:$0xff]
        %v339 = vld [vmem:[#allocation2] sm:$0xff]
        %v340 = vld [vmem:[#allocation3] sm:$0xff]
        %v341 = vld [vmem:[%s317] sm:$0xff]
        %v342 = vld [vmem:[%s323] sm:$0xff]
        %vm343 = vcmask 261120
        %v345 = vsel %vm343, %v339, 0
        %347 = vmatprep.subr.mxu0 0.0
        %348 = vmatpush1.msra.mxu0 0.0
        %349 = vmatprep.subr.mxu0 0.0
        %350 = vmatpush1.msra.mxu0 0.0
        %351 = vmatprep.subr.mxu0 0.0
        %352 = vmatpush1.msra.mxu0 0.0
        %353 = vmatprep.subr.mxu0 0.0
        %354 = vmatpush1.msra.mxu0 0.0
        %355 = vmatprep.subr.mxu0 0.0
        %356 = vmatpush1.msra.mxu0 0.0
        %357 = vmatprep.subr.mxu0 0.0
        %358 = vmatpush1.msra.mxu0 0.0
        %359 = vmatprep.subr.mxu0 0.0
        %360 = vmatpush1.msra.mxu0 0.0
        %361 = vmatprep.subr.mxu0 0.0
        %362 = vmatpush1.msra.mxu0 0.0
        %363 = vmatprep.subr.mxu0 0.0
        %364 = vmatpush1.msra.mxu0 0.0
        %365 = vmatprep.subr.mxu0 0.0
        %366 = vmatpush1.msra.mxu0 0.0
        %367 = vmatprep.subr.mxu0 0.0
        %368 = vmatpush1.msra.mxu0 0.0
        %369 = vmatprep.subr.mxu0 0.0
        %370 = vmatpush1.msra.mxu0 0.0
        %371 = vmatprep.subr.mxu0 0.0
        %372 = vmatpush1.msra.mxu0 %v338
        %373 = vmatprep.subr.mxu0 0.0
        %374 = vmatpush1.msra.mxu0 %v337
        %375 = vmatprep.subr.mxu0 0.0
        %376 = vmatpush1.msra.mxu0 %v336
        %377 = vmatprep.subr.mxu0 0.0
        %378 = vmatpush1.msra.mxu0 %v335
        %379 = vmatprep.subr.mxu0 0.0
        %380 = vmatpush2.msra.mxu0 0.0
        %381 = vmatprep.subr.mxu0 0.0
        %382 = vmatpush2.msra.mxu0 0.0
        %383 = vmatprep.subr.mxu0 0.0
        %384 = vmatpush2.msra.mxu0 0.0
        %385 = vmatprep.subr.mxu0 0.0
        %386 = vmatpush2.msra.mxu0 0.0
        %387 = vmatprep.subr.mxu0 0.0
        %388 = vmatpush2.msra.mxu0 0.0
        %389 = vmatprep.subr.mxu0 0.0
        %390 = vmatpush2.msra.mxu0 0.0
        %391 = vmatprep.subr.mxu0 0.0
        %392 = vmatpush2.msra.mxu0 0.0
        %393 = vmatprep.subr.mxu0 0.0
        %394 = vmatpush2.msra.mxu0 0.0
        %395 = vmatprep.subr.mxu0 0.0
        %396 = vmatpush2.msra.mxu0 0.0
        %397 = vmatprep.subr.mxu0 0.0
        %398 = vmatpush2.msra.mxu0 0.0
        %399 = vmatprep.subr.mxu0 0.0
        %400 = vmatpush2.msra.mxu0 0.0
        %401 = vmatprep.subr.mxu0 0.0
        %402 = vmatpush2.msra.mxu0 0.0
        %403 = vmatprep.subr.mxu0 0.0
        %404 = vmatpush2.msra.mxu0 0.0
        %405 = vmatprep.subr.mxu0 0.0
        %406 = vmatpush2.msra.mxu0 0.0
        %407 = vmatprep.subr.mxu0 0.0
        %408 = vmatpush2.msra.mxu0 0.0
        %409 = vmatprep.subr.mxu0 0.0
        %410 = vmatpush2.msra.mxu0 0.0
        %411 = vmatprep.mubr.f32.mxu0 0.0
        %412 = vmatmul.mubr.f32.gmra.mxu0 %v345
        %v413 = vpop.f32.mrf.mxu0
        %v414 = vadd.f32 0.0, %v413
        %v415 = vpop.f32.mrf.mxu0
        %416 = vdwg.mxu0
        %v417 = vadd.f32 %v341, %v414
        %v418 = vxor.u32 %v417, 2147483648
        %v419 = vmul.f32 %v418, 1.442695
        %v420 = vpow.pop %v419
        %v421 = vadd.f32 %v420, 1.0
        %v422 = vrcp.pop %v421
        %v423 = vmul.f32 1.0, %v422
        %v424 = vtanh.pop %v417
        %426 = vrot.lane.b32.xlu0 %v340, 32
        %v427 = vpop.permute.xlu0 %426
        %v429 = vmul.f32 %v423, %v427
        %431 = vrot.lane.b32.xlu0 %v424, 64
        %v432 = vpop.permute.xlu0 %431
        %v434 = vmul.f32 %v423, %v432
        %436 = vrot.lane.b32.xlu0 %v434, 32
        %v437 = vpop.permute.xlu0 %436
        %v439 = vadd.f32 %v429, %v437
        %v440 = vtanh.pop %v439
        %442 = vrot.lane.b32.xlu0 %v440, 64
        %v443 = vpop.permute.xlu0 %442
        %v445 = vmul.f32 %v423, %v443
        %446 = vrot.lane.b32.xlu0 %v339, 96
        %v447 = vpop.permute.xlu0 %446
        %v449 = vsub.f32 %v445, %v447
        %451 = vset.pattern.permute.xlu0 0
        %452 = vperm.xlu0 %451, %v342
        %v453 = vpop.permute.xlu0 %452
        %v455 = vmul.f32 %v453, %v449
        %457 = vrot.lane.b32.xlu0 %v455, 32
        %v458 = vpop.permute.xlu0 %457
        %v460 = vadd.f32 %v339, %v458
        %v461 = vsub.f32 %v439, %v427
        %v462 = vmul.f32 %v453, %v461
        %464 = vrot.lane.b32.xlu0 %v462, 96
        %v465 = vpop.permute.xlu0 %464
        %v467 = vadd.f32 %v340, %v465
        %v468 = vmul.f32 %v453, %v445
        %470 = vrot.lane.b32.xlu0 %v468, 32
        %v471 = vpop.permute.xlu0 %470
        %473 = vst.msk [vmem:[%s308] sm:$0xff] %vm343, %v471
        %s474 = scalar_lea.vmem %s317, 8
        %v475 = vld [vmem:[%s474] sm:$0xff]
        %s476 = scalar_lea.vmem %s323, 8
        %v477 = vld [vmem:[%s476] sm:$0xff]
        %v479 = vsel %vm343, %v460, 0
        %481 = vmatprep.subr.mxu0 0.0
        %482 = vmatpush1.msra.mxu0 0.0
        %483 = vmatprep.subr.mxu0 0.0
        %484 = vmatpush1.msra.mxu0 0.0
        %485 = vmatprep.subr.mxu0 0.0
        %486 = vmatpush1.msra.mxu0 0.0
        %487 = vmatprep.subr.mxu0 0.0
        %488 = vmatpush1.msra.mxu0 0.0
        %489 = vmatprep.subr.mxu0 0.0
        %490 = vmatpush1.msra.mxu0 0.0
        %491 = vmatprep.subr.mxu0 0.0
        %492 = vmatpush1.msra.mxu0 0.0
        %493 = vmatprep.subr.mxu0 0.0
        %494 = vmatpush1.msra.mxu0 0.0
        %495 = vmatprep.subr.mxu0 0.0
        %496 = vmatpush1.msra.mxu0 0.0
        %497 = vmatprep.subr.mxu0 0.0
        %498 = vmatpush1.msra.mxu0 0.0
        %499 = vmatprep.subr.mxu0 0.0
        %500 = vmatpush1.msra.mxu0 0.0
        %501 = vmatprep.subr.mxu0 0.0
        %502 = vmatpush1.msra.mxu0 0.0
        %503 = vmatprep.subr.mxu0 0.0
        %504 = vmatpush1.msra.mxu0 0.0
        %505 = vmatprep.subr.mxu0 0.0
        %506 = vmatpush1.msra.mxu0 %v338
        %507 = vmatprep.subr.mxu0 0.0
        %508 = vmatpush1.msra.mxu0 %v337
        %509 = vmatprep.subr.mxu0 0.0
        %510 = vmatpush1.msra.mxu0 %v336
        %511 = vmatprep.subr.mxu0 0.0
        %512 = vmatpush1.msra.mxu0 %v335
        %513 = vmatprep.subr.mxu0 0.0
        %514 = vmatpush2.msra.mxu0 0.0
        %515 = vmatprep.subr.mxu0 0.0
        %516 = vmatpush2.msra.mxu0 0.0
        %517 = vmatprep.subr.mxu0 0.0
        %518 = vmatpush2.msra.mxu0 0.0
        %519 = vmatprep.subr.mxu0 0.0
        %520 = vmatpush2.msra.mxu0 0.0
        %521 = vmatprep.subr.mxu0 0.0
        %522 = vmatpush2.msra.mxu0 0.0
        %523 = vmatprep.subr.mxu0 0.0
        %524 = vmatpush2.msra.mxu0 0.0
        %525 = vmatprep.subr.mxu0 0.0
        %526 = vmatpush2.msra.mxu0 0.0
        %527 = vmatprep.subr.mxu0 0.0
        %528 = vmatpush2.msra.mxu0 0.0
        %529 = vmatprep.subr.mxu0 0.0
        %530 = vmatpush2.msra.mxu0 0.0
        %531 = vmatprep.subr.mxu0 0.0
        %532 = vmatpush2.msra.mxu0 0.0
        %533 = vmatprep.subr.mxu0 0.0
        %534 = vmatpush2.msra.mxu0 0.0
        %535 = vmatprep.subr.mxu0 0.0
        %536 = vmatpush2.msra.mxu0 0.0
        %537 = vmatprep.subr.mxu0 0.0
        %538 = vmatpush2.msra.mxu0 0.0
        %539 = vmatprep.subr.mxu0 0.0
        %540 = vmatpush2.msra.mxu0 0.0
        %541 = vmatprep.subr.mxu0 0.0
        %542 = vmatpush2.msra.mxu0 0.0
        %543 = vmatprep.subr.mxu0 0.0
        %544 = vmatpush2.msra.mxu0 0.0
        %545 = vmatprep.mubr.f32.mxu0 0.0
        %546 = vmatmul.mubr.f32.gmra.mxu0 %v479
        %v547 = vpop.f32.mrf.mxu0
        %v548 = vadd.f32 0.0, %v547
        %v549 = vpop.f32.mrf.mxu0
        %550 = vdwg.mxu0
        %v551 = vadd.f32 %v475, %v548
        %v552 = vxor.u32 %v551, 2147483648
        %v553 = vmul.f32 %v552, 1.442695
        %v554 = vpow.pop %v553
        %v555 = vadd.f32 %v554, 1.0
        %v556 = vrcp.pop %v555
        %v557 = vmul.f32 1.0, %v556
        %v558 = vtanh.pop %v551
        %560 = vrot.lane.b32.xlu0 %v467, 32
        %v561 = vpop.permute.xlu0 %560
        %v563 = vmul.f32 %v557, %v561
        %565 = vrot.lane.b32.xlu0 %v558, 64
        %v566 = vpop.permute.xlu0 %565
        %v568 = vmul.f32 %v557, %v566
        %570 = vrot.lane.b32.xlu0 %v568, 32
        %v571 = vpop.permute.xlu0 %570
        %v573 = vadd.f32 %v563, %v571
        %v574 = vtanh.pop %v573
        %576 = vrot.lane.b32.xlu0 %v574, 64
        %v577 = vpop.permute.xlu0 %576
        %v579 = vmul.f32 %v557, %v577
        %580 = vrot.lane.b32.xlu0 %v460, 96
        %v581 = vpop.permute.xlu0 %580
        %v583 = vsub.f32 %v579, %v581
        %585 = vset.pattern.permute.xlu0 0
        %586 = vperm.xlu0 %585, %v477
        %v587 = vpop.permute.xlu0 %586
        %v589 = vmul.f32 %v587, %v583
        %591 = vrot.lane.b32.xlu0 %v589, 32
        %v592 = vpop.permute.xlu0 %591
        %v594 = vadd.f32 %v460, %v592
        %v595 = vsub.f32 %v573, %v561
        %v596 = vmul.f32 %v587, %v595
        %598 = vrot.lane.b32.xlu0 %v596, 96
        %v599 = vpop.permute.xlu0 %598
        %v601 = vadd.f32 %v467, %v599
        %v602 = vmul.f32 %v587, %v579
        %604 = vrot.lane.b32.xlu0 %v602, 32
        %v605 = vpop.permute.xlu0 %604
        %s607 = scalar_lea.vmem %s308, 8 [#allocation9]
        %608 = vst.msk [vmem:[%s607] sm:$0xff] %vm343, %v605
        %s609 = scalar_lea.vmem %s317, 16
        %v610 = vld [vmem:[%s609] sm:$0xff]
        %s611 = scalar_lea.vmem %s323, 16
        %v612 = vld [vmem:[%s611] sm:$0xff]
        %v614 = vsel %vm343, %v594, 0
        %616 = vmatprep.subr.mxu0 0.0
        %617 = vmatpush1.msra.mxu0 0.0
        %618 = vmatprep.subr.mxu0 0.0
        %619 = vmatpush1.msra.mxu0 0.0
        %620 = vmatprep.subr.mxu0 0.0
        %621 = vmatpush1.msra.mxu0 0.0
        %622 = vmatprep.subr.mxu0 0.0
        %623 = vmatpush1.msra.mxu0 0.0
        %624 = vmatprep.subr.mxu0 0.0
        %625 = vmatpush1.msra.mxu0 0.0
        %626 = vmatprep.subr.mxu0 0.0
        %627 = vmatpush1.msra.mxu0 0.0
        %628 = vmatprep.subr.mxu0 0.0
        %629 = vmatpush1.msra.mxu0 0.0
        %630 = vmatprep.subr.mxu0 0.0
        %631 = vmatpush1.msra.mxu0 0.0
        %632 = vmatprep.subr.mxu0 0.0
        %633 = vmatpush1.msra.mxu0 0.0
        %634 = vmatprep.subr.mxu0 0.0
        %635 = vmatpush1.msra.mxu0 0.0
        %636 = vmatprep.subr.mxu0 0.0
        %637 = vmatpush1.msra.mxu0 0.0
        %638 = vmatprep.subr.mxu0 0.0
        %639 = vmatpush1.msra.mxu0 0.0
        %640 = vmatprep.subr.mxu0 0.0
        %641 = vmatpush1.msra.mxu0 %v338
        %642 = vmatprep.subr.mxu0 0.0
        %643 = vmatpush1.msra.mxu0 %v337
        %644 = vmatprep.subr.mxu0 0.0
        %645 = vmatpush1.msra.mxu0 %v336
        %646 = vmatprep.subr.mxu0 0.0
        %647 = vmatpush1.msra.mxu0 %v335
        %648 = vmatprep.subr.mxu0 0.0
        %649 = vmatpush2.msra.mxu0 0.0
        %650 = vmatprep.subr.mxu0 0.0
        %651 = vmatpush2.msra.mxu0 0.0
        %652 = vmatprep.subr.mxu0 0.0
        %653 = vmatpush2.msra.mxu0 0.0
        %654 = vmatprep.subr.mxu0 0.0
        %655 = vmatpush2.msra.mxu0 0.0
        %656 = vmatprep.subr.mxu0 0.0
        %657 = vmatpush2.msra.mxu0 0.0
        %658 = vmatprep.subr.mxu0 0.0
        %659 = vmatpush2.msra.mxu0 0.0
        %660 = vmatprep.subr.mxu0 0.0
        %661 = vmatpush2.msra.mxu0 0.0
        %662 = vmatprep.subr.mxu0 0.0
        %663 = vmatpush2.msra.mxu0 0.0
        %664 = vmatprep.subr.mxu0 0.0
        %665 = vmatpush2.msra.mxu0 0.0
        %666 = vmatprep.subr.mxu0 0.0
        %667 = vmatpush2.msra.mxu0 0.0
        %668 = vmatprep.subr.mxu0 0.0
        %669 = vmatpush2.msra.mxu0 0.0
        %670 = vmatprep.subr.mxu0 0.0
        %671 = vmatpush2.msra.mxu0 0.0
        %672 = vmatprep.subr.mxu0 0.0
        %673 = vmatpush2.msra.mxu0 0.0
        %674 = vmatprep.subr.mxu0 0.0
        %675 = vmatpush2.msra.mxu0 0.0
        %676 = vmatprep.subr.mxu0 0.0
        %677 = vmatpush2.msra.mxu0 0.0
        %678 = vmatprep.subr.mxu0 0.0
        %679 = vmatpush2.msra.mxu0 0.0
        %680 = vmatprep.mubr.f32.mxu0 0.0
        %681 = vmatmul.mubr.f32.gmra.mxu0 %v614
        %v682 = vpop.f32.mrf.mxu0
        %v683 = vadd.f32 0.0, %v682
        %v684 = vpop.f32.mrf.mxu0
        %685 = vdwg.mxu0
        %v686 = vadd.f32 %v610, %v683
        %v687 = vxor.u32 %v686, 2147483648
        %v688 = vmul.f32 %v687, 1.442695
        %v689 = vpow.pop %v688
        %v690 = vadd.f32 %v689, 1.0
        %v691 = vrcp.pop %v690
        %v692 = vmul.f32 1.0, %v691
        %v693 = vtanh.pop %v686
        %695 = vrot.lane.b32.xlu0 %v601, 32
        %v696 = vpop.permute.xlu0 %695
        %v698 = vmul.f32 %v692, %v696
        %700 = vrot.lane.b32.xlu0 %v693, 64
        %v701 = vpop.permute.xlu0 %700
        %v703 = vmul.f32 %v692, %v701
        %705 = vrot.lane.b32.xlu0 %v703, 32
        %v706 = vpop.permute.xlu0 %705
        %v708 = vadd.f32 %v698, %v706
        %v709 = vtanh.pop %v708
        %711 = vrot.lane.b32.xlu0 %v709, 64
        %v712 = vpop.permute.xlu0 %711
        %v714 = vmul.f32 %v692, %v712
        %715 = vrot.lane.b32.xlu0 %v594, 96
        %v716 = vpop.permute.xlu0 %715
        %v718 = vsub.f32 %v714, %v716
        %720 = vset.pattern.permute.xlu0 0
        %721 = vperm.xlu0 %720, %v612
        %v722 = vpop.permute.xlu0 %721
        %v724 = vmul.f32 %v722, %v718
        %726 = vrot.lane.b32.xlu0 %v724, 32
        %v727 = vpop.permute.xlu0 %726
        %v729 = vadd.f32 %v594, %v727
        %v730 = vsub.f32 %v708, %v696
        %v731 = vmul.f32 %v722, %v730
        %733 = vrot.lane.b32.xlu0 %v731, 96
        %v734 = vpop.permute.xlu0 %733
        %v736 = vadd.f32 %v601, %v734
        %v737 = vmul.f32 %v722, %v714
        %739 = vrot.lane.b32.xlu0 %v737, 32
        %v740 = vpop.permute.xlu0 %739
        %s742 = scalar_lea.vmem %s308, 16 [#allocation9]
        %743 = vst.msk [vmem:[%s742] sm:$0xff] %vm343, %v740
        %s744 = scalar_lea.vmem %s317, 24
        %v745 = vld [vmem:[%s744] sm:$0xff]
        %s746 = scalar_lea.vmem %s323, 24
        %v747 = vld [vmem:[%s746] sm:$0xff]
        %v749 = vsel %vm343, %v729, 0
        %751 = vmatprep.subr.mxu0 0.0
        %752 = vmatpush1.msra.mxu0 0.0
        %753 = vmatprep.subr.mxu0 0.0
        %754 = vmatpush1.msra.mxu0 0.0
        %755 = vmatprep.subr.mxu0 0.0
        %756 = vmatpush1.msra.mxu0 0.0
        %757 = vmatprep.subr.mxu0 0.0
        %758 = vmatpush1.msra.mxu0 0.0
        %759 = vmatprep.subr.mxu0 0.0
        %760 = vmatpush1.msra.mxu0 0.0
        %761 = vmatprep.subr.mxu0 0.0
        %762 = vmatpush1.msra.mxu0 0.0
        %763 = vmatprep.subr.mxu0 0.0
        %764 = vmatpush1.msra.mxu0 0.0
        %765 = vmatprep.subr.mxu0 0.0
        %766 = vmatpush1.msra.mxu0 0.0
        %767 = vmatprep.subr.mxu0 0.0
        %768 = vmatpush1.msra.mxu0 0.0
        %769 = vmatprep.subr.mxu0 0.0
        %770 = vmatpush1.msra.mxu0 0.0
        %771 = vmatprep.subr.mxu0 0.0
        %772 = vmatpush1.msra.mxu0 0.0
        %773 = vmatprep.subr.mxu0 0.0
        %774 = vmatpush1.msra.mxu0 0.0
        %775 = vmatprep.subr.mxu0 0.0
        %776 = vmatpush1.msra.mxu0 %v338
        %777 = vmatprep.subr.mxu0 0.0
        %778 = vmatpush1.msra.mxu0 %v337
        %779 = vmatprep.subr.mxu0 0.0
        %780 = vmatpush1.msra.mxu0 %v336
        %781 = vmatprep.subr.mxu0 0.0
        %782 = vmatpush1.msra.mxu0 %v335
        %783 = vmatprep.subr.mxu0 0.0
        %784 = vmatpush2.msra.mxu0 0.0
        %785 = vmatprep.subr.mxu0 0.0
        %786 = vmatpush2.msra.mxu0 0.0
        %787 = vmatprep.subr.mxu0 0.0
        %788 = vmatpush2.msra.mxu0 0.0
        %789 = vmatprep.subr.mxu0 0.0
        %790 = vmatpush2.msra.mxu0 0.0
        %791 = vmatprep.subr.mxu0 0.0
        %792 = vmatpush2.msra.mxu0 0.0
        %793 = vmatprep.subr.mxu0 0.0
        %794 = vmatpush2.msra.mxu0 0.0
        %795 = vmatprep.subr.mxu0 0.0
        %796 = vmatpush2.msra.mxu0 0.0
        %797 = vmatprep.subr.mxu0 0.0
        %798 = vmatpush2.msra.mxu0 0.0
        %799 = vmatprep.subr.mxu0 0.0
        %800 = vmatpush2.msra.mxu0 0.0
        %801 = vmatprep.subr.mxu0 0.0
        %802 = vmatpush2.msra.mxu0 0.0
        %803 = vmatprep.subr.mxu0 0.0
        %804 = vmatpush2.msra.mxu0 0.0
        %805 = vmatprep.subr.mxu0 0.0
        %806 = vmatpush2.msra.mxu0 0.0
        %807 = vmatprep.subr.mxu0 0.0
        %808 = vmatpush2.msra.mxu0 0.0
        %809 = vmatprep.subr.mxu0 0.0
        %810 = vmatpush2.msra.mxu0 0.0
        %811 = vmatprep.subr.mxu0 0.0
        %812 = vmatpush2.msra.mxu0 0.0
        %813 = vmatprep.subr.mxu0 0.0
        %814 = vmatpush2.msra.mxu0 0.0
        %815 = vmatprep.mubr.f32.mxu0 0.0
        %816 = vmatmul.mubr.f32.gmra.mxu0 %v749
        %v817 = vpop.f32.mrf.mxu0
        %v818 = vadd.f32 0.0, %v817
        %v819 = vpop.f32.mrf.mxu0
        %820 = vdwg.mxu0
        %v821 = vadd.f32 %v745, %v818
        %v822 = vxor.u32 %v821, 2147483648
        %v823 = vmul.f32 %v822, 1.442695
        %v824 = vpow.pop %v823
        %v825 = vadd.f32 %v824, 1.0
        %v826 = vrcp.pop %v825
        %v827 = vmul.f32 1.0, %v826
        %v828 = vtanh.pop %v821
        %830 = vrot.lane.b32.xlu0 %v736, 32
        %v831 = vpop.permute.xlu0 %830
        %v833 = vmul.f32 %v827, %v831
        %835 = vrot.lane.b32.xlu0 %v828, 64
        %v836 = vpop.permute.xlu0 %835
        %v838 = vmul.f32 %v827, %v836
        %840 = vrot.lane.b32.xlu0 %v838, 32
        %v841 = vpop.permute.xlu0 %840
        %v843 = vadd.f32 %v833, %v841
        %v844 = vtanh.pop %v843
        %846 = vrot.lane.b32.xlu0 %v844, 64
        %v847 = vpop.permute.xlu0 %846
        %v849 = vmul.f32 %v827, %v847
        %850 = vrot.lane.b32.xlu0 %v729, 96
        %v851 = vpop.permute.xlu0 %850
        %v853 = vsub.f32 %v849, %v851
        %855 = vset.pattern.permute.xlu0 0
        %856 = vperm.xlu0 %855, %v747
        %v857 = vpop.permute.xlu0 %856
        %v859 = vmul.f32 %v857, %v853
        %861 = vrot.lane.b32.xlu0 %v859, 32
        %v862 = vpop.permute.xlu0 %861
        %v864 = vadd.f32 %v729, %v862
        %v865 = vsub.f32 %v843, %v831
        %v866 = vmul.f32 %v857, %v865
        %868 = vrot.lane.b32.xlu0 %v866, 96
        %v869 = vpop.permute.xlu0 %868
        %v871 = vadd.f32 %v736, %v869
        %v872 = vmul.f32 %v857, %v849
        %874 = vrot.lane.b32.xlu0 %v872, 32
        %v875 = vpop.permute.xlu0 %874
        %s877 = scalar_lea.vmem %s308, 24 [#allocation9]
        %878 = vst.msk [vmem:[%s877] sm:$0xff] %vm343, %v875
        %s879 = scalar_lea.vmem %s317, 32
        %v880 = vld [vmem:[%s879] sm:$0xff]
        %s881 = scalar_lea.vmem %s323, 32
        %v882 = vld [vmem:[%s881] sm:$0xff]
        %v884 = vsel %vm343, %v864, 0
        %886 = vmatprep.subr.mxu0 0.0
        %887 = vmatpush1.msra.mxu0 0.0
        %888 = vmatprep.subr.mxu0 0.0
        %889 = vmatpush1.msra.mxu0 0.0
        %890 = vmatprep.subr.mxu0 0.0
        %891 = vmatpush1.msra.mxu0 0.0
        %892 = vmatprep.subr.mxu0 0.0
        %893 = vmatpush1.msra.mxu0 0.0
        %894 = vmatprep.subr.mxu0 0.0
        %895 = vmatpush1.msra.mxu0 0.0
        %896 = vmatprep.subr.mxu0 0.0
        %897 = vmatpush1.msra.mxu0 0.0
        %898 = vmatprep.subr.mxu0 0.0
        %899 = vmatpush1.msra.mxu0 0.0
        %900 = vmatprep.subr.mxu0 0.0
        %901 = vmatpush1.msra.mxu0 0.0
        %902 = vmatprep.subr.mxu0 0.0
        %903 = vmatpush1.msra.mxu0 0.0
        %904 = vmatprep.subr.mxu0 0.0
        %905 = vmatpush1.msra.mxu0 0.0
        %906 = vmatprep.subr.mxu0 0.0
        %907 = vmatpush1.msra.mxu0 0.0
        %908 = vmatprep.subr.mxu0 0.0
        %909 = vmatpush1.msra.mxu0 0.0
        %910 = vmatprep.subr.mxu0 0.0
        %911 = vmatpush1.msra.mxu0 %v338
        %912 = vmatprep.subr.mxu0 0.0
        %913 = vmatpush1.msra.mxu0 %v337
        %914 = vmatprep.subr.mxu0 0.0
        %915 = vmatpush1.msra.mxu0 %v336
        %916 = vmatprep.subr.mxu0 0.0
        %917 = vmatpush1.msra.mxu0 %v335
        %918 = vmatprep.subr.mxu0 0.0
        %919 = vmatpush2.msra.mxu0 0.0
        %920 = vmatprep.subr.mxu0 0.0
        %921 = vmatpush2.msra.mxu0 0.0
        %922 = vmatprep.subr.mxu0 0.0
        %923 = vmatpush2.msra.mxu0 0.0
        %924 = vmatprep.subr.mxu0 0.0
        %925 = vmatpush2.msra.mxu0 0.0
        %926 = vmatprep.subr.mxu0 0.0
        %927 = vmatpush2.msra.mxu0 0.0
        %928 = vmatprep.subr.mxu0 0.0
        %929 = vmatpush2.msra.mxu0 0.0
        %930 = vmatprep.subr.mxu0 0.0
        %931 = vmatpush2.msra.mxu0 0.0
        %932 = vmatprep.subr.mxu0 0.0
        %933 = vmatpush2.msra.mxu0 0.0
        %934 = vmatprep.subr.mxu0 0.0
        %935 = vmatpush2.msra.mxu0 0.0
        %936 = vmatprep.subr.mxu0 0.0
        %937 = vmatpush2.msra.mxu0 0.0
        %938 = vmatprep.subr.mxu0 0.0
        %939 = vmatpush2.msra.mxu0 0.0
        %940 = vmatprep.subr.mxu0 0.0
        %941 = vmatpush2.msra.mxu0 0.0
        %942 = vmatprep.subr.mxu0 0.0
        %943 = vmatpush2.msra.mxu0 0.0
        %944 = vmatprep.subr.mxu0 0.0
        %945 = vmatpush2.msra.mxu0 0.0
        %946 = vmatprep.subr.mxu0 0.0
        %947 = vmatpush2.msra.mxu0 0.0
        %948 = vmatprep.subr.mxu0 0.0
        %949 = vmatpush2.msra.mxu0 0.0
        %950 = vmatprep.mubr.f32.mxu0 0.0
        %951 = vmatmul.mubr.f32.gmra.mxu0 %v884
        %v952 = vpop.f32.mrf.mxu0
        %v953 = vadd.f32 0.0, %v952
        %v954 = vpop.f32.mrf.mxu0
        %955 = vdwg.mxu0
        %v956 = vadd.f32 %v880, %v953
        %v957 = vxor.u32 %v956, 2147483648
        %v958 = vmul.f32 %v957, 1.442695
        %v959 = vpow.pop %v958
        %v960 = vadd.f32 %v959, 1.0
        %v961 = vrcp.pop %v960
        %v962 = vmul.f32 1.0, %v961
        %v963 = vtanh.pop %v956
        %965 = vrot.lane.b32.xlu0 %v871, 32
        %v966 = vpop.permute.xlu0 %965
        %v968 = vmul.f32 %v962, %v966
        %970 = vrot.lane.b32.xlu0 %v963, 64
        %v971 = vpop.permute.xlu0 %970
        %v973 = vmul.f32 %v962, %v971
        %975 = vrot.lane.b32.xlu0 %v973, 32
        %v976 = vpop.permute.xlu0 %975
        %v978 = vadd.f32 %v968, %v976
        %v979 = vtanh.pop %v978
        %981 = vrot.lane.b32.xlu0 %v979, 64
        %v982 = vpop.permute.xlu0 %981
        %v984 = vmul.f32 %v962, %v982
        %985 = vrot.lane.b32.xlu0 %v864, 96
        %v986 = vpop.permute.xlu0 %985
        %v988 = vsub.f32 %v984, %v986
        %990 = vset.pattern.permute.xlu0 0
        %991 = vperm.xlu0 %990, %v882
        %v992 = vpop.permute.xlu0 %991
        %v994 = vmul.f32 %v992, %v988
        %996 = vrot.lane.b32.xlu0 %v994, 32
        %v997 = vpop.permute.xlu0 %996
        %v999 = vadd.f32 %v864, %v997
        %v1000 = vsub.f32 %v978, %v966
        %v1001 = vmul.f32 %v992, %v1000
        %1003 = vrot.lane.b32.xlu0 %v1001, 96
        %v1004 = vpop.permute.xlu0 %1003
        %v1006 = vadd.f32 %v871, %v1004
        %v1007 = vmul.f32 %v992, %v984
        %1009 = vrot.lane.b32.xlu0 %v1007, 32
        %v1010 = vpop.permute.xlu0 %1009
        %s1012 = scalar_lea.vmem %s308, 32 [#allocation9]
        %1013 = vst.msk [vmem:[%s1012] sm:$0xff] %vm343, %v1010
        %s1014 = scalar_lea.vmem %s317, 40
        %v1015 = vld [vmem:[%s1014] sm:$0xff]
        %s1016 = scalar_lea.vmem %s323, 40
        %v1017 = vld [vmem:[%s1016] sm:$0xff]
        %v1019 = vsel %vm343, %v999, 0
        %1021 = vmatprep.subr.mxu0 0.0
        %1022 = vmatpush1.msra.mxu0 0.0
        %1023 = vmatprep.subr.mxu0 0.0
        %1024 = vmatpush1.msra.mxu0 0.0
        %1025 = vmatprep.subr.mxu0 0.0
        %1026 = vmatpush1.msra.mxu0 0.0
        %1027 = vmatprep.subr.mxu0 0.0
        %1028 = vmatpush1.msra.mxu0 0.0
        %1029 = vmatprep.subr.mxu0 0.0
        %1030 = vmatpush1.msra.mxu0 0.0
        %1031 = vmatprep.subr.mxu0 0.0
        %1032 = vmatpush1.msra.mxu0 0.0
        %1033 = vmatprep.subr.mxu0 0.0
        %1034 = vmatpush1.msra.mxu0 0.0
        %1035 = vmatprep.subr.mxu0 0.0
        %1036 = vmatpush1.msra.mxu0 0.0
        %1037 = vmatprep.subr.mxu0 0.0
        %1038 = vmatpush1.msra.mxu0 0.0
        %1039 = vmatprep.subr.mxu0 0.0
        %1040 = vmatpush1.msra.mxu0 0.0
        %1041 = vmatprep.subr.mxu0 0.0
        %1042 = vmatpush1.msra.mxu0 0.0
        %1043 = vmatprep.subr.mxu0 0.0
        %1044 = vmatpush1.msra.mxu0 0.0
        %1045 = vmatprep.subr.mxu0 0.0
        %1046 = vmatpush1.msra.mxu0 %v338
        %1047 = vmatprep.subr.mxu0 0.0
        %1048 = vmatpush1.msra.mxu0 %v337
        %1049 = vmatprep.subr.mxu0 0.0
        %1050 = vmatpush1.msra.mxu0 %v336
        %1051 = vmatprep.subr.mxu0 0.0
        %1052 = vmatpush1.msra.mxu0 %v335
        %1053 = vmatprep.subr.mxu0 0.0
        %1054 = vmatpush2.msra.mxu0 0.0
        %1055 = vmatprep.subr.mxu0 0.0
        %1056 = vmatpush2.msra.mxu0 0.0
        %1057 = vmatprep.subr.mxu0 0.0
        %1058 = vmatpush2.msra.mxu0 0.0
        %1059 = vmatprep.subr.mxu0 0.0
        %1060 = vmatpush2.msra.mxu0 0.0
        %1061 = vmatprep.subr.mxu0 0.0
        %1062 = vmatpush2.msra.mxu0 0.0
        %1063 = vmatprep.subr.mxu0 0.0
        %1064 = vmatpush2.msra.mxu0 0.0
        %1065 = vmatprep.subr.mxu0 0.0
        %1066 = vmatpush2.msra.mxu0 0.0
        %1067 = vmatprep.subr.mxu0 0.0
        %1068 = vmatpush2.msra.mxu0 0.0
        %1069 = vmatprep.subr.mxu0 0.0
        %1070 = vmatpush2.msra.mxu0 0.0
        %1071 = vmatprep.subr.mxu0 0.0
        %1072 = vmatpush2.msra.mxu0 0.0
        %1073 = vmatprep.subr.mxu0 0.0
        %1074 = vmatpush2.msra.mxu0 0.0
        %1075 = vmatprep.subr.mxu0 0.0
        %1076 = vmatpush2.msra.mxu0 0.0
        %1077 = vmatprep.subr.mxu0 0.0
        %1078 = vmatpush2.msra.mxu0 0.0
        %1079 = vmatprep.subr.mxu0 0.0
        %1080 = vmatpush2.msra.mxu0 0.0
        %1081 = vmatprep.subr.mxu0 0.0
        %1082 = vmatpush2.msra.mxu0 0.0
        %1083 = vmatprep.subr.mxu0 0.0
        %1084 = vmatpush2.msra.mxu0 0.0
        %1085 = vmatprep.mubr.f32.mxu0 0.0
        %1086 = vmatmul.mubr.f32.gmra.mxu0 %v1019
        %v1087 = vpop.f32.mrf.mxu0
        %v1088 = vadd.f32 0.0, %v1087
        %v1089 = vpop.f32.mrf.mxu0
        %1090 = vdwg.mxu0
        %v1091 = vadd.f32 %v1015, %v1088
        %v1092 = vxor.u32 %v1091, 2147483648
        %v1093 = vmul.f32 %v1092, 1.442695
        %v1094 = vpow.pop %v1093
        %v1095 = vadd.f32 %v1094, 1.0
        %v1096 = vrcp.pop %v1095
        %v1097 = vmul.f32 1.0, %v1096
        %v1098 = vtanh.pop %v1091
        %1100 = vrot.lane.b32.xlu0 %v1006, 32
        %v1101 = vpop.permute.xlu0 %1100
        %v1103 = vmul.f32 %v1097, %v1101
        %1105 = vrot.lane.b32.xlu0 %v1098, 64
        %v1106 = vpop.permute.xlu0 %1105
        %v1108 = vmul.f32 %v1097, %v1106
        %1110 = vrot.lane.b32.xlu0 %v1108, 32
        %v1111 = vpop.permute.xlu0 %1110
        %v1113 = vadd.f32 %v1103, %v1111
        %v1114 = vtanh.pop %v1113
        %1116 = vrot.lane.b32.xlu0 %v1114, 64
        %v1117 = vpop.permute.xlu0 %1116
        %v1119 = vmul.f32 %v1097, %v1117
        %1120 = vrot.lane.b32.xlu0 %v999, 96
        %v1121 = vpop.permute.xlu0 %1120
        %v1123 = vsub.f32 %v1119, %v1121
        %1125 = vset.pattern.permute.xlu0 0
        %1126 = vperm.xlu0 %1125, %v1017
        %v1127 = vpop.permute.xlu0 %1126
        %v1129 = vmul.f32 %v1127, %v1123
        %1131 = vrot.lane.b32.xlu0 %v1129, 32
        %v1132 = vpop.permute.xlu0 %1131
        %v1134 = vadd.f32 %v999, %v1132
        %v1135 = vsub.f32 %v1113, %v1101
        %v1136 = vmul.f32 %v1127, %v1135
        %1138 = vrot.lane.b32.xlu0 %v1136, 96
        %v1139 = vpop.permute.xlu0 %1138
        %v1141 = vadd.f32 %v1006, %v1139
        %v1142 = vmul.f32 %v1127, %v1119
        %1144 = vrot.lane.b32.xlu0 %v1142, 32
        %v1145 = vpop.permute.xlu0 %1144
        %s1147 = scalar_lea.vmem %s308, 40 [#allocation9]
        %1148 = vst.msk [vmem:[%s1147] sm:$0xff] %vm343, %v1145
        %s1149 = scalar_lea.vmem %s317, 48
        %v1150 = vld [vmem:[%s1149] sm:$0xff]
        %s1151 = scalar_lea.vmem %s323, 48
        %v1152 = vld [vmem:[%s1151] sm:$0xff]
        %v1154 = vsel %vm343, %v1134, 0
        %1156 = vmatprep.subr.mxu0 0.0
        %1157 = vmatpush1.msra.mxu0 0.0
        %1158 = vmatprep.subr.mxu0 0.0
        %1159 = vmatpush1.msra.mxu0 0.0
        %1160 = vmatprep.subr.mxu0 0.0
        %1161 = vmatpush1.msra.mxu0 0.0
        %1162 = vmatprep.subr.mxu0 0.0
        %1163 = vmatpush1.msra.mxu0 0.0
        %1164 = vmatprep.subr.mxu0 0.0
        %1165 = vmatpush1.msra.mxu0 0.0
        %1166 = vmatprep.subr.mxu0 0.0
        %1167 = vmatpush1.msra.mxu0 0.0
        %1168 = vmatprep.subr.mxu0 0.0
        %1169 = vmatpush1.msra.mxu0 0.0
        %1170 = vmatprep.subr.mxu0 0.0
        %1171 = vmatpush1.msra.mxu0 0.0
        %1172 = vmatprep.subr.mxu0 0.0
        %1173 = vmatpush1.msra.mxu0 0.0
        %1174 = vmatprep.subr.mxu0 0.0
        %1175 = vmatpush1.msra.mxu0 0.0
        %1176 = vmatprep.subr.mxu0 0.0
        %1177 = vmatpush1.msra.mxu0 0.0
        %1178 = vmatprep.subr.mxu0 0.0
        %1179 = vmatpush1.msra.mxu0 0.0
        %1180 = vmatprep.subr.mxu0 0.0
        %1181 = vmatpush1.msra.mxu0 %v338
        %1182 = vmatprep.subr.mxu0 0.0
        %1183 = vmatpush1.msra.mxu0 %v337
        %1184 = vmatprep.subr.mxu0 0.0
        %1185 = vmatpush1.msra.mxu0 %v336
        %1186 = vmatprep.subr.mxu0 0.0
        %1187 = vmatpush1.msra.mxu0 %v335
        %1188 = vmatprep.subr.mxu0 0.0
        %1189 = vmatpush2.msra.mxu0 0.0
        %1190 = vmatprep.subr.mxu0 0.0
        %1191 = vmatpush2.msra.mxu0 0.0
        %1192 = vmatprep.subr.mxu0 0.0
        %1193 = vmatpush2.msra.mxu0 0.0
        %1194 = vmatprep.subr.mxu0 0.0
        %1195 = vmatpush2.msra.mxu0 0.0
        %1196 = vmatprep.subr.mxu0 0.0
        %1197 = vmatpush2.msra.mxu0 0.0
        %1198 = vmatprep.subr.mxu0 0.0
        %1199 = vmatpush2.msra.mxu0 0.0
        %1200 = vmatprep.subr.mxu0 0.0
        %1201 = vmatpush2.msra.mxu0 0.0
        %1202 = vmatprep.subr.mxu0 0.0
        %1203 = vmatpush2.msra.mxu0 0.0
        %1204 = vmatprep.subr.mxu0 0.0
        %1205 = vmatpush2.msra.mxu0 0.0
        %1206 = vmatprep.subr.mxu0 0.0
        %1207 = vmatpush2.msra.mxu0 0.0
        %1208 = vmatprep.subr.mxu0 0.0
        %1209 = vmatpush2.msra.mxu0 0.0
        %1210 = vmatprep.subr.mxu0 0.0
        %1211 = vmatpush2.msra.mxu0 0.0
        %1212 = vmatprep.subr.mxu0 0.0
        %1213 = vmatpush2.msra.mxu0 0.0
        %1214 = vmatprep.subr.mxu0 0.0
        %1215 = vmatpush2.msra.mxu0 0.0
        %1216 = vmatprep.subr.mxu0 0.0
        %1217 = vmatpush2.msra.mxu0 0.0
        %1218 = vmatprep.subr.mxu0 0.0
        %1219 = vmatpush2.msra.mxu0 0.0
        %1220 = vmatprep.mubr.f32.mxu0 0.0
        %1221 = vmatmul.mubr.f32.gmra.mxu0 %v1154
        %v1222 = vpop.f32.mrf.mxu0
        %v1223 = vadd.f32 0.0, %v1222
        %v1224 = vpop.f32.mrf.mxu0
        %1225 = vdwg.mxu0
        %v1226 = vadd.f32 %v1150, %v1223
        %v1227 = vxor.u32 %v1226, 2147483648
        %v1228 = vmul.f32 %v1227, 1.442695
        %v1229 = vpow.pop %v1228
        %v1230 = vadd.f32 %v1229, 1.0
        %v1231 = vrcp.pop %v1230
        %v1232 = vmul.f32 1.0, %v1231
        %v1233 = vtanh.pop %v1226
        %1235 = vrot.lane.b32.xlu0 %v1141, 32
        %v1236 = vpop.permute.xlu0 %1235
        %v1238 = vmul.f32 %v1232, %v1236
        %1240 = vrot.lane.b32.xlu0 %v1233, 64
        %v1241 = vpop.permute.xlu0 %1240
        %v1243 = vmul.f32 %v1232, %v1241
        %1245 = vrot.lane.b32.xlu0 %v1243, 32
        %v1246 = vpop.permute.xlu0 %1245
        %v1248 = vadd.f32 %v1238, %v1246
        %v1249 = vtanh.pop %v1248
        %1251 = vrot.lane.b32.xlu0 %v1249, 64
        %v1252 = vpop.permute.xlu0 %1251
        %v1254 = vmul.f32 %v1232, %v1252
        %1255 = vrot.lane.b32.xlu0 %v1134, 96
        %v1256 = vpop.permute.xlu0 %1255
        %v1258 = vsub.f32 %v1254, %v1256
        %1260 = vset.pattern.permute.xlu0 0
        %1261 = vperm.xlu0 %1260, %v1152
        %v1262 = vpop.permute.xlu0 %1261
        %v1264 = vmul.f32 %v1262, %v1258
        %1266 = vrot.lane.b32.xlu0 %v1264, 32
        %v1267 = vpop.permute.xlu0 %1266
        %v1269 = vadd.f32 %v1134, %v1267
        %v1270 = vsub.f32 %v1248, %v1236
        %v1271 = vmul.f32 %v1262, %v1270
        %1273 = vrot.lane.b32.xlu0 %v1271, 96
        %v1274 = vpop.permute.xlu0 %1273
        %v1276 = vadd.f32 %v1141, %v1274
        %v1277 = vmul.f32 %v1262, %v1254
        %1279 = vrot.lane.b32.xlu0 %v1277, 32
        %v1280 = vpop.permute.xlu0 %1279
        %s1282 = scalar_lea.vmem %s308, 48 [#allocation9]
        %1283 = vst.msk [vmem:[%s1282] sm:$0xff] %vm343, %v1280
        %s1284 = scalar_lea.vmem %s317, 56
        %v1285 = vld [vmem:[%s1284] sm:$0xff]
        %s1286 = scalar_lea.vmem %s323, 56
        %v1287 = vld [vmem:[%s1286] sm:$0xff]
        %v1289 = vsel %vm343, %v1269, 0
        %1291 = vmatprep.subr.mxu0 0.0
        %1292 = vmatpush1.msra.mxu0 0.0
        %1293 = vmatprep.subr.mxu0 0.0
        %1294 = vmatpush1.msra.mxu0 0.0
        %1295 = vmatprep.subr.mxu0 0.0
        %1296 = vmatpush1.msra.mxu0 0.0
        %1297 = vmatprep.subr.mxu0 0.0
        %1298 = vmatpush1.msra.mxu0 0.0
        %1299 = vmatprep.subr.mxu0 0.0
        %1300 = vmatpush1.msra.mxu0 0.0
        %1301 = vmatprep.subr.mxu0 0.0
        %1302 = vmatpush1.msra.mxu0 0.0
        %1303 = vmatprep.subr.mxu0 0.0
        %1304 = vmatpush1.msra.mxu0 0.0
        %1305 = vmatprep.subr.mxu0 0.0
        %1306 = vmatpush1.msra.mxu0 0.0
        %1307 = vmatprep.subr.mxu0 0.0
        %1308 = vmatpush1.msra.mxu0 0.0
        %1309 = vmatprep.subr.mxu0 0.0
        %1310 = vmatpush1.msra.mxu0 0.0
        %1311 = vmatprep.subr.mxu0 0.0
        %1312 = vmatpush1.msra.mxu0 0.0
        %1313 = vmatprep.subr.mxu0 0.0
        %1314 = vmatpush1.msra.mxu0 0.0
        %1315 = vmatprep.subr.mxu0 0.0
        %1316 = vmatpush1.msra.mxu0 %v338
        %1317 = vmatprep.subr.mxu0 0.0
        %1318 = vmatpush1.msra.mxu0 %v337
        %1319 = vmatprep.subr.mxu0 0.0
        %1320 = vmatpush1.msra.mxu0 %v336
        %1321 = vmatprep.subr.mxu0 0.0
        %1322 = vmatpush1.msra.mxu0 %v335
        %1323 = vmatprep.subr.mxu0 0.0
        %1324 = vmatpush2.msra.mxu0 0.0
        %1325 = vmatprep.subr.mxu0 0.0
        %1326 = vmatpush2.msra.mxu0 0.0
        %1327 = vmatprep.subr.mxu0 0.0
        %1328 = vmatpush2.msra.mxu0 0.0
        %1329 = vmatprep.subr.mxu0 0.0
        %1330 = vmatpush2.msra.mxu0 0.0
        %1331 = vmatprep.subr.mxu0 0.0
        %1332 = vmatpush2.msra.mxu0 0.0
        %1333 = vmatprep.subr.mxu0 0.0
        %1334 = vmatpush2.msra.mxu0 0.0
        %1335 = vmatprep.subr.mxu0 0.0
        %1336 = vmatpush2.msra.mxu0 0.0
        %1337 = vmatprep.subr.mxu0 0.0
        %1338 = vmatpush2.msra.mxu0 0.0
        %1339 = vmatprep.subr.mxu0 0.0
        %1340 = vmatpush2.msra.mxu0 0.0
        %1341 = vmatprep.subr.mxu0 0.0
        %1342 = vmatpush2.msra.mxu0 0.0
        %1343 = vmatprep.subr.mxu0 0.0
        %1344 = vmatpush2.msra.mxu0 0.0
        %1345 = vmatprep.subr.mxu0 0.0
        %1346 = vmatpush2.msra.mxu0 0.0
        %1347 = vmatprep.subr.mxu0 0.0
        %1348 = vmatpush2.msra.mxu0 0.0
        %1349 = vmatprep.subr.mxu0 0.0
        %1350 = vmatpush2.msra.mxu0 0.0
        %1351 = vmatprep.subr.mxu0 0.0
        %1352 = vmatpush2.msra.mxu0 0.0
        %1353 = vmatprep.subr.mxu0 0.0
        %1354 = vmatpush2.msra.mxu0 0.0
        %1355 = vmatprep.mubr.f32.mxu0 0.0
        %1356 = vmatmul.mubr.f32.gmra.mxu0 %v1289
        %v1357 = vpop.f32.mrf.mxu0
        %v1358 = vadd.f32 0.0, %v1357
        %v1359 = vpop.f32.mrf.mxu0
        %1360 = vdwg.mxu0
        %v1361 = vadd.f32 %v1285, %v1358
        %v1362 = vxor.u32 %v1361, 2147483648
        %v1363 = vmul.f32 %v1362, 1.442695
        %v1364 = vpow.pop %v1363
        %v1365 = vadd.f32 %v1364, 1.0
        %v1366 = vrcp.pop %v1365
        %v1367 = vmul.f32 1.0, %v1366
        %v1368 = vtanh.pop %v1361
        %1370 = vrot.lane.b32.xlu0 %v1276, 32
        %v1371 = vpop.permute.xlu0 %1370
        %v1373 = vmul.f32 %v1367, %v1371
        %1375 = vrot.lane.b32.xlu0 %v1368, 64
        %v1376 = vpop.permute.xlu0 %1375
        %v1378 = vmul.f32 %v1367, %v1376
        %1380 = vrot.lane.b32.xlu0 %v1378, 32
        %v1381 = vpop.permute.xlu0 %1380
        %v1383 = vadd.f32 %v1373, %v1381
        %v1384 = vtanh.pop %v1383
        %1386 = vrot.lane.b32.xlu0 %v1384, 64
        %v1387 = vpop.permute.xlu0 %1386
        %v1389 = vmul.f32 %v1367, %v1387
        %1390 = vrot.lane.b32.xlu0 %v1269, 96
        %v1391 = vpop.permute.xlu0 %1390
        %v1393 = vsub.f32 %v1389, %v1391
        %1395 = vset.pattern.permute.xlu0 0
        %1396 = vperm.xlu0 %1395, %v1287
        %v1397 = vpop.permute.xlu0 %1396
        %v1399 = vmul.f32 %v1397, %v1393
        %1401 = vrot.lane.b32.xlu0 %v1399, 32
        %v1402 = vpop.permute.xlu0 %1401
        %v1404 = vadd.f32 %v1269, %v1402
        %v1405 = vsub.f32 %v1383, %v1371
        %v1406 = vmul.f32 %v1397, %v1405
        %1408 = vrot.lane.b32.xlu0 %v1406, 96
        %v1409 = vpop.permute.xlu0 %1408
        %v1411 = vadd.f32 %v1276, %v1409
        %v1412 = vmul.f32 %v1397, %v1389
        %1414 = vrot.lane.b32.xlu0 %v1412, 32
        %v1415 = vpop.permute.xlu0 %1414
        %s1417 = scalar_lea.vmem %s308, 56 [#allocation9]
        %1418 = vst.msk [vmem:[%s1417] sm:$0xff] %vm343, %v1415
        %1419 = vst.msk [vmem:[#allocation2] sm:$0xff] %vm343, %v1404
        %1420 = vst.msk [vmem:[#allocation3] sm:$0xff] %vm343, %v1411
        %p1421 = scmp.eq.s32.totalorder %s25, 1
        // Predicated region
        $region53: #{tpu_custom_call.1} parent=39 // pred_check
          %p1422 = pneg %p1421
        $region54: #{tpu_custom_call.1} parent=39 // pred_check_branch
          %1424 = sbr.rel (%p1422) target = $region56
        $region55: #{tpu_custom_call.1} parent=39 // pred_region
          %1425 = vst.msk [vmem:[#allocation10] sm:$0xff] %vm343, %v1404
          %1426 = vst.msk [vmem:[#allocation12] sm:$0xff] %vm343, %v1411
        $region56: #{tpu_custom_call.1} parent=39 // pred_fallthru
          _
        %s1427 = sand.u32 %s148, 1
        %s1428 = scalar_lea.sflag [#allocation6], %s1427
        %s1429 = sand.u32 %s148, 1
        %s1430 = smul.addr %s1429, 64
        %s1431 = scalar_lea.vmem [#allocation9], %s1430
        // Predicated region
        $region57: #{tpu_custom_call.1} parent=39 // pred_check
          %p1432 = pneg %p158
        $region58: #{tpu_custom_call.1} parent=39 // pred_check_branch
          %1434 = sbr.rel (%p1432) target = $region60
        $region59: #{tpu_custom_call.1} parent=39 // pred_region
          %s1435 = smul.u32 8, %s25
          %s1437 = ssub.s32 1024, 1024
          %1438 = vsyncadd %s1428, %s1437
          %s1439 = smul.addr %s1435, 128
          %s1440 = scalar_lea.hbm %s5, %s1439
          %s1441 = sshll.u32 %s1431, 4
          %s1442 = int_to_ptr.vmem [resolvable:$true] %s1441
          %1447 = dma.vmem_to_hbm [thread:$0]  %s1442, 1024, %s1440, %s1428, 128, 128, 8
        $region60: #{tpu_custom_call.1} parent=39 // pred_fallthru
          _
        // Predicated region
        $region61: #{tpu_custom_call.1} parent=39 // pred_check
          %p1448 = pneg %p179
        $region62: #{tpu_custom_call.1} parent=39 // pred_check_branch
          %1450 = sbr.rel (%p1448) target = $region64
        $region63: #{tpu_custom_call.1} parent=39 // pred_region
          %s1452 = ssub.s32 128, 128
          %1453 = vsyncadd [#allocation11], %s1452
          %s1455 = sshll.u32 [#allocation10], 4
          %s1456 = int_to_ptr.vmem [resolvable:$true] %s1455
          %1458 = dma.vmem_to_hbm [thread:$0]  %s1456, 128, %s6, [#allocation11]
        $region64: #{tpu_custom_call.1} parent=39 // pred_fallthru
          _
        // Predicated region
        $region65: #{tpu_custom_call.1} parent=39 // pred_check
          %p1459 = pneg %p200
        $region66: #{tpu_custom_call.1} parent=39 // pred_check_branch
          %1461 = sbr.rel (%p1459) target = $region68
        $region67: #{tpu_custom_call.1} parent=39 // pred_region
          %s1463 = ssub.s32 128, 128
          %1464 = vsyncadd [#allocation11], %s1463
          %s1466 = sshll.u32 [#allocation12], 4
          %s1467 = int_to_ptr.vmem [resolvable:$true] %s1466
          %1469 = dma.vmem_to_hbm [thread:$0]  %s1467, 128, %s7, [#allocation11]
        $region68: #{tpu_custom_call.1} parent=39 // pred_fallthru
          _
        // Predicated region
        $region69: #{tpu_custom_call.1} parent=39 // pred_check
          %p1470 = pneg %p179
        $region70: #{tpu_custom_call.1} parent=39 // pred_check_branch
          %1472 = sbr.rel (%p1470) target = $region72
        $region71: #{tpu_custom_call.1} parent=39 // pred_region
          %1473 = dma.done [#allocation11], 128
        $region72: #{tpu_custom_call.1} parent=39 // pred_fallthru
          _
        // Predicated region
        $region73: #{tpu_custom_call.1} parent=39 // pred_check
          %p1474 = pneg %p200
        $region74: #{tpu_custom_call.1} parent=39 // pred_check_branch
          %1476 = sbr.rel (%p1474) target = $region76
        $region75: #{tpu_custom_call.1} parent=39 // pred_region
          %1477 = dma.done [#allocation11], 128
        $region76: #{tpu_custom_call.1} parent=39 // pred_fallthru
          _
      $region40: #{tpu_custom_call.1} parent=5 // pred_fallthru
        _
      %p1478 = scmp.le.s32.totalorder 2, %s20
      // Predicated region
      $region77: #{tpu_custom_call.1} parent=5 // pred_check
        %p1479 = pneg %p1478
      $region78: #{tpu_custom_call.1} parent=5 // pred_check_branch
        %1481 = sbr.rel (%p1479) target = $region80
      $region79: #{tpu_custom_call.1} parent=5 // pred_region
        %s1482 = ssub.s32 %s20, 2
        // Predicated region
        $region81: #{tpu_custom_call.1} parent=79 // pred_check
          %p1483 = pneg %p164
        $region82: #{tpu_custom_call.1} parent=79 // pred_check_branch
          %1485 = sbr.rel (%p1483) target = $region84
        $region83: #{tpu_custom_call.1} parent=79 // pred_region
          %s1486 = sand.u32 %s149, 1
          %s1487 = scalar_lea.sflag [#allocation6], %s1486
          %s1488 = sand.u32 %s149, 1
          %s1489 = smul.addr %s1488, 64
          %s1490 = scalar_lea.vmem [#allocation9], %s1489
          %1491 = dma.done %s1487, 1024
        $region84: #{tpu_custom_call.1} parent=79 // pred_fallthru
          _
      $region80: #{tpu_custom_call.1} parent=5 // pred_fallthru
        _
    $region6: #{tpu_custom_call.1} parent=1 // loop_footer
      %s24 = sadd.s32 1, %s20
    $region7: #{tpu_custom_call.1} parent=1 // loop_footer_branch
      %19 = sbr.rel target = $region3
    $region8: #{tpu_custom_call.1} parent=1 // loop_exit
      _
    %1492 = vsyncpa [#allocation5], 1
    %s1493 = scalar_lea.sflag [#allocation5], 1
    %1494 = vsyncpa %s1493, 1
    %1495 = vsyncpa [#allocation8], 1
    %1496 = vsyncpa [#allocation6], 1
    %s1497 = scalar_lea.sflag [#allocation6], 1
    %1498 = vsyncpa %s1497, 1
    %1499 = vsyncpa [#allocation11], 1

// kernel: tpu_custom_call.1
$region0: #{tpu_custom_call.1}
  #allocation0 [shape = 'u32[]', space=smem, size = 0x4, offset = 0x4, fixed_abs, tag = 'smem constant byte address 0x4 - core index']
  #allocation1 [shape = 'u32[144,128]{1,0:T(1,128)}', space=vmem, size = 0x12000, scoped, tag = 'internal scratch']
  #allocation2 [shape = 'f32[8,32]{1,0:T(8,128)}', space=vmem, size = 0x1000, scoped, tag = 'scratch operand']
  #allocation3 [shape = 'f32[8,32]{1,0:T(8,128)}', space=vmem, size = 0x1000, scoped, tag = 'scratch operand']
  %s0 = inlined_call_operand.vmem [shape: f32[16,8,128], index: 0, kind: input, shape index: {}]
  %s1 = inlined_call_operand.vmem [shape: f32[16,8,1], index: 1, kind: input, shape index: {}]
  %s2 = inlined_call_operand.vmem [shape: f32[8,32], index: 2, kind: input, shape index: {}]
  %s3 = inlined_call_operand.hbm [shape: f32[8,32], index: 3, kind: input, shape index: {}]
  %s4 = inlined_call_operand.hbm [shape: f32[32,128], index: 4, kind: input, shape index: {}]
  %s5 = inlined_call_operand.hbm [shape: f32[16,8,32], index: 5, kind: output, shape index: {0}]
  %s6 = inlined_call_operand.hbm [shape: f32[8,32], index: 6, kind: output, shape index: {1}]
  %s7 = inlined_call_operand.hbm [shape: f32[8,32], index: 7, kind: output, shape index: {2}]
  %8 = xla_tuple %s5, %s6, %s7
  %s9 = sld [smem:[#allocation0]]
  $region85: #{tpu_custom_call.1} parent=0
    _
  %s11 = ssub.s32 1, %s9
  %s12 = scalar_select 0, %s11, %s9
  $region1: #{tpu_custom_call.1} parent=0
    #allocation4 [shape = 'u8[4096]{0}', space=vmem, size = 0x1000, scoped, tag = 'input window, operand 3, single buffered']
    #allocation5 [shape = 's32[2]{0}', space=sflag, size = 0x8, scoped, tag = 'scoped memory for tpu_custom_call.1']
    #allocation6 [shape = 's32[2]{0}', space=sflag, size = 0x8, scoped, tag = 'scoped memory for tpu_custom_call.1']
    #allocation7 [shape = 'u8[16384]{0}', space=vmem, size = 0x4000, scoped, tag = 'input window, operand 4, single buffered']
    #allocation8 [shape = 's32[1]{0}', space=sflag, size = 0x4, scoped, tag = 'scoped memory for tpu_custom_call.1']
    #allocation9 [shape = 'u8[65536]{0}', space=vmem, size = 0x10000, scoped, tag = 'output window, operand 0']
    #allocation10 [shape = 'u8[4096]{0}', space=vmem, size = 0x1000, scoped, tag = 'output window, operand 1, single buffered']
    #allocation11 [shape = 's32[1]{0}', space=sflag, size = 0x4, scoped, tag = 'scoped memory for tpu_custom_call.1']
    #allocation12 [shape = 'u8[4096]{0}', space=vmem, size = 0x1000, scoped, tag = 'output window, operand 2, single buffered']
    %13 = vsyncpa [#allocation5], 0
    %14 = vsyncpa [#allocation8], 0
    %15 = vsyncpa [#allocation6], 0
    %s16 = scalar_lea.sflag [#allocation6], 1
    %17 = vsyncpa %s16, 0
    %18 = vsyncpa [#allocation11], 0
    loop: start=0, step=1, limit=4
    $region2: #{tpu_custom_call.1} parent=1 // loop_pre_header
      _
    $region3: #{tpu_custom_call.1} parent=1 // loop_header
      %s20 = sphi 0, %s24
      %p21 = scmp.ge.s32.totalorder %s20, 4
      %s30 = sphi 0, %s32
      %s33 = sphi 0, %s30
      %s34 = sphi 0, %s33
      %s50 = sphi 0, %s34
      %s56 = sphi 0, %s58
      %s59 = sphi 0, %s56
      %s60 = sphi 0, %s59
      %s76 = sphi 0, %s60
      %s80 = sphi 0, %s80
      %s82 = sphi 0, %s80
      %s83 = sphi 0, %s82
      %s97 = sphi 0, %s83
      %s101 = sphi 0, %s101
      %s103 = sphi 0, %s101
      %s104 = sphi 0, %s103
      %s118 = sphi 0, %s104
      %s122 = sphi 0, %s122
      %s124 = sphi 0, %s122
      %s125 = sphi 0, %s124
      %s139 = sphi 0, %s125
      %s145 = sphi 0, %s147
      %s148 = sphi 0, %s145
      %s149 = sphi 0, %s148
      %s165 = sphi 0, %s149
      %s169 = sphi 0, %s169
      %s171 = sphi 0, %s169
      %s172 = sphi 0, %s171
      %s186 = sphi 0, %s172
      %s190 = sphi 0, %s190
      %s192 = sphi 0, %s190
      %s193 = sphi 0, %s192
      %s207 = sphi 0, %s193
    $region4: #{tpu_custom_call.1} parent=1 // loop_header_branch
      %23 = sbr.rel (%p21) target = $region8
    $region5: #{tpu_custom_call.1} parent=1 // loop_body
      %s25 = ssub.s32 %s20, 1
      %s26 = ssub.s32 %s20, 2
      %s27 = sadd.s32 %s20, 1
      %s28 = ssub.s32 %s20, %s27
      %p29 = scmp.eq.s32.totalorder %s28, 0
      %s31 = sadd.s32 %s30, 1
      %s32 = scalar_select %p29, %s30, %s31
      %p35 = pneg %p29
      %p36 = scmp.eq.s32.totalorder %s20, 1
      %p37 = por %p35, %p36
      %p38 = scmp.ne.s32.totalorder %s30, %s33
      %p39 = scmp.eq.s32.totalorder %s20, 0
      %p40 = por %p38, %p39
      %p41 = scmp.ne.s32.totalorder %s30, %s33
      %p42 = scmp.eq.s32.totalorder %s25, 1
      %p43 = por %p41, %p42
      %p44 = scmp.ne.s32.totalorder %s33, %s34
      %p45 = scmp.eq.s32.totalorder %s25, 0
      %p46 = por %p44, %p45
      %p47 = scmp.ne.s32.totalorder %s33, %s34
      %p48 = scmp.eq.s32.totalorder %s26, 1
      %p49 = por %p47, %p48
      %p51 = scmp.ne.s32.totalorder %s34, %s50
      %p52 = scmp.eq.s32.totalorder %s26, 0
      %p53 = por %p51, %p52
      %s54 = ssub.s32 %s20, %s27
      %p55 = scmp.eq.s32.totalorder %s54, 0
      %s57 = sadd.s32 %s56, 1
      %s58 = scalar_select %p55, %s56, %s57
      %p61 = pneg %p55
      %p62 = scmp.eq.s32.totalorder %s20, 1
      %p63 = por %p61, %p62
      %p64 = scmp.ne.s32.totalorder %s56, %s59
      %p65 = scmp.eq.s32.totalorder %s20, 0
      %p66 = por %p64, %p65
      %p67 = scmp.ne.s32.totalorder %s56, %s59
      %p68 = scmp.eq.s32.totalorder %s25, 1
      %p69 = por %p67, %p68
      %p70 = scmp.ne.s32.totalorder %s59, %s60
      %p71 = scmp.eq.s32.totalorder %s25, 0
      %p72 = por %p70, %p71
      %p73 = scmp.ne.s32.totalorder %s59, %s60
      %p74 = scmp.eq.s32.totalorder %s26, 1
      %p75 = por %p73, %p74
      %p77 = scmp.ne.s32.totalorder %s60, %s76
      %p78 = scmp.eq.s32.totalorder %s26, 0
      %p79 = por %p77, %p78
      %s81 = sadd.s32 %s80, 1
      %p84 = scmp.eq.s32.totalorder %s20, 1
      %p85 = scmp.ne.s32.totalorder %s80, %s82
      %p86 = scmp.eq.s32.totalorder %s20, 0
      %p87 = por %p85, %p86
      %p88 = scmp.ne.s32.totalorder %s80, %s82
      %p89 = scmp.eq.s32.totalorder %s25, 1
      %p90 = por %p88, %p89
      %p91 = scmp.ne.s32.totalorder %s82, %s83
      %p92 = scmp.eq.s32.totalorder %s25, 0
      %p93 = por %p91, %p92
      %p94 = scmp.ne.s32.totalorder %s82, %s83
      %p95 = scmp.eq.s32.totalorder %s26, 1
      %p96 = por %p94, %p95
      %p98 = scmp.ne.s32.totalorder %s83, %s97
      %p99 = scmp.eq.s32.totalorder %s26, 0
      %p100 = por %p98, %p99
      %s102 = sadd.s32 %s101, 1
      %p105 = scmp.eq.s32.totalorder %s20, 1
      %p106 = scmp.ne.s32.totalorder %s101, %s103
      %p107 = scmp.eq.s32.totalorder %s20, 0
      %p108 = por %p106, %p107
      %p109 = scmp.ne.s32.totalorder %s101, %s103
      %p110 = scmp.eq.s32.totalorder %s25, 1
      %p111 = por %p109, %p110
      %p112 = scmp.ne.s32.totalorder %s103, %s104
      %p113 = scmp.eq.s32.totalorder %s25, 0
      %p114 = por %p112, %p113
      %p115 = scmp.ne.s32.totalorder %s103, %s104
      %p116 = scmp.eq.s32.totalorder %s26, 1
      %p117 = por %p115, %p116
      %p119 = scmp.ne.s32.totalorder %s104, %s118
      %p120 = scmp.eq.s32.totalorder %s26, 0
      %p121 = por %p119, %p120
      %s123 = sadd.s32 %s122, 1
      %p126 = scmp.eq.s32.totalorder %s20, 1
      %p127 = scmp.ne.s32.totalorder %s122, %s124
      %p128 = scmp.eq.s32.totalorder %s20, 0
      %p129 = por %p127, %p128
      %p130 = scmp.ne.s32.totalorder %s122, %s124
      %p131 = scmp.eq.s32.totalorder %s25, 1
      %p132 = por %p130, %p131
      %p133 = scmp.ne.s32.totalorder %s124, %s125
      %p134 = scmp.eq.s32.totalorder %s25, 0
      %p135 = por %p133, %p134
      %p136 = scmp.ne.s32.totalorder %s124, %s125
      %p137 = scmp.eq.s32.totalorder %s26, 1
      %p138 = por %p136, %p137
      %p140 = scmp.ne.s32.totalorder %s125, %s139
      %p141 = scmp.eq.s32.totalorder %s26, 0
      %p142 = por %p140, %p141
      %s143 = ssub.s32 %s20, %s27
      %p144 = scmp.eq.s32.totalorder %s143, 0
      %s146 = sadd.s32 %s145, 1
      %s147 = scalar_select %p144, %s145, %s146
      %p150 = pneg %p144
      %p151 = scmp.eq.s32.totalorder %s20, 1
      %p152 = por %p150, %p151
      %p153 = scmp.ne.s32.totalorder %s145, %s148
      %p154 = scmp.eq.s32.totalorder %s20, 0
      %p155 = por %p153, %p154
      %p156 = scmp.ne.s32.totalorder %s145, %s148
      %p157 = scmp.eq.s32.totalorder %s25, 1
      %p158 = por %p156, %p157
      %p159 = scmp.ne.s32.totalorder %s148, %s149
      %p160 = scmp.eq.s32.totalorder %s25, 0
      %p161 = por %p159, %p160
      %p162 = scmp.ne.s32.totalorder %s148, %s149
      %p163 = scmp.eq.s32.totalorder %s26, 1
      %p164 = por %p162, %p163
      %p166 = scmp.ne.s32.totalorder %s149, %s165
      %p167 = scmp.eq.s32.totalorder %s26, 0
      %p168 = por %p166, %p167
      %s170 = sadd.s32 %s169, 1
      %p173 = scmp.eq.s32.totalorder %s20, 1
      %p174 = scmp.ne.s32.totalorder %s169, %s171
      %p175 = scmp.eq.s32.totalorder %s20, 0
      %p176 = por %p174, %p175
      %p177 = scmp.ne.s32.totalorder %s169, %s171
      %p178 = scmp.eq.s32.totalorder %s25, 1
      %p179 = por %p177, %p178
      %p180 = scmp.ne.s32.totalorder %s171, %s172
      %p181 = scmp.eq.s32.totalorder %s25, 0
      %p182 = por %p180, %p181
      %p183 = scmp.ne.s32.totalorder %s171, %s172
      %p184 = scmp.eq.s32.totalorder %s26, 1
      %p185 = por %p183, %p184
      %p187 = scmp.ne.s32.totalorder %s172, %s186
      %p188 = scmp.eq.s32.totalorder %s26, 0
      %p189 = por %p187, %p188
      %s191 = sadd.s32 %s190, 1
      %p194 = scmp.eq.s32.totalorder %s20, 1
      %p195 = scmp.ne.s32.totalorder %s190, %s192
      %p196 = scmp.eq.s32.totalorder %s20, 0
      %p197 = por %p195, %p196
      %p198 = scmp.ne.s32.totalorder %s190, %s192
      %p199 = scmp.eq.s32.totalorder %s25, 1
      %p200 = por %p198, %p199
      %p201 = scmp.ne.s32.totalorder %s192, %s193
      %p202 = scmp.eq.s32.totalorder %s25, 0
      %p203 = por %p201, %p202
      %p204 = scmp.ne.s32.totalorder %s192, %s193
      %p205 = scmp.eq.s32.totalorder %s26, 1
      %p206 = por %p204, %p205
      %p208 = scmp.ne.s32.totalorder %s193, %s207
      %p209 = scmp.eq.s32.totalorder %s26, 0
      %p210 = por %p208, %p209
      %p211 = scmp.le.s32.totalorder 1, %s20
      %p212 = scmp.lt.s32.totalorder %s20, 3
      %p213 = pnand %p211, %p212
      %p214 = pneg %p213
      // Predicated region
      $region9: #{tpu_custom_call.1} parent=5 // pred_check
        _
      $region10: #{tpu_custom_call.1} parent=5 // pred_check_branch
        %216 = sbr.rel (%p213) target = $region12
      $region11: #{tpu_custom_call.1} parent=5 // pred_region
        %s217 = ssub.s32 %s20, 1
        // Predicated region
        $region13: #{tpu_custom_call.1} parent=11 // pred_check
          %p218 = pneg %p93
        $region14: #{tpu_custom_call.1} parent=11 // pred_check_branch
          %220 = sbr.rel (%p218) target = $region16
        $region15: #{tpu_custom_call.1} parent=11 // pred_region
          _
        $region16: #{tpu_custom_call.1} parent=11 // pred_fallthru
          _
        // Predicated region
        $region17: #{tpu_custom_call.1} parent=11 // pred_check
          %p221 = pneg %p114
        $region18: #{tpu_custom_call.1} parent=11 // pred_check_branch
          %223 = sbr.rel (%p221) target = $region20
        $region19: #{tpu_custom_call.1} parent=11 // pred_region
          %s225 = ssub.s32 128, 128
          %226 = vsyncadd [#allocation5], %s225
          %s228 = sshll.u32 [#allocation4], 4
          %s229 = int_to_ptr.vmem [resolvable:$true] %s228
          %231 = dma.hbm_to_vmem [thread:$0]  %s3, 128, %s229, [#allocation5]
        $region20: #{tpu_custom_call.1} parent=11 // pred_fallthru
          _
        // Predicated region
        $region21: #{tpu_custom_call.1} parent=11 // pred_check
          %p232 = pneg %p135
        $region22: #{tpu_custom_call.1} parent=11 // pred_check_branch
          %234 = sbr.rel (%p232) target = $region24
        $region23: #{tpu_custom_call.1} parent=11 // pred_region
          %s236 = ssub.s32 512, 512
          %237 = vsyncadd [#allocation8], %s236
          %s238 = sshll.u32 [#allocation7], 4
          %s239 = int_to_ptr.vmem [resolvable:$true] %s238
          %244 = dma.hbm_to_vmem [thread:$0]  %s4, 512, %s239, [#allocation8], 128, 128, 8
        $region24: #{tpu_custom_call.1} parent=11 // pred_fallthru
          _
      $region12: #{tpu_custom_call.1} parent=5 // pred_fallthru
        _
      %p245 = scmp.lt.s32.totalorder %s20, 2
      // Predicated region
      $region25: #{tpu_custom_call.1} parent=5 // pred_check
        %p246 = pneg %p245
      $region26: #{tpu_custom_call.1} parent=5 // pred_check_branch
        %248 = sbr.rel (%p246) target = $region28
      $region27: #{tpu_custom_call.1} parent=5 // pred_region
        // Predicated region
        $region29: #{tpu_custom_call.1} parent=27 // pred_check
          %p249 = pneg %p40
        $region30: #{tpu_custom_call.1} parent=27 // pred_check_branch
          %251 = sbr.rel (%p249) target = $region32
        $region31: #{tpu_custom_call.1} parent=27 // pred_region
          %s252 = smul.u32 8, %s20
          %p253 = scmp.lt.s32.totalorder %s252, 15
          %s254 = scalar_select %p253, %s252, 15
          %s255 = smul.addr %s254, 8
          %s256 = scalar_lea.vmem %s0, %s255
          %s257 = smul.u32 8, %s20
        $region32: #{tpu_custom_call.1} parent=27 // pred_fallthru
          _
        // Predicated region
        $region33: #{tpu_custom_call.1} parent=27 // pred_check
          %p258 = pneg %p66
        $region34: #{tpu_custom_call.1} parent=27 // pred_check_branch
          %260 = sbr.rel (%p258) target = $region36
        $region35: #{tpu_custom_call.1} parent=27 // pred_region
          %s261 = smul.u32 8, %s20
          %p262 = scmp.lt.s32.totalorder %s261, 15
          %s263 = scalar_select %p262, %s261, 15
          %s264 = smul.addr %s263, 8
          %s265 = scalar_lea.vmem %s1, %s264
          %s266 = smul.u32 8, %s20
        $region36: #{tpu_custom_call.1} parent=27 // pred_fallthru
          _
      $region28: #{tpu_custom_call.1} parent=5 // pred_fallthru
        _
      %p267 = scmp.le.s32.totalorder 1, %s20
      %p268 = scmp.lt.s32.totalorder %s20, 3
      %p269 = pnand %p267, %p268
      %p270 = pneg %p269
      // Predicated region
      $region37: #{tpu_custom_call.1} parent=5 // pred_check
        _
      $region38: #{tpu_custom_call.1} parent=5 // pred_check_branch
        %272 = sbr.rel (%p269) target = $region40
      $region39: #{tpu_custom_call.1} parent=5 // pred_region
        %s273 = ssub.s32 %s20, 1
        // Predicated region
        $region41: #{tpu_custom_call.1} parent=39 // pred_check
          %p274 = pneg %p114
        $region42: #{tpu_custom_call.1} parent=39 // pred_check_branch
          %276 = sbr.rel (%p274) target = $region44
        $region43: #{tpu_custom_call.1} parent=39 // pred_region
          %277 = dma.done [#allocation5], 128
        $region44: #{tpu_custom_call.1} parent=39 // pred_fallthru
          _
        // Predicated region
        $region45: #{tpu_custom_call.1} parent=39 // pred_check
          %p278 = pneg %p135
        $region46: #{tpu_custom_call.1} parent=39 // pred_check_branch
          %280 = sbr.rel (%p278) target = $region48
        $region47: #{tpu_custom_call.1} parent=39 // pred_region
          %281 = dma.done [#allocation8], 512
        $region48: #{tpu_custom_call.1} parent=39 // pred_fallthru
          _
        %s282 = smul.u32 8, %s25
        %p283 = scmp.lt.s32.totalorder %s282, 15
        %s284 = scalar_select %p283, %s282, 15
        %s285 = smul.addr %s284, 8
        %s286 = scalar_lea.vmem %s0, %s285
        %p287 = pneg %p46
        %p288 = pneg %p43
        %s289 = smul.u32 8, %s25
        %p290 = scmp.lt.s32.totalorder %s289, 15
        %s291 = scalar_select %p290, %s289, 15
        %s292 = smul.addr %s291, 8
        %s293 = scalar_lea.vmem %s1, %s292
        %p294 = pneg %p72
        %p295 = pneg %p69
        %p296 = pneg %p93
        %p297 = pneg %p90
        %p298 = pneg %p114
        %p299 = pneg %p111
        %p300 = pneg %p135
        %p301 = pneg %p132
        %p302 = pneg %p161
        %p303 = pneg %p158
        %s304 = sand.u32 %s148, 1
        %s305 = scalar_lea.sflag [#allocation6], %s304
        %s306 = sand.u32 %s148, 1
        %s307 = smul.addr %s306, 64
        %s308 = scalar_lea.vmem [#allocation9], %s307
        %p309 = pneg %p182
        %p310 = pneg %p179
        %p311 = pneg %p203
        %p312 = pneg %p200
        %s313 = smul.u32 8, %s25
        %p314 = scmp.lt.s32.totalorder %s313, 15
        %s315 = scalar_select %p314, %s313, 15
        %s316 = smul.addr %s315, 8
        %s317 = scalar_lea.vmem %s0, %s316
        %s318 = smul.u32 8, %s25
        %s319 = smul.u32 8, %s25
        %p320 = scmp.lt.s32.totalorder %s319, 15
        %s321 = scalar_select %p320, %s319, 15
        %s322 = smul.addr %s321, 8
        %s323 = scalar_lea.vmem %s1, %s322
        %s324 = smul.u32 8, %s25
        %s325 = smul.u32 8, %s25
        %p326 = scmp.eq.s32.totalorder %s25, 0
        // Predicated region
        $region49: #{tpu_custom_call.1} parent=39 // pred_check
          %p327 = pneg %p326
        $region50: #{tpu_custom_call.1} parent=39 // pred_check_branch
          %329 = sbr.rel (%p327) target = $region52
        $region51: #{tpu_custom_call.1} parent=39 // pred_region
          %v330 = vld [vmem:[%s2] sm:$0xff]
          %vm331 = vcmask 261120
          %332 = vst.msk [vmem:[#allocation2] sm:$0xff] %vm331, %v330
          %v333 = vld [vmem:[#allocation4] sm:$0xff]
          %334 = vst.msk [vmem:[#allocation3] sm:$0xff] %vm331, %v333
        $region52: #{tpu_custom_call.1} parent=39 // pred_fallthru
          _
        %v335 = vld [vmem:[#allocation7] sm:$0xff]
        %v336 = vld [vmem:[#allocation7 + $0x8] sm:$0xff]
        %v337 = vld [vmem:[#allocation7 + $0x10] sm:$0xff]
        %v338 = vld [vmem:[#allocation7 + $0x18] sm:$0xff]
        %v339 = vld [vmem:[#allocation2] sm:$0xff]
        %v340 = vld [vmem:[#allocation3] sm:$0xff]
        %v341 = vld [vmem:[%s317] sm:$0xff]
        %v342 = vld [vmem:[%s323] sm:$0xff]
        %vm343 = vcmask 261120
        %v345 = vsel %vm343, %v339, 0
        %347 = vmatprep.subr.mxu0 0.0
        %348 = vmatpush1.msra.mxu0 0.0
        %349 = vmatprep.subr.mxu0 0.0
        %350 = vmatpush1.msra.mxu0 0.0
        %351 = vmatprep.subr.mxu0 0.0
        %352 = vmatpush1.msra.mxu0 0.0
        %353 = vmatprep.subr.mxu0 0.0
        %354 = vmatpush1.msra.mxu0 0.0
        %355 = vmatprep.subr.mxu0 0.0
        %356 = vmatpush1.msra.mxu0 0.0
        %357 = vmatprep.subr.mxu0 0.0
        %358 = vmatpush1.msra.mxu0 0.0
        %359 = vmatprep.subr.mxu0 0.0
        %360 = vmatpush1.msra.mxu0 0.0
        %361 = vmatprep.subr.mxu0 0.0
        %362 = vmatpush1.msra.mxu0 0.0
        %363 = vmatprep.subr.mxu0 0.0
        %364 = vmatpush1.msra.mxu0 0.0
        %365 = vmatprep.subr.mxu0 0.0
        %366 = vmatpush1.msra.mxu0 0.0
        %367 = vmatprep.subr.mxu0 0.0
        %368 = vmatpush1.msra.mxu0 0.0
        %369 = vmatprep.subr.mxu0 0.0
        %370 = vmatpush1.msra.mxu0 0.0
        %371 = vmatprep.subr.mxu0 0.0
        %372 = vmatpush1.msra.mxu0 %v338
        %373 = vmatprep.subr.mxu0 0.0
        %374 = vmatpush1.msra.mxu0 %v337
        %375 = vmatprep.subr.mxu0 0.0
        %376 = vmatpush1.msra.mxu0 %v336
        %377 = vmatprep.subr.mxu0 0.0
        %378 = vmatpush1.msra.mxu0 %v335
        %379 = vmatprep.subr.mxu0 0.0
        %380 = vmatpush2.msra.mxu0 0.0
        %381 = vmatprep.subr.mxu0 0.0
        %382 = vmatpush2.msra.mxu0 0.0
        %383 = vmatprep.subr.mxu0 0.0
        %384 = vmatpush2.msra.mxu0 0.0
        %385 = vmatprep.subr.mxu0 0.0
        %386 = vmatpush2.msra.mxu0 0.0
        %387 = vmatprep.subr.mxu0 0.0
        %388 = vmatpush2.msra.mxu0 0.0
        %389 = vmatprep.subr.mxu0 0.0
        %390 = vmatpush2.msra.mxu0 0.0
        %391 = vmatprep.subr.mxu0 0.0
        %392 = vmatpush2.msra.mxu0 0.0
        %393 = vmatprep.subr.mxu0 0.0
        %394 = vmatpush2.msra.mxu0 0.0
        %395 = vmatprep.subr.mxu0 0.0
        %396 = vmatpush2.msra.mxu0 0.0
        %397 = vmatprep.subr.mxu0 0.0
        %398 = vmatpush2.msra.mxu0 0.0
        %399 = vmatprep.subr.mxu0 0.0
        %400 = vmatpush2.msra.mxu0 0.0
        %401 = vmatprep.subr.mxu0 0.0
        %402 = vmatpush2.msra.mxu0 0.0
        %403 = vmatprep.subr.mxu0 0.0
        %404 = vmatpush2.msra.mxu0 0.0
        %405 = vmatprep.subr.mxu0 0.0
        %406 = vmatpush2.msra.mxu0 0.0
        %407 = vmatprep.subr.mxu0 0.0
        %408 = vmatpush2.msra.mxu0 0.0
        %409 = vmatprep.subr.mxu0 0.0
        %410 = vmatpush2.msra.mxu0 0.0
        %411 = vmatprep.mubr.f32.mxu0 0.0
        %412 = vmatmul.mubr.f32.gmra.mxu0 %v345
        %v413 = vpop.f32.mrf.mxu0
        %v414 = vadd.f32 0.0, %v413
        %v415 = vpop.f32.mrf.mxu0
        %416 = vdwg.mxu0
        %v417 = vadd.f32 %v341, %v414
        %v418 = vxor.u32 %v417, 2147483648
        %v419 = vmul.f32 %v418, 1.442695
        %v420 = vpow.pop %v419
        %v421 = vadd.f32 %v420, 1.0
        %v422 = vrcp.pop %v421
        %v423 = vmul.f32 1.0, %v422
        %v424 = vtanh.pop %v417
        %426 = vrot.lane.b32.xlu0 %v340, 32
        %v427 = vpop.permute.xlu0 %426
        %v429 = vmul.f32 %v423, %v427
        %431 = vrot.lane.b32.xlu0 %v424, 64
        %v432 = vpop.permute.xlu0 %431
        %v434 = vmul.f32 %v423, %v432
        %436 = vrot.lane.b32.xlu0 %v434, 32
        %v437 = vpop.permute.xlu0 %436
        %v439 = vadd.f32 %v429, %v437
        %v440 = vtanh.pop %v439
        %442 = vrot.lane.b32.xlu0 %v440, 64
        %v443 = vpop.permute.xlu0 %442
        %v445 = vmul.f32 %v423, %v443
        %446 = vrot.lane.b32.xlu0 %v339, 96
        %v447 = vpop.permute.xlu0 %446
        %v449 = vsub.f32 %v445, %v447
        %451 = vset.pattern.permute.xlu0 0
        %452 = vperm.xlu0 %451, %v342
        %v453 = vpop.permute.xlu0 %452
        %v455 = vmul.f32 %v453, %v449
        %457 = vrot.lane.b32.xlu0 %v455, 32
        %v458 = vpop.permute.xlu0 %457
        %v460 = vadd.f32 %v339, %v458
        %v461 = vsub.f32 %v439, %v427
        %v462 = vmul.f32 %v453, %v461
        %464 = vrot.lane.b32.xlu0 %v462, 96
        %v465 = vpop.permute.xlu0 %464
        %v467 = vadd.f32 %v340, %v465
        %v468 = vmul.f32 %v453, %v445
        %470 = vrot.lane.b32.xlu0 %v468, 32
        %v471 = vpop.permute.xlu0 %470
        %473 = vst.msk [vmem:[%s308] sm:$0xff] %vm343, %v471
        %s474 = scalar_lea.vmem %s317, 8
        %v475 = vld [vmem:[%s474] sm:$0xff]
        %s476 = scalar_lea.vmem %s323, 8
        %v477 = vld [vmem:[%s476] sm:$0xff]
        %v479 = vsel %vm343, %v460, 0
        %481 = vmatprep.subr.mxu0 0.0
        %482 = vmatpush1.msra.mxu0 0.0
        %483 = vmatprep.subr.mxu0 0.0
        %484 = vmatpush1.msra.mxu0 0.0
        %485 = vmatprep.subr.mxu0 0.0
        %486 = vmatpush1.msra.mxu0 0.0
        %487 = vmatprep.subr.mxu0 0.0
        %488 = vmatpush1.msra.mxu0 0.0
        %489 = vmatprep.subr.mxu0 0.0
        %490 = vmatpush1.msra.mxu0 0.0
        %491 = vmatprep.subr.mxu0 0.0
        %492 = vmatpush1.msra.mxu0 0.0
        %493 = vmatprep.subr.mxu0 0.0
        %494 = vmatpush1.msra.mxu0 0.0
        %495 = vmatprep.subr.mxu0 0.0
        %496 = vmatpush1.msra.mxu0 0.0
        %497 = vmatprep.subr.mxu0 0.0
        %498 = vmatpush1.msra.mxu0 0.0
        %499 = vmatprep.subr.mxu0 0.0
        %500 = vmatpush1.msra.mxu0 0.0
        %501 = vmatprep.subr.mxu0 0.0
        %502 = vmatpush1.msra.mxu0 0.0
        %503 = vmatprep.subr.mxu0 0.0
        %504 = vmatpush1.msra.mxu0 0.0
        %505 = vmatprep.subr.mxu0 0.0
        %506 = vmatpush1.msra.mxu0 %v338
        %507 = vmatprep.subr.mxu0 0.0
        %508 = vmatpush1.msra.mxu0 %v337
        %509 = vmatprep.subr.mxu0 0.0
        %510 = vmatpush1.msra.mxu0 %v336
        %511 = vmatprep.subr.mxu0 0.0
        %512 = vmatpush1.msra.mxu0 %v335
        %513 = vmatprep.subr.mxu0 0.0
        %514 = vmatpush2.msra.mxu0 0.0
        %515 = vmatprep.subr.mxu0 0.0
        %516 = vmatpush2.msra.mxu0 0.0
        %517 = vmatprep.subr.mxu0 0.0
        %518 = vmatpush2.msra.mxu0 0.0
        %519 = vmatprep.subr.mxu0 0.0
        %520 = vmatpush2.msra.mxu0 0.0
        %521 = vmatprep.subr.mxu0 0.0
        %522 = vmatpush2.msra.mxu0 0.0
        %523 = vmatprep.subr.mxu0 0.0
        %524 = vmatpush2.msra.mxu0 0.0
        %525 = vmatprep.subr.mxu0 0.0
        %526 = vmatpush2.msra.mxu0 0.0
        %527 = vmatprep.subr.mxu0 0.0
        %528 = vmatpush2.msra.mxu0 0.0
        %529 = vmatprep.subr.mxu0 0.0
        %530 = vmatpush2.msra.mxu0 0.0
        %531 = vmatprep.subr.mxu0 0.0
        %532 = vmatpush2.msra.mxu0 0.0
        %533 = vmatprep.subr.mxu0 0.0
        %534 = vmatpush2.msra.mxu0 0.0
        %535 = vmatprep.subr.mxu0 0.0
        %536 = vmatpush2.msra.mxu0 0.0
        %537 = vmatprep.subr.mxu0 0.0
        %538 = vmatpush2.msra.mxu0 0.0
        %539 = vmatprep.subr.mxu0 0.0
        %540 = vmatpush2.msra.mxu0 0.0
        %541 = vmatprep.subr.mxu0 0.0
        %542 = vmatpush2.msra.mxu0 0.0
        %543 = vmatprep.subr.mxu0 0.0
        %544 = vmatpush2.msra.mxu0 0.0
        %545 = vmatprep.mubr.f32.mxu0 0.0
        %546 = vmatmul.mubr.f32.gmra.mxu0 %v479
        %v547 = vpop.f32.mrf.mxu0
        %v548 = vadd.f32 0.0, %v547
        %v549 = vpop.f32.mrf.mxu0
        %550 = vdwg.mxu0
        %v551 = vadd.f32 %v475, %v548
        %v552 = vxor.u32 %v551, 2147483648
        %v553 = vmul.f32 %v552, 1.442695
        %v554 = vpow.pop %v553
        %v555 = vadd.f32 %v554, 1.0
        %v556 = vrcp.pop %v555
        %v557 = vmul.f32 1.0, %v556
        %v558 = vtanh.pop %v551
        %560 = vrot.lane.b32.xlu0 %v467, 32
        %v561 = vpop.permute.xlu0 %560
        %v563 = vmul.f32 %v557, %v561
        %565 = vrot.lane.b32.xlu0 %v558, 64
        %v566 = vpop.permute.xlu0 %565
        %v568 = vmul.f32 %v557, %v566
        %570 = vrot.lane.b32.xlu0 %v568, 32
        %v571 = vpop.permute.xlu0 %570
        %v573 = vadd.f32 %v563, %v571
        %v574 = vtanh.pop %v573
        %576 = vrot.lane.b32.xlu0 %v574, 64
        %v577 = vpop.permute.xlu0 %576
        %v579 = vmul.f32 %v557, %v577
        %580 = vrot.lane.b32.xlu0 %v460, 96
        %v581 = vpop.permute.xlu0 %580
        %v583 = vsub.f32 %v579, %v581
        %585 = vset.pattern.permute.xlu0 0
        %586 = vperm.xlu0 %585, %v477
        %v587 = vpop.permute.xlu0 %586
        %v589 = vmul.f32 %v587, %v583
        %591 = vrot.lane.b32.xlu0 %v589, 32
        %v592 = vpop.permute.xlu0 %591
        %v594 = vadd.f32 %v460, %v592
        %v595 = vsub.f32 %v573, %v561
        %v596 = vmul.f32 %v587, %v595
        %598 = vrot.lane.b32.xlu0 %v596, 96
        %v599 = vpop.permute.xlu0 %598
        %v601 = vadd.f32 %v467, %v599
        %v602 = vmul.f32 %v587, %v579
        %604 = vrot.lane.b32.xlu0 %v602, 32
        %v605 = vpop.permute.xlu0 %604
        %s607 = scalar_lea.vmem %s308, 8 [#allocation9]
        %608 = vst.msk [vmem:[%s607] sm:$0xff] %vm343, %v605
        %s609 = scalar_lea.vmem %s317, 16
        %v610 = vld [vmem:[%s609] sm:$0xff]
        %s611 = scalar_lea.vmem %s323, 16
        %v612 = vld [vmem:[%s611] sm:$0xff]
        %v614 = vsel %vm343, %v594, 0
        %616 = vmatprep.subr.mxu0 0.0
        %617 = vmatpush1.msra.mxu0 0.0
        %618 = vmatprep.subr.mxu0 0.0
        %619 = vmatpush1.msra.mxu0 0.0
        %620 = vmatprep.subr.mxu0 0.0
        %621 = vmatpush1.msra.mxu0 0.0
        %622 = vmatprep.subr.mxu0 0.0
        %623 = vmatpush1.msra.mxu0 0.0
        %624 = vmatprep.subr.mxu0 0.0
        %625 = vmatpush1.msra.mxu0 0.0
        %626 = vmatprep.subr.mxu0 0.0
        %627 = vmatpush1.msra.mxu0 0.0
        %628 = vmatprep.subr.mxu0 0.0
        %629 = vmatpush1.msra.mxu0 0.0
        %630 = vmatprep.subr.mxu0 0.0
        %631 = vmatpush1.msra.mxu0 0.0
        %632 = vmatprep.subr.mxu0 0.0
        %633 = vmatpush1.msra.mxu0 0.0
        %634 = vmatprep.subr.mxu0 0.0
        %635 = vmatpush1.msra.mxu0 0.0
        %636 = vmatprep.subr.mxu0 0.0
        %637 = vmatpush1.msra.mxu0 0.0
        %638 = vmatprep.subr.mxu0 0.0
        %639 = vmatpush1.msra.mxu0 0.0
        %640 = vmatprep.subr.mxu0 0.0
        %641 = vmatpush1.msra.mxu0 %v338
        %642 = vmatprep.subr.mxu0 0.0
        %643 = vmatpush1.msra.mxu0 %v337
        %644 = vmatprep.subr.mxu0 0.0
        %645 = vmatpush1.msra.mxu0 %v336
        %646 = vmatprep.subr.mxu0 0.0
        %647 = vmatpush1.msra.mxu0 %v335
        %648 = vmatprep.subr.mxu0 0.0
        %649 = vmatpush2.msra.mxu0 0.0
        %650 = vmatprep.subr.mxu0 0.0
        %651 = vmatpush2.msra.mxu0 0.0
        %652 = vmatprep.subr.mxu0 0.0
        %653 = vmatpush2.msra.mxu0 0.0
        %654 = vmatprep.subr.mxu0 0.0
        %655 = vmatpush2.msra.mxu0 0.0
        %656 = vmatprep.subr.mxu0 0.0
        %657 = vmatpush2.msra.mxu0 0.0
        %658 = vmatprep.subr.mxu0 0.0
        %659 = vmatpush2.msra.mxu0 0.0
        %660 = vmatprep.subr.mxu0 0.0
        %661 = vmatpush2.msra.mxu0 0.0
        %662 = vmatprep.subr.mxu0 0.0
        %663 = vmatpush2.msra.mxu0 0.0
        %664 = vmatprep.subr.mxu0 0.0
        %665 = vmatpush2.msra.mxu0 0.0
        %666 = vmatprep.subr.mxu0 0.0
        %667 = vmatpush2.msra.mxu0 0.0
        %668 = vmatprep.subr.mxu0 0.0
        %669 = vmatpush2.msra.mxu0 0.0
        %670 = vmatprep.subr.mxu0 0.0
        %671 = vmatpush2.msra.mxu0 0.0
        %672 = vmatprep.subr.mxu0 0.0
        %673 = vmatpush2.msra.mxu0 0.0
        %674 = vmatprep.subr.mxu0 0.0
        %675 = vmatpush2.msra.mxu0 0.0
        %676 = vmatprep.subr.mxu0 0.0
        %677 = vmatpush2.msra.mxu0 0.0
        %678 = vmatprep.subr.mxu0 0.0
        %679 = vmatpush2.msra.mxu0 0.0
        %680 = vmatprep.mubr.f32.mxu0 0.0
        %681 = vmatmul.mubr.f32.gmra.mxu0 %v614
        %v682 = vpop.f32.mrf.mxu0
        %v683 = vadd.f32 0.0, %v682
        %v684 = vpop.f32.mrf.mxu0
        %685 = vdwg.mxu0
        %v686 = vadd.f32 %v610, %v683
        %v687 = vxor.u32 %v686, 2147483648
        %v688 = vmul.f32 %v687, 1.442695
        %v689 = vpow.pop %v688
        %v690 = vadd.f32 %v689, 1.0
        %v691 = vrcp.pop %v690
        %v692 = vmul.f32 1.0, %v691
        %v693 = vtanh.pop %v686
        %695 = vrot.lane.b32.xlu0 %v601, 32
        %v696 = vpop.permute.xlu0 %695
        %v698 = vmul.f32 %v692, %v696
        %700 = vrot.lane.b32.xlu0 %v693, 64
        %v701 = vpop.permute.xlu0 %700
        %v703 = vmul.f32 %v692, %v701
        %705 = vrot.lane.b32.xlu0 %v703, 32
        %v706 = vpop.permute.xlu0 %705
        %v708 = vadd.f32 %v698, %v706
        %v709 = vtanh.pop %v708
        %711 = vrot.lane.b32.xlu0 %v709, 64
        %v712 = vpop.permute.xlu0 %711
        %v714 = vmul.f32 %v692, %v712
        %715 = vrot.lane.b32.xlu0 %v594, 96
        %v716 = vpop.permute.xlu0 %715
        %v718 = vsub.f32 %v714, %v716
        %720 = vset.pattern.permute.xlu0 0
        %721 = vperm.xlu0 %720, %v612
        %v722 = vpop.permute.xlu0 %721
        %v724 = vmul.f32 %v722, %v718
        %726 = vrot.lane.b32.xlu0 %v724, 32
        %v727 = vpop.permute.xlu0 %726
        %v729 = vadd.f32 %v594, %v727
        %v730 = vsub.f32 %v708, %v696
        %v731 = vmul.f32 %v722, %v730
        %733 = vrot.lane.b32.xlu0 %v731, 96
        %v734 = vpop.permute.xlu0 %733
        %v736 = vadd.f32 %v601, %v734
        %v737 = vmul.f32 %v722, %v714
        %739 = vrot.lane.b32.xlu0 %v737, 32
        %v740 = vpop.permute.xlu0 %739
        %s742 = scalar_lea.vmem %s308, 16 [#allocation9]
        %743 = vst.msk [vmem:[%s742] sm:$0xff] %vm343, %v740
        %s744 = scalar_lea.vmem %s317, 24
        %v745 = vld [vmem:[%s744] sm:$0xff]
        %s746 = scalar_lea.vmem %s323, 24
        %v747 = vld [vmem:[%s746] sm:$0xff]
        %v749 = vsel %vm343, %v729, 0
        %751 = vmatprep.subr.mxu0 0.0
        %752 = vmatpush1.msra.mxu0 0.0
        %753 = vmatprep.subr.mxu0 0.0
        %754 = vmatpush1.msra.mxu0 0.0
        %755 = vmatprep.subr.mxu0 0.0
        %756 = vmatpush1.msra.mxu0 0.0
        %757 = vmatprep.subr.mxu0 0.0
        %758 = vmatpush1.msra.mxu0 0.0
        %759 = vmatprep.subr.mxu0 0.0
        %760 = vmatpush1.msra.mxu0 0.0
        %761 = vmatprep.subr.mxu0 0.0
        %762 = vmatpush1.msra.mxu0 0.0
        %763 = vmatprep.subr.mxu0 0.0
        %764 = vmatpush1.msra.mxu0 0.0
        %765 = vmatprep.subr.mxu0 0.0
        %766 = vmatpush1.msra.mxu0 0.0
        %767 = vmatprep.subr.mxu0 0.0
        %768 = vmatpush1.msra.mxu0 0.0
        %769 = vmatprep.subr.mxu0 0.0
        %770 = vmatpush1.msra.mxu0 0.0
        %771 = vmatprep.subr.mxu0 0.0
        %772 = vmatpush1.msra.mxu0 0.0
        %773 = vmatprep.subr.mxu0 0.0
        %774 = vmatpush1.msra.mxu0 0.0
        %775 = vmatprep.subr.mxu0 0.0
        %776 = vmatpush1.msra.mxu0 %v338
        %777 = vmatprep.subr.mxu0 0.0
        %778 = vmatpush1.msra.mxu0 %v337
        %779 = vmatprep.subr.mxu0 0.0
        %780 = vmatpush1.msra.mxu0 %v336
        %781 = vmatprep.subr.mxu0 0.0
        %782 = vmatpush1.msra.mxu0 %v335
        %783 = vmatprep.subr.mxu0 0.0
        %784 = vmatpush2.msra.mxu0 0.0
        %785 = vmatprep.subr.mxu0 0.0
        %786 = vmatpush2.msra.mxu0 0.0
        %787 = vmatprep.subr.mxu0 0.0
        %788 = vmatpush2.msra.mxu0 0.0
        %789 = vmatprep.subr.mxu0 0.0
        %790 = vmatpush2.msra.mxu0 0.0
        %791 = vmatprep.subr.mxu0 0.0
        %792 = vmatpush2.msra.mxu0 0.0
        %793 = vmatprep.subr.mxu0 0.0
        %794 = vmatpush2.msra.mxu0 0.0
        %795 = vmatprep.subr.mxu0 0.0
        %796 = vmatpush2.msra.mxu0 0.0
        %797 = vmatprep.subr.mxu0 0.0
        %798 = vmatpush2.msra.mxu0 0.0
        %799 = vmatprep.subr.mxu0 0.0
        %800 = vmatpush2.msra.mxu0 0.0
        %801 = vmatprep.subr.mxu0 0.0
        %802 = vmatpush2.msra.mxu0 0.0
        %803 = vmatprep.subr.mxu0 0.0
        %804 = vmatpush2.msra.mxu0 0.0
        %805 = vmatprep.subr.mxu0 0.0
        %806 = vmatpush2.msra.mxu0 0.0
        %807 = vmatprep.subr.mxu0 0.0
        %808 = vmatpush2.msra.mxu0 0.0
        %809 = vmatprep.subr.mxu0 0.0
        %810 = vmatpush2.msra.mxu0 0.0
        %811 = vmatprep.subr.mxu0 0.0
        %812 = vmatpush2.msra.mxu0 0.0
        %813 = vmatprep.subr.mxu0 0.0
        %814 = vmatpush2.msra.mxu0 0.0
        %815 = vmatprep.mubr.f32.mxu0 0.0
        %816 = vmatmul.mubr.f32.gmra.mxu0 %v749
        %v817 = vpop.f32.mrf.mxu0
        %v818 = vadd.f32 0.0, %v817
        %v819 = vpop.f32.mrf.mxu0
        %820 = vdwg.mxu0
        %v821 = vadd.f32 %v745, %v818
        %v822 = vxor.u32 %v821, 2147483648
        %v823 = vmul.f32 %v822, 1.442695
        %v824 = vpow.pop %v823
        %v825 = vadd.f32 %v824, 1.0
        %v826 = vrcp.pop %v825
        %v827 = vmul.f32 1.0, %v826
        %v828 = vtanh.pop %v821
        %830 = vrot.lane.b32.xlu0 %v736, 32
        %v831 = vpop.permute.xlu0 %830
        %v833 = vmul.f32 %v827, %v831
        %835 = vrot.lane.b32.xlu0 %v828, 64
        %v836 = vpop.permute.xlu0 %835
        %v838 = vmul.f32 %v827, %v836
        %840 = vrot.lane.b32.xlu0 %v838, 32
        %v841 = vpop.permute.xlu0 %840
        %v843 = vadd.f32 %v833, %v841
        %v844 = vtanh.pop %v843
        %846 = vrot.lane.b32.xlu0 %v844, 64
        %v847 = vpop.permute.xlu0 %846
        %v849 = vmul.f32 %v827, %v847
        %850 = vrot.lane.b32.xlu0 %v729, 96
        %v851 = vpop.permute.xlu0 %850
        %v853 = vsub.f32 %v849, %v851
        %855 = vset.pattern.permute.xlu0 0
        %856 = vperm.xlu0 %855, %v747
        %v857 = vpop.permute.xlu0 %856
        %v859 = vmul.f32 %v857, %v853
        %861 = vrot.lane.b32.xlu0 %v859, 32
        %v862 = vpop.permute.xlu0 %861
        %v864 = vadd.f32 %v729, %v862
        %v865 = vsub.f32 %v843, %v831
        %v866 = vmul.f32 %v857, %v865
        %868 = vrot.lane.b32.xlu0 %v866, 96
        %v869 = vpop.permute.xlu0 %868
        %v871 = vadd.f32 %v736, %v869
        %v872 = vmul.f32 %v857, %v849
        %874 = vrot.lane.b32.xlu0 %v872, 32
        %v875 = vpop.permute.xlu0 %874
        %s877 = scalar_lea.vmem %s308, 24 [#allocation9]
        %878 = vst.msk [vmem:[%s877] sm:$0xff] %vm343, %v875
        %s879 = scalar_lea.vmem %s317, 32
        %v880 = vld [vmem:[%s879] sm:$0xff]
        %s881 = scalar_lea.vmem %s323, 32
        %v882 = vld [vmem:[%s881] sm:$0xff]
        %v884 = vsel %vm343, %v864, 0
        %886 = vmatprep.subr.mxu0 0.0
        %887 = vmatpush1.msra.mxu0 0.0
        %888 = vmatprep.subr.mxu0 0.0
        %889 = vmatpush1.msra.mxu0 0.0
        %890 = vmatprep.subr.mxu0 0.0
        %891 = vmatpush1.msra.mxu0 0.0
        %892 = vmatprep.subr.mxu0 0.0
        %893 = vmatpush1.msra.mxu0 0.0
        %894 = vmatprep.subr.mxu0 0.0
        %895 = vmatpush1.msra.mxu0 0.0
        %896 = vmatprep.subr.mxu0 0.0
        %897 = vmatpush1.msra.mxu0 0.0
        %898 = vmatprep.subr.mxu0 0.0
        %899 = vmatpush1.msra.mxu0 0.0
        %900 = vmatprep.subr.mxu0 0.0
        %901 = vmatpush1.msra.mxu0 0.0
        %902 = vmatprep.subr.mxu0 0.0
        %903 = vmatpush1.msra.mxu0 0.0
        %904 = vmatprep.subr.mxu0 0.0
        %905 = vmatpush1.msra.mxu0 0.0
        %906 = vmatprep.subr.mxu0 0.0
        %907 = vmatpush1.msra.mxu0 0.0
        %908 = vmatprep.subr.mxu0 0.0
        %909 = vmatpush1.msra.mxu0 0.0
        %910 = vmatprep.subr.mxu0 0.0
        %911 = vmatpush1.msra.mxu0 %v338
        %912 = vmatprep.subr.mxu0 0.0
        %913 = vmatpush1.msra.mxu0 %v337
        %914 = vmatprep.subr.mxu0 0.0
        %915 = vmatpush1.msra.mxu0 %v336
        %916 = vmatprep.subr.mxu0 0.0
        %917 = vmatpush1.msra.mxu0 %v335
        %918 = vmatprep.subr.mxu0 0.0
        %919 = vmatpush2.msra.mxu0 0.0
        %920 = vmatprep.subr.mxu0 0.0
        %921 = vmatpush2.msra.mxu0 0.0
        %922 = vmatprep.subr.mxu0 0.0
        %923 = vmatpush2.msra.mxu0 0.0
        %924 = vmatprep.subr.mxu0 0.0
        %925 = vmatpush2.msra.mxu0 0.0
        %926 = vmatprep.subr.mxu0 0.0
        %927 = vmatpush2.msra.mxu0 0.0
        %928 = vmatprep.subr.mxu0 0.0
        %929 = vmatpush2.msra.mxu0 0.0
        %930 = vmatprep.subr.mxu0 0.0
        %931 = vmatpush2.msra.mxu0 0.0
        %932 = vmatprep.subr.mxu0 0.0
        %933 = vmatpush2.msra.mxu0 0.0
        %934 = vmatprep.subr.mxu0 0.0
        %935 = vmatpush2.msra.mxu0 0.0
        %936 = vmatprep.subr.mxu0 0.0
        %937 = vmatpush2.msra.mxu0 0.0
        %938 = vmatprep.subr.mxu0 0.0
        %939 = vmatpush2.msra.mxu0 0.0
        %940 = vmatprep.subr.mxu0 0.0
        %941 = vmatpush2.msra.mxu0 0.0
        %942 = vmatprep.subr.mxu0 0.0
        %943 = vmatpush2.msra.mxu0 0.0
        %944 = vmatprep.subr.mxu0 0.0
        %945 = vmatpush2.msra.mxu0 0.0
        %946 = vmatprep.subr.mxu0 0.0
        %947 = vmatpush2.msra.mxu0 0.0
        %948 = vmatprep.subr.mxu0 0.0
        %949 = vmatpush2.msra.mxu0 0.0
        %950 = vmatprep.mubr.f32.mxu0 0.0
        %951 = vmatmul.mubr.f32.gmra.mxu0 %v884
        %v952 = vpop.f32.mrf.mxu0
        %v953 = vadd.f32 0.0, %v952
        %v954 = vpop.f32.mrf.mxu0
        %955 = vdwg.mxu0
        %v956 = vadd.f32 %v880, %v953
        %v957 = vxor.u32 %v956, 2147483648
        %v958 = vmul.f32 %v957, 1.442695
        %v959 = vpow.pop %v958
        %v960 = vadd.f32 %v959, 1.0
        %v961 = vrcp.pop %v960
        %v962 = vmul.f32 1.0, %v961
        %v963 = vtanh.pop %v956
        %965 = vrot.lane.b32.xlu0 %v871, 32
        %v966 = vpop.permute.xlu0 %965
        %v968 = vmul.f32 %v962, %v966
        %970 = vrot.lane.b32.xlu0 %v963, 64
        %v971 = vpop.permute.xlu0 %970
        %v973 = vmul.f32 %v962, %v971
        %975 = vrot.lane.b32.xlu0 %v973, 32
        %v976 = vpop.permute.xlu0 %975
        %v978 = vadd.f32 %v968, %v976
        %v979 = vtanh.pop %v978
        %981 = vrot.lane.b32.xlu0 %v979, 64
        %v982 = vpop.permute.xlu0 %981
        %v984 = vmul.f32 %v962, %v982
        %985 = vrot.lane.b32.xlu0 %v864, 96
        %v986 = vpop.permute.xlu0 %985
        %v988 = vsub.f32 %v984, %v986
        %990 = vset.pattern.permute.xlu0 0
        %991 = vperm.xlu0 %990, %v882
        %v992 = vpop.permute.xlu0 %991
        %v994 = vmul.f32 %v992, %v988
        %996 = vrot.lane.b32.xlu0 %v994, 32
        %v997 = vpop.permute.xlu0 %996
        %v999 = vadd.f32 %v864, %v997
        %v1000 = vsub.f32 %v978, %v966
        %v1001 = vmul.f32 %v992, %v1000
        %1003 = vrot.lane.b32.xlu0 %v1001, 96
        %v1004 = vpop.permute.xlu0 %1003
        %v1006 = vadd.f32 %v871, %v1004
        %v1007 = vmul.f32 %v992, %v984
        %1009 = vrot.lane.b32.xlu0 %v1007, 32
        %v1010 = vpop.permute.xlu0 %1009
        %s1012 = scalar_lea.vmem %s308, 32 [#allocation9]
        %1013 = vst.msk [vmem:[%s1012] sm:$0xff] %vm343, %v1010
        %s1014 = scalar_lea.vmem %s317, 40
        %v1015 = vld [vmem:[%s1014] sm:$0xff]
        %s1016 = scalar_lea.vmem %s323, 40
        %v1017 = vld [vmem:[%s1016] sm:$0xff]
        %v1019 = vsel %vm343, %v999, 0
        %1021 = vmatprep.subr.mxu0 0.0
        %1022 = vmatpush1.msra.mxu0 0.0
        %1023 = vmatprep.subr.mxu0 0.0
        %1024 = vmatpush1.msra.mxu0 0.0
        %1025 = vmatprep.subr.mxu0 0.0
        %1026 = vmatpush1.msra.mxu0 0.0
        %1027 = vmatprep.subr.mxu0 0.0
        %1028 = vmatpush1.msra.mxu0 0.0
        %1029 = vmatprep.subr.mxu0 0.0
        %1030 = vmatpush1.msra.mxu0 0.0
        %1031 = vmatprep.subr.mxu0 0.0
        %1032 = vmatpush1.msra.mxu0 0.0
        %1033 = vmatprep.subr.mxu0 0.0
        %1034 = vmatpush1.msra.mxu0 0.0
        %1035 = vmatprep.subr.mxu0 0.0
        %1036 = vmatpush1.msra.mxu0 0.0
        %1037 = vmatprep.subr.mxu0 0.0
        %1038 = vmatpush1.msra.mxu0 0.0
        %1039 = vmatprep.subr.mxu0 0.0
        %1040 = vmatpush1.msra.mxu0 0.0
        %1041 = vmatprep.subr.mxu0 0.0
        %1042 = vmatpush1.msra.mxu0 0.0
        %1043 = vmatprep.subr.mxu0 0.0
        %1044 = vmatpush1.msra.mxu0 0.0
        %1045 = vmatprep.subr.mxu0 0.0
        %1046 = vmatpush1.msra.mxu0 %v338
        %1047 = vmatprep.subr.mxu0 0.0
        %1048 = vmatpush1.msra.mxu0 %v337
        %1049 = vmatprep.subr.mxu0 0.0
        %1050 = vmatpush1.msra.mxu0 %v336
        %1051 = vmatprep.subr.mxu0 0.0
        %1052 = vmatpush1.msra.mxu0 %v335
        %1053 = vmatprep.subr.mxu0 0.0
        %1054 = vmatpush2.msra.mxu0 0.0
        %1055 = vmatprep.subr.mxu0 0.0
        %1056 = vmatpush2.msra.mxu0 0.0
        %1057 = vmatprep.subr.mxu0 0.0
        %1058 = vmatpush2.msra.mxu0 0.0
        %1059 = vmatprep.subr.mxu0 0.0
        %1060 = vmatpush2.msra.mxu0 0.0
        %1061 = vmatprep.subr.mxu0 0.0
        %1062 = vmatpush2.msra.mxu0 0.0
        %1063 = vmatprep.subr.mxu0 0.0
        %1064 = vmatpush2.msra.mxu0 0.0
        %1065 = vmatprep.subr.mxu0 0.0
        %1066 = vmatpush2.msra.mxu0 0.0
        %1067 = vmatprep.subr.mxu0 0.0
        %1068 = vmatpush2.msra.mxu0 0.0
        %1069 = vmatprep.subr.mxu0 0.0
        %1070 = vmatpush2.msra.mxu0 0.0
        %1071 = vmatprep.subr.mxu0 0.0
        %1072 = vmatpush2.msra.mxu0 0.0
        %1073 = vmatprep.subr.mxu0 0.0
        %1074 = vmatpush2.msra.mxu0 0.0
        %1075 = vmatprep.subr.mxu0 0.0
        %1076 = vmatpush2.msra.mxu0 0.0
        %1077 = vmatprep.subr.mxu0 0.0
        %1078 = vmatpush2.msra.mxu0 0.0
        %1079 = vmatprep.subr.mxu0 0.0
        %1080 = vmatpush2.msra.mxu0 0.0
        %1081 = vmatprep.subr.mxu0 0.0
        %1082 = vmatpush2.msra.mxu0 0.0
        %1083 = vmatprep.subr.mxu0 0.0
        %1084 = vmatpush2.msra.mxu0 0.0
        %1085 = vmatprep.mubr.f32.mxu0 0.0
        %1086 = vmatmul.mubr.f32.gmra.mxu0 %v1019
        %v1087 = vpop.f32.mrf.mxu0
        %v1088 = vadd.f32 0.0, %v1087
        %v1089 = vpop.f32.mrf.mxu0
        %1090 = vdwg.mxu0
        %v1091 = vadd.f32 %v1015, %v1088
        %v1092 = vxor.u32 %v1091, 2147483648
        %v1093 = vmul.f32 %v1092, 1.442695
        %v1094 = vpow.pop %v1093
        %v1095 = vadd.f32 %v1094, 1.0
        %v1096 = vrcp.pop %v1095
        %v1097 = vmul.f32 1.0, %v1096
        %v1098 = vtanh.pop %v1091
        %1100 = vrot.lane.b32.xlu0 %v1006, 32
        %v1101 = vpop.permute.xlu0 %1100
        %v1103 = vmul.f32 %v1097, %v1101
        %1105 = vrot.lane.b32.xlu0 %v1098, 64
        %v1106 = vpop.permute.xlu0 %1105
        %v1108 = vmul.f32 %v1097, %v1106
        %1110 = vrot.lane.b32.xlu0 %v1108, 32
        %v1111 = vpop.permute.xlu0 %1110
        %v1113 = vadd.f32 %v1103, %v1111
        %v1114 = vtanh.pop %v1113
        %1116 = vrot.lane.b32.xlu0 %v1114, 64
        %v1117 = vpop.permute.xlu0 %1116
        %v1119 = vmul.f32 %v1097, %v1117
        %1120 = vrot.lane.b32.xlu0 %v999, 96
        %v1121 = vpop.permute.xlu0 %1120
        %v1123 = vsub.f32 %v1119, %v1121
        %1125 = vset.pattern.permute.xlu0 0
        %1126 = vperm.xlu0 %1125, %v1017
        %v1127 = vpop.permute.xlu0 %1126
        %v1129 = vmul.f32 %v1127, %v1123
        %1131 = vrot.lane.b32.xlu0 %v1129, 32
        %v1132 = vpop.permute.xlu0 %1131
        %v1134 = vadd.f32 %v999, %v1132
        %v1135 = vsub.f32 %v1113, %v1101
        %v1136 = vmul.f32 %v1127, %v1135
        %1138 = vrot.lane.b32.xlu0 %v1136, 96
        %v1139 = vpop.permute.xlu0 %1138
        %v1141 = vadd.f32 %v1006, %v1139
        %v1142 = vmul.f32 %v1127, %v1119
        %1144 = vrot.lane.b32.xlu0 %v1142, 32
        %v1145 = vpop.permute.xlu0 %1144
        %s1147 = scalar_lea.vmem %s308, 40 [#allocation9]
        %1148 = vst.msk [vmem:[%s1147] sm:$0xff] %vm343, %v1145
        %s1149 = scalar_lea.vmem %s317, 48
        %v1150 = vld [vmem:[%s1149] sm:$0xff]
        %s1151 = scalar_lea.vmem %s323, 48
        %v1152 = vld [vmem:[%s1151] sm:$0xff]
        %v1154 = vsel %vm343, %v1134, 0
        %1156 = vmatprep.subr.mxu0 0.0
        %1157 = vmatpush1.msra.mxu0 0.0
        %1158 = vmatprep.subr.mxu0 0.0
        %1159 = vmatpush1.msra.mxu0 0.0
        %1160 = vmatprep.subr.mxu0 0.0
        %1161 = vmatpush1.msra.mxu0 0.0
        %1162 = vmatprep.subr.mxu0 0.0
        %1163 = vmatpush1.msra.mxu0 0.0
        %1164 = vmatprep.subr.mxu0 0.0
        %1165 = vmatpush1.msra.mxu0 0.0
        %1166 = vmatprep.subr.mxu0 0.0
        %1167 = vmatpush1.msra.mxu0 0.0
        %1168 = vmatprep.subr.mxu0 0.0
        %1169 = vmatpush1.msra.mxu0 0.0
        %1170 = vmatprep.subr.mxu0 0.0
        %1171 = vmatpush1.msra.mxu0 0.0
        %1172 = vmatprep.subr.mxu0 0.0
        %1173 = vmatpush1.msra.mxu0 0.0
        %1174 = vmatprep.subr.mxu0 0.0
        %1175 = vmatpush1.msra.mxu0 0.0
        %1176 = vmatprep.subr.mxu0 0.0
        %1177 = vmatpush1.msra.mxu0 0.0
        %1178 = vmatprep.subr.mxu0 0.0
        %1179 = vmatpush1.msra.mxu0 0.0
        %1180 = vmatprep.subr.mxu0 0.0
        %1181 = vmatpush1.msra.mxu0 %v338
        %1182 = vmatprep.subr.mxu0 0.0
        %1183 = vmatpush1.msra.mxu0 %v337
        %1184 = vmatprep.subr.mxu0 0.0
        %1185 = vmatpush1.msra.mxu0 %v336
        %1186 = vmatprep.subr.mxu0 0.0
        %1187 = vmatpush1.msra.mxu0 %v335
        %1188 = vmatprep.subr.mxu0 0.0
        %1189 = vmatpush2.msra.mxu0 0.0
        %1190 = vmatprep.subr.mxu0 0.0
        %1191 = vmatpush2.msra.mxu0 0.0
        %1192 = vmatprep.subr.mxu0 0.0
        %1193 = vmatpush2.msra.mxu0 0.0
        %1194 = vmatprep.subr.mxu0 0.0
        %1195 = vmatpush2.msra.mxu0 0.0
        %1196 = vmatprep.subr.mxu0 0.0
        %1197 = vmatpush2.msra.mxu0 0.0
        %1198 = vmatprep.subr.mxu0 0.0
        %1199 = vmatpush2.msra.mxu0 0.0
        %1200 = vmatprep.subr.mxu0 0.0
        %1201 = vmatpush2.msra.mxu0 0.0
        %1202 = vmatprep.subr.mxu0 0.0
        %1203 = vmatpush2.msra.mxu0 0.0
        %1204 = vmatprep.subr.mxu0 0.0
        %1205 = vmatpush2.msra.mxu0 0.0
        %1206 = vmatprep.subr.mxu0 0.0
        %1207 = vmatpush2.msra.mxu0 0.0
        %1208 = vmatprep.subr.mxu0 0.0
        %1209 = vmatpush2.msra.mxu0 0.0
        %1210 = vmatprep.subr.mxu0 0.0
        %1211 = vmatpush2.msra.mxu0 0.0
        %1212 = vmatprep.subr.mxu0 0.0
        %1213 = vmatpush2.msra.mxu0 0.0
        %1214 = vmatprep.subr.mxu0 0.0
        %1215 = vmatpush2.msra.mxu0 0.0
        %1216 = vmatprep.subr.mxu0 0.0
        %1217 = vmatpush2.msra.mxu0 0.0
        %1218 = vmatprep.subr.mxu0 0.0
        %1219 = vmatpush2.msra.mxu0 0.0
        %1220 = vmatprep.mubr.f32.mxu0 0.0
        %1221 = vmatmul.mubr.f32.gmra.mxu0 %v1154
        %v1222 = vpop.f32.mrf.mxu0
        %v1223 = vadd.f32 0.0, %v1222
        %v1224 = vpop.f32.mrf.mxu0
        %1225 = vdwg.mxu0
        %v1226 = vadd.f32 %v1150, %v1223
        %v1227 = vxor.u32 %v1226, 2147483648
        %v1228 = vmul.f32 %v1227, 1.442695
        %v1229 = vpow.pop %v1228
        %v1230 = vadd.f32 %v1229, 1.0
        %v1231 = vrcp.pop %v1230
        %v1232 = vmul.f32 1.0, %v1231
        %v1233 = vtanh.pop %v1226
        %1235 = vrot.lane.b32.xlu0 %v1141, 32
        %v1236 = vpop.permute.xlu0 %1235
        %v1238 = vmul.f32 %v1232, %v1236
        %1240 = vrot.lane.b32.xlu0 %v1233, 64
        %v1241 = vpop.permute.xlu0 %1240
        %v1243 = vmul.f32 %v1232, %v1241
        %1245 = vrot.lane.b32.xlu0 %v1243, 32
        %v1246 = vpop.permute.xlu0 %1245
        %v1248 = vadd.f32 %v1238, %v1246
        %v1249 = vtanh.pop %v1248
        %1251 = vrot.lane.b32.xlu0 %v1249, 64
        %v1252 = vpop.permute.xlu0 %1251
        %v1254 = vmul.f32 %v1232, %v1252
        %1255 = vrot.lane.b32.xlu0 %v1134, 96
        %v1256 = vpop.permute.xlu0 %1255
        %v1258 = vsub.f32 %v1254, %v1256
        %1260 = vset.pattern.permute.xlu0 0
        %1261 = vperm.xlu0 %1260, %v1152
        %v1262 = vpop.permute.xlu0 %1261
        %v1264 = vmul.f32 %v1262, %v1258
        %1266 = vrot.lane.b32.xlu0 %v1264, 32
        %v1267 = vpop.permute.xlu0 %1266
        %v1269 = vadd.f32 %v1134, %v1267
        %v1270 = vsub.f32 %v1248, %v1236
        %v1271 = vmul.f32 %v1262, %v1270
        %1273 = vrot.lane.b32.xlu0 %v1271, 96
        %v1274 = vpop.permute.xlu0 %1273
        %v1276 = vadd.f32 %v1141, %v1274
        %v1277 = vmul.f32 %v1262, %v1254
        %1279 = vrot.lane.b32.xlu0 %v1277, 32
        %v1280 = vpop.permute.xlu0 %1279
        %s1282 = scalar_lea.vmem %s308, 48 [#allocation9]
        %1283 = vst.msk [vmem:[%s1282] sm:$0xff] %vm343, %v1280
        %s1284 = scalar_lea.vmem %s317, 56
        %v1285 = vld [vmem:[%s1284] sm:$0xff]
        %s1286 = scalar_lea.vmem %s323, 56
        %v1287 = vld [vmem:[%s1286] sm:$0xff]
        %v1289 = vsel %vm343, %v1269, 0
        %1291 = vmatprep.subr.mxu0 0.0
        %1292 = vmatpush1.msra.mxu0 0.0
        %1293 = vmatprep.subr.mxu0 0.0
        %1294 = vmatpush1.msra.mxu0 0.0
        %1295 = vmatprep.subr.mxu0 0.0
        %1296 = vmatpush1.msra.mxu0 0.0
        %1297 = vmatprep.subr.mxu0 0.0
        %1298 = vmatpush1.msra.mxu0 0.0
        %1299 = vmatprep.subr.mxu0 0.0
        %1300 = vmatpush1.msra.mxu0 0.0
        %1301 = vmatprep.subr.mxu0 0.0
        %1302 = vmatpush1.msra.mxu0 0.0
        %1303 = vmatprep.subr.mxu0 0.0
        %1304 = vmatpush1.msra.mxu0 0.0
        %1305 = vmatprep.subr.mxu0 0.0
        %1306 = vmatpush1.msra.mxu0 0.0
        %1307 = vmatprep.subr.mxu0 0.0
        %1308 = vmatpush1.msra.mxu0 0.0
        %1309 = vmatprep.subr.mxu0 0.0
        %1310 = vmatpush1.msra.mxu0 0.0
        %1311 = vmatprep.subr.mxu0 0.0
        %1312 = vmatpush1.msra.mxu0 0.0
        %1313 = vmatprep.subr.mxu0 0.0
        %1314 = vmatpush1.msra.mxu0 0.0
        %1315 = vmatprep.subr.mxu0 0.0
        %1316 = vmatpush1.msra.mxu0 %v338
        %1317 = vmatprep.subr.mxu0 0.0
        %1318 = vmatpush1.msra.mxu0 %v337
        %1319 = vmatprep.subr.mxu0 0.0
        %1320 = vmatpush1.msra.mxu0 %v336
        %1321 = vmatprep.subr.mxu0 0.0
        %1322 = vmatpush1.msra.mxu0 %v335
        %1323 = vmatprep.subr.mxu0 0.0
        %1324 = vmatpush2.msra.mxu0 0.0
        %1325 = vmatprep.subr.mxu0 0.0
        %1326 = vmatpush2.msra.mxu0 0.0
        %1327 = vmatprep.subr.mxu0 0.0
        %1328 = vmatpush2.msra.mxu0 0.0
        %1329 = vmatprep.subr.mxu0 0.0
        %1330 = vmatpush2.msra.mxu0 0.0
        %1331 = vmatprep.subr.mxu0 0.0
        %1332 = vmatpush2.msra.mxu0 0.0
        %1333 = vmatprep.subr.mxu0 0.0
        %1334 = vmatpush2.msra.mxu0 0.0
        %1335 = vmatprep.subr.mxu0 0.0
        %1336 = vmatpush2.msra.mxu0 0.0
        %1337 = vmatprep.subr.mxu0 0.0
        %1338 = vmatpush2.msra.mxu0 0.0
        %1339 = vmatprep.subr.mxu0 0.0
        %1340 = vmatpush2.msra.mxu0 0.0
        %1341 = vmatprep.subr.mxu0 0.0
        %1342 = vmatpush2.msra.mxu0 0.0
        %1343 = vmatprep.subr.mxu0 0.0
        %1344 = vmatpush2.msra.mxu0 0.0
        %1345 = vmatprep.subr.mxu0 0.0
        %1346 = vmatpush2.msra.mxu0 0.0
        %1347 = vmatprep.subr.mxu0 0.0
        %1348 = vmatpush2.msra.mxu0 0.0
        %1349 = vmatprep.subr.mxu0 0.0
        %1350 = vmatpush2.msra.mxu0 0.0
        %1351 = vmatprep.subr.mxu0 0.0
        %1352 = vmatpush2.msra.mxu0 0.0
        %1353 = vmatprep.subr.mxu0 0.0
        %1354 = vmatpush2.msra.mxu0 0.0
        %1355 = vmatprep.mubr.f32.mxu0 0.0
        %1356 = vmatmul.mubr.f32.gmra.mxu0 %v1289
        %v1357 = vpop.f32.mrf.mxu0
        %v1358 = vadd.f32 0.0, %v1357
        %v1359 = vpop.f32.mrf.mxu0
        %1360 = vdwg.mxu0
        %v1361 = vadd.f32 %v1285, %v1358
        %v1362 = vxor.u32 %v1361, 2147483648
        %v1363 = vmul.f32 %v1362, 1.442695
        %v1364 = vpow.pop %v1363
        %v1365 = vadd.f32 %v1364, 1.0
        %v1366 = vrcp.pop %v1365
        %v1367 = vmul.f32 1.0, %v1366
        %v1368 = vtanh.pop %v1361
        %1370 = vrot.lane.b32.xlu0 %v1276, 32
        %v1371 = vpop.permute.xlu0 %1370
        %v1373 = vmul.f32 %v1367, %v1371
        %1375 = vrot.lane.b32.xlu0 %v1368, 64
        %v1376 = vpop.permute.xlu0 %1375
        %v1378 = vmul.f32 %v1367, %v1376
        %1380 = vrot.lane.b32.xlu0 %v1378, 32
        %v1381 = vpop.permute.xlu0 %1380
        %v1383 = vadd.f32 %v1373, %v1381
        %v1384 = vtanh.pop %v1383
        %1386 = vrot.lane.b32.xlu0 %v1384, 64
        %v1387 = vpop.permute.xlu0 %1386
        %v1389 = vmul.f32 %v1367, %v1387
        %1390 = vrot.lane.b32.xlu0 %v1269, 96
        %v1391 = vpop.permute.xlu0 %1390
        %v1393 = vsub.f32 %v1389, %v1391
        %1395 = vset.pattern.permute.xlu0 0
        %1396 = vperm.xlu0 %1395, %v1287
        %v1397 = vpop.permute.xlu0 %1396
        %v1399 = vmul.f32 %v1397, %v1393
        %1401 = vrot.lane.b32.xlu0 %v1399, 32
        %v1402 = vpop.permute.xlu0 %1401
        %v1404 = vadd.f32 %v1269, %v1402
        %v1405 = vsub.f32 %v1383, %v1371
        %v1406 = vmul.f32 %v1397, %v1405
        %1408 = vrot.lane.b32.xlu0 %v1406, 96
        %v1409 = vpop.permute.xlu0 %1408
        %v1411 = vadd.f32 %v1276, %v1409
        %v1412 = vmul.f32 %v1397, %v1389
        %1414 = vrot.lane.b32.xlu0 %v1412, 32
        %v1415 = vpop.permute.xlu0 %1414
        %s1417 = scalar_lea.vmem %s308, 56 [#allocation9]
        %1418 = vst.msk [vmem:[%s1417] sm:$0xff] %vm343, %v1415
        %1419 = vst.msk [vmem:[#allocation2] sm:$0xff] %vm343, %v1404
        %1420 = vst.msk [vmem:[#allocation3] sm:$0xff] %vm343, %v1411
        %p1421 = scmp.eq.s32.totalorder %s25, 1
        // Predicated region
        $region53: #{tpu_custom_call.1} parent=39 // pred_check
          %p1422 = pneg %p1421
        $region54: #{tpu_custom_call.1} parent=39 // pred_check_branch
          %1424 = sbr.rel (%p1422) target = $region56
        $region55: #{tpu_custom_call.1} parent=39 // pred_region
          %1425 = vst.msk [vmem:[#allocation10] sm:$0xff] %vm343, %v1404
          %1426 = vst.msk [vmem:[#allocation12] sm:$0xff] %vm343, %v1411
        $region56: #{tpu_custom_call.1} parent=39 // pred_fallthru
          _
        %s1427 = sand.u32 %s148, 1
        %s1428 = scalar_lea.sflag [#allocation6], %s1427
        %s1429 = sand.u32 %s148, 1
        %s1430 = smul.addr %s1429, 64
        %s1431 = scalar_lea.vmem [#allocation9], %s1430
        // Predicated region
        $region57: #{tpu_custom_call.1} parent=39 // pred_check
          %p1432 = pneg %p158
        $region58: #{tpu_custom_call.1} parent=39 // pred_check_branch
          %1434 = sbr.rel (%p1432) target = $region60
        $region59: #{tpu_custom_call.1} parent=39 // pred_region
          %s1435 = smul.u32 8, %s25
          %s1437 = ssub.s32 1024, 1024
          %1438 = vsyncadd %s1428, %s1437
          %s1439 = smul.addr %s1435, 128
          %s1440 = scalar_lea.hbm %s5, %s1439
          %s1441 = sshll.u32 %s1431, 4
          %s1442 = int_to_ptr.vmem [resolvable:$true] %s1441
          %1447 = dma.vmem_to_hbm [thread:$0]  %s1442, 1024, %s1440, %s1428, 128, 128, 8
        $region60: #{tpu_custom_call.1} parent=39 // pred_fallthru
          _
        // Predicated region
        $region61: #{tpu_custom_call.1} parent=39 // pred_check
          %p1448 = pneg %p179
        $region62: #{tpu_custom_call.1} parent=39 // pred_check_branch
          %1450 = sbr.rel (%p1448) target = $region64
        $region63: #{tpu_custom_call.1} parent=39 // pred_region
          %s1452 = ssub.s32 128, 128
          %1453 = vsyncadd [#allocation11], %s1452
          %s1455 = sshll.u32 [#allocation10], 4
          %s1456 = int_to_ptr.vmem [resolvable:$true] %s1455
          %1458 = dma.vmem_to_hbm [thread:$0]  %s1456, 128, %s6, [#allocation11]
        $region64: #{tpu_custom_call.1} parent=39 // pred_fallthru
          _
        // Predicated region
        $region65: #{tpu_custom_call.1} parent=39 // pred_check
          %p1459 = pneg %p200
        $region66: #{tpu_custom_call.1} parent=39 // pred_check_branch
          %1461 = sbr.rel (%p1459) target = $region68
        $region67: #{tpu_custom_call.1} parent=39 // pred_region
          %s1463 = ssub.s32 128, 128
          %1464 = vsyncadd [#allocation11], %s1463
          %s1466 = sshll.u32 [#allocation12], 4
          %s1467 = int_to_ptr.vmem [resolvable:$true] %s1466
          %1469 = dma.vmem_to_hbm [thread:$0]  %s1467, 128, %s7, [#allocation11]
        $region68: #{tpu_custom_call.1} parent=39 // pred_fallthru
          _
        // Predicated region
        $region69: #{tpu_custom_call.1} parent=39 // pred_check
          %p1470 = pneg %p179
        $region70: #{tpu_custom_call.1} parent=39 // pred_check_branch
          %1472 = sbr.rel (%p1470) target = $region72
        $region71: #{tpu_custom_call.1} parent=39 // pred_region
          %1473 = dma.done [#allocation11], 128
        $region72: #{tpu_custom_call.1} parent=39 // pred_fallthru
          _
        // Predicated region
        $region73: #{tpu_custom_call.1} parent=39 // pred_check
          %p1474 = pneg %p200
        $region74: #{tpu_custom_call.1} parent=39 // pred_check_branch
          %1476 = sbr.rel (%p1474) target = $region76
        $region75: #{tpu_custom_call.1} parent=39 // pred_region
          %1477 = dma.done [#allocation11], 128
        $region76: #{tpu_custom_call.1} parent=39 // pred_fallthru
          _
      $region40: #{tpu_custom_call.1} parent=5 // pred_fallthru
        _
      %p1478 = scmp.le.s32.totalorder 2, %s20
      // Predicated region
      $region77: #{tpu_custom_call.1} parent=5 // pred_check
        %p1479 = pneg %p1478
      $region78: #{tpu_custom_call.1} parent=5 // pred_check_branch
        %1481 = sbr.rel (%p1479) target = $region80
      $region79: #{tpu_custom_call.1} parent=5 // pred_region
        %s1482 = ssub.s32 %s20, 2
        // Predicated region
        $region81: #{tpu_custom_call.1} parent=79 // pred_check
          %p1483 = pneg %p164
        $region82: #{tpu_custom_call.1} parent=79 // pred_check_branch
          %1485 = sbr.rel (%p1483) target = $region84
        $region83: #{tpu_custom_call.1} parent=79 // pred_region
          %s1486 = sand.u32 %s149, 1
          %s1487 = scalar_lea.sflag [#allocation6], %s1486
          %s1488 = sand.u32 %s149, 1
          %s1489 = smul.addr %s1488, 64
          %s1490 = scalar_lea.vmem [#allocation9], %s1489
          %1491 = dma.done %s1487, 1024
        $region84: #{tpu_custom_call.1} parent=79 // pred_fallthru
          _
      $region80: #{tpu_custom_call.1} parent=5 // pred_fallthru
        _
    $region6: #{tpu_custom_call.1} parent=1 // loop_footer
      %s24 = sadd.s32 1, %s20
    $region7: #{tpu_custom_call.1} parent=1 // loop_footer_branch
      %19 = sbr.rel target = $region3
    $region8: #{tpu_custom_call.1} parent=1 // loop_exit
      _
    %1492 = vsyncpa [#allocation5], 1
    %s1493 = scalar_lea.sflag [#allocation5], 1
    %1494 = vsyncpa %s1493, 1
    %1495 = vsyncpa [#allocation8], 1
    %1496 = vsyncpa [#allocation6], 1
    %s1497 = scalar_lea.sflag [#allocation6], 1
    %1498 = vsyncpa %s1497, 1
    %1499 = vsyncpa [#allocation11], 1

</llo_original>
